<compile_context>
chip_gen: v7x
topology: tpu7x:2x2x1
jax: 0.10.0
libtpu: 0.0.40
codegen_flags: <defaults>
</compile_context>

<pallas_src>
import functools

import numpy as np

import jax
import jax.numpy as jnp
from jax.experimental import pallas as pl
from jax.experimental.pallas import tpu as pltpu


# ============================================================================
# Fused Pallas kernel
# ============================================================================
def _disc_kernel(x1_ref,                                     # (bt, Tf+2, F*Cin) f32
                 wa1_ref, wa2_ref, wa3_ref, wa4_ref,         # (4, Win*Cin, Wout*Cout) bf16
                 gba1_ref, gba2_ref, gba3_ref, gba4_ref,     # (3, Wout*Cout) f32
                 w1t_ref,                                    # (C4, H1) bf16
                 hvec_ref,                                   # (3, H1) f32 [b1, prelu1, w2_row]
                 sc_ref,                                     # (1, 2) f32 [b2, sigmoid slope]
                 o_ref,                                      # (1, bt, 1) f32
                 hp2_ref, hp3_ref, hp4_ref,                  # lane-dense activation scratch
                 *, geom):                                   # static ((wout, cout), ...) x4
    f32 = jnp.float32
    bt = x1_ref.shape[0]

    def conv_block(in_ref, w_ref, gba_ref, wout, cout, nxt_ref):
        """Conv2d((4,4),(2,2),(1,1), no bias) + InstanceNorm2d(affine) + PReLU.

        in_ref : (bt, Hin+2, Win*Cin) f32; rows 0 and Hin+1 are the zero H-halo.
        w_ref  : (4, Win*Cin, Wout*Cout) bf16; kernel-W taps + W-padding absorbed.
        gba_ref: (3, Wout*Cout) f32; gamma/beta/prelu-alpha pre-tiled to lanes.
        Returns act (bt, Hout, Wout*Cout) f32 (also staged into nxt_ref if given).
        """
        hout = (in_ref.shape[1] - 2) // 2
        kdim = in_ref.shape[2]
        lanes = wout * cout

        # ---- conv: 4 kernel-H tap matmuls over lane-dense rows (MXU, f32 acc)
        y = None
        for kh in range(4):
            lhs = in_ref[:, pl.ds(kh, hout, 2), :]               # strided row read
            lhs = lhs.reshape(bt * hout, kdim).astype(jnp.bfloat16)
            part = jnp.dot(lhs, w_ref[kh], preferred_element_type=f32)
            y = part if y is None else y + part                  # (bt*hout, lanes)
        y = y.reshape(bt, hout, lanes)

        # ---- InstanceNorm2d stats per (sample, channel); lanes are (wo, co)
        inv_n = 1.0 / float(hout * wout)
        s_l = jnp.sum(y, axis=1)                                 # (bt, lanes)
        ss_l = jnp.sum(y * y, axis=1)                            # (bt, lanes)
        s_c = s_l[:, 0:cout]
        ss_c = ss_l[:, 0:cout]
        for wo in range(1, wout):                                # cheap lane-slice adds
            s_c = s_c + s_l[:, wo * cout:(wo + 1) * cout]
            ss_c = ss_c + ss_l[:, wo * cout:(wo + 1) * cout]
        mean_c = s_c * inv_n                                     # (bt, cout)
        var_c = jnp.maximum(ss_c * inv_n - mean_c * mean_c, 0.0)  # biased var
        rstd_c = jax.lax.rsqrt(var_c + 1e-5)

        gba = gba_ref[...]                                       # (3, lanes)

        def lane_tile(v):                                        # (bt,cout)->(bt,1,lanes)
            if wout > 1:
                v = jnp.concatenate([v] * wout, axis=-1)
            return v[:, None, :]

        scale = lane_tile(rstd_c) * gba[0]
        shift = gba[1] - lane_tile(mean_c * rstd_c) * gba[0]
        yn = y * scale + shift
        act = jnp.where(yn >= 0.0, yn, gba[2] * yn)              # PReLU, (bt, hout, lanes)

        # ---- stage into the next layer's lane-dense, H-padded input buffer
        if nxt_ref is not None:
            zrow = jnp.zeros((bt, 1, lanes), f32)
            nxt_ref[:, pl.ds(0, 1), :] = zrow                    # top H halo
            nxt_ref[:, pl.ds(hout + 1, 1), :] = zrow             # bottom H halo
            nxt_ref[:, pl.ds(1, hout), :] = act                  # interior: one slab store
        return act

    conv_block(x1_ref, wa1_ref, gba1_ref, geom[0][0], geom[0][1], hp2_ref)
    conv_block(hp2_ref, wa2_ref, gba2_ref, geom[1][0], geom[1][1], hp3_ref)
    conv_block(hp3_ref, wa3_ref, gba3_ref, geom[2][0], geom[2][1], hp4_ref)
    act4 = conv_block(hp4_ref, wa4_ref, gba4_ref, geom[3][0], geom[3][1], None)

    # ---- head: AdaptiveMaxPool2d(1) + Linear + PReLU + Linear + LearnableSigmoid
    pooled = jnp.max(act4, axis=1)                               # (bt, C4) (Wout4 == 1)
    hv = hvec_ref[...]                                           # (3, H1)
    h = jnp.dot(pooled.astype(jnp.bfloat16), w1t_ref[...],
                preferred_element_type=f32) + hv[0]              # (bt, H1)
    # TODO(synk): Dropout(0.3) is identity in eval / inference mode.
    h = jnp.where(h >= 0.0, h, hv[1] * h)                        # PReLU
    sc = sc_ref[...]                                             # (1, 2) [b2, slope]
    z = jnp.sum(h * hv[2], axis=-1, keepdims=True) + sc[:, 0:1]  # Linear(H1 -> 1), VPU
    score = jax.nn.sigmoid(sc[:, 1:2] * z)                       # LearnableSigmoid, beta=1
    o_ref[...] = score.reshape(1, bt, 1)                         # all bt scores, one store


# ============================================================================
# Pallas wrapper
# ============================================================================
def _pick_bt(batch, bt_max=16):
    """Largest divisor of `batch` <= bt_max that still leaves >=2 grid steps
    (so both v7x TensorCores get work); otherwise the largest divisor."""
    divs = [d for d in range(1, min(bt_max, batch) + 1) if batch % d == 0]
    two_step = [d for d in divs if batch // d >= 2]
    return max(two_step) if two_step else max(divs)


def fused_discriminator(prep, x1, geom, bt=None):
    """x1: (B, Tf+2, F*Cin) f32 -- H-padded, (freq, channel)-packed features."""
    B, hp1, k1 = x1.shape
    convs = prep["convs"]
    if bt is None:
        bt = _pick_bt(B)
    assert B % bt == 0
    n_steps = B // bt

    houts, lanes = [], []
    h = hp1 - 2
    for (wo, co) in geom:
        h = h // 2
        houts.append(h)
        lanes.append(wo * co)

    assert convs[0]["w_abs"].shape[1] == k1
    for l in range(3):
        assert convs[l + 1]["w_abs"].shape[1] == lanes[l]

    in_specs = [pl.BlockSpec((bt, hp1, k1), lambda i: (i, 0, 0))]
    operands = [x1]
    # Constant index_maps: weights / affines / head params are DMA'd into VMEM
    # once and reused across all grid steps (total < 0.5 MiB).
    for c in convs:
        in_specs.append(pl.BlockSpec(c["w_abs"].shape, lambda i: (0, 0, 0)))
        operands.append(c["w_abs"])
    for c in convs:
        in_specs.append(pl.BlockSpec(c["gba"].shape, lambda i: (0, 0)))
        operands.append(c["gba"])
    for name in ("w1t", "hvec", "sc"):
        in_specs.append(pl.BlockSpec(prep[name].shape, lambda i: (0, 0)))
        operands.append(prep[name])

    # Lane-dense (last dim = Wout*Cout = 128 here), H-halo-padded activations.
    scratch_shapes = [pltpu.VMEM((bt, houts[l] + 2, lanes[l]), jnp.float32)
                      for l in range(3)]

    out = pl.pallas_call(
        functools.partial(_disc_kernel, geom=geom),
        grid=(n_steps,),
        in_specs=in_specs,
        out_specs=pl.BlockSpec((1, bt, 1), lambda i: (i, 0, 0)),
        out_shape=jax.ShapeDtypeStruct((n_steps, bt, 1), jnp.float32),
        scratch_shapes=scratch_shapes,
        compiler_params=pltpu.CompilerParams(
            dimension_semantics=("parallel",)),   # grid steps independent (megacore)
    )(*operands)
    return out.reshape(B, 1)


# ============================================================================
# Glue: STFT, compressed magnitude, parameters, reference
# ============================================================================
def stft_spec(sig, nframe, nhop, nfft):
    """(B, L) -> complex (B, Tframes, F).  Hann window, framed rFFT."""
    # TODO(synk): STFT class not provided in the reference; Hann-window rFFT used.
    B, L = sig.shape
    n_frames = (L - nframe) // nhop + 1
    idx = jnp.arange(n_frames)[:, None] * nhop + jnp.arange(nframe)[None, :]
    frames = sig[:, idx]
    window = jnp.hanning(nframe).astype(jnp.float32)
    return jnp.fft.rfft(frames * window, n=nfft, axis=-1)


def compressed_mag_features(x, y, nframe, nhop, nfft, compress_factor=0.3):
    """-> (B, Tf, F, 2): channel 0 = |X|^cf, channel 1 = |Y|^cf  (NHWC)."""
    def cm(spec):
        m2 = jnp.maximum(spec.real * spec.real + spec.imag * spec.imag, 1e-12)
        return jnp.power(m2, compress_factor / 2.0)
    xs = stft_spec(x, nframe, nhop, nfft)
    ys = stft_spec(y, nframe, nhop, nfft)
    return jnp.stack([cm(xs), cm(ys)], axis=-1).astype(jnp.float32)


def pack_mag(mag):
    """NHWC (B, Tf, F, C) -> (B, Tf+2, F*C): H-halo padded, (freq, chan)-packed.
    Done in XLA so it fuses with the rFFT post-processing."""
    B, Tf, F, C = mag.shape
    packed = mag.reshape(B, Tf, F * C)
    return jnp.pad(packed, ((0, 0), (1, 1), (0, 0)))


def spectral_normalize(w):
    """Divide weight by its largest singular value (exact spectral norm)."""
    w2d = w.reshape(w.shape[0], -1)
    sigma = jnp.linalg.svd(w2d, compute_uv=False)[0]
    return w / sigma


def init_params(key, ndf=16, in_channel=2):
    keys = jax.random.split(key, 6)
    chans = [in_channel, ndf, ndf * 2, ndf * 4, ndf * 8]
    convs = []
    for i in range(4):
        cin, cout = chans[i], chans[i + 1]
        w = 0.1 * jax.random.normal(keys[i], (cout, cin, 4, 4), jnp.float32)
        convs.append(dict(
            w=spectral_normalize(w),
            gamma=jnp.ones((cout,), jnp.float32),
            beta=jnp.zeros((cout,), jnp.float32),
            alpha=0.25 * jnp.ones((cout,), jnp.float32),
        ))
    w1 = 0.1 * jax.random.normal(keys[4], (ndf * 4, ndf * 8), jnp.float32)
    w2 = 0.1 * jax.random.normal(keys[5], (1, ndf * 4), jnp.float32)
    return dict(
        convs=convs,
        w1=spectral_normalize(w1), b1=jnp.zeros((ndf * 4,), jnp.float32),
        a1=0.25 * jnp.ones((ndf * 4,), jnp.float32),
        w2=spectral_normalize(w2), b2=jnp.zeros((1,), jnp.float32),
        slope=jnp.ones((1,), jnp.float32),
    )


def prepare_params(params, freq_bins):
    """Pre-arrange parameters for the fused kernel.

    Each conv weight is expanded to (4, Win*Cin, Wout*Cout) bf16 with the
    kernel-W taps and the width zero-padding absorbed into the matrix, so that
    in-kernel each conv layer is just 4 lane-dense MXU matmuls (one per
    kernel-H tap).  gamma/beta/prelu are pre-tiled to the (wo, co) lane layout.
    Returns (prep, geom) where geom = ((wout, cout), ...) is static.
    """
    w_cur = freq_bins
    convs, geom = [], []
    for layer in params["convs"]:
        w = np.asarray(layer["w"], np.float32)                  # (Cout, Cin, 4, 4)
        cout, cin = w.shape[0], w.shape[1]
        wout = w_cur // 2
        wabs = np.zeros((4, w_cur * cin, wout * cout), np.float32)
        for kh in range(4):
            for kw in range(4):
                for wo in range(wout):
                    wi = 2 * wo + kw - 1                        # width padding = 1
                    if 0 <= wi < w_cur:
                        wabs[kh, wi * cin:(wi + 1) * cin,
                             wo * cout:(wo + 1) * cout] = w[:, :, kh, kw].T
        gba = jnp.stack([jnp.tile(layer["gamma"], wout),
                         jnp.tile(layer["beta"], wout),
                         jnp.tile(layer["alpha"], wout)], axis=0)   # (3, Wout*Cout)
        convs.append(dict(w_abs=jnp.asarray(wabs, jnp.bfloat16), gba=gba))
        geom.append((wout, cout))
        w_cur = wout
    prep = dict(
        convs=convs,
        w1t=params["w1"].T.astype(jnp.bfloat16),                 # (C4, H1)
        hvec=jnp.stack([params["b1"], params["a1"], params["w2"][0]], axis=0),
        sc=jnp.concatenate([params["b2"], params["slope"]]).reshape(1, 2),
    )
    return prep, tuple(geom)


@functools.partial(jax.jit, static_argnames=("nframe", "nhop", "nfft", "geom"))
def discriminator_forward(prep, x, y, *, nframe, nhop, nfft, geom):
    mag = compressed_mag_features(x, y, nframe, nhop, nfft)      # (B, Tf, F, 2)
    x1 = pack_mag(mag)                                           # (B, Tf+2, F*2)
    return fused_discriminator(prep, x1, geom)                   # (B, 1)


def reference_forward(params, prep, mag):
    """Plain-JAX reference of the same forward pass (same bf16 MXU operands)."""
    h = mag
    for layer in params["convs"]:
        y = jax.lax.conv_general_dilated(
            h.astype(jnp.bfloat16), layer["w"].astype(jnp.bfloat16),
            window_strides=(2, 2), padding=((1, 1), (1, 1)),
            dimension_numbers=("NHWC", "OIHW", "NHWC"),
            preferred_element_type=jnp.float32)
        mean = jnp.mean(y, axis=(1, 2), keepdims=True)
        var = jnp.mean(jnp.square(y - mean), axis=(1, 2), keepdims=True)
        yn = (y - mean) * jax.lax.rsqrt(var + 1e-5)
        yn = yn * layer["gamma"] + layer["beta"]
        h = jnp.where(yn >= 0.0, yn, layer["alpha"] * yn)
    pooled = jnp.max(h, axis=(1, 2))                             # (B, C4)
    hh = jnp.dot(pooled.astype(jnp.bfloat16), prep["w1t"],
                 preferred_element_type=jnp.float32) + prep["hvec"][0]
    hh = jnp.where(hh >= 0.0, hh, prep["hvec"][1] * hh)
    z = jnp.sum(hh * prep["hvec"][2], axis=-1, keepdims=True) + prep["sc"][0, 0]
    return jax.nn.sigmoid(prep["sc"][0, 1] * z)                  # (B, 1)


# ============================================================================
if __name__ == "__main__":
    nframe, nhop, nfft = 32, 16, 32     # -> F = 17 freq bins
    B = 8                               # -> bt = 4, grid = (2,)
    L = nframe + 31 * nhop              # -> 32 STFT frames

    key = jax.random.PRNGKey(0)
    kx, ky, kp = jax.random.split(key, 3)
    x = jax.random.normal(kx, (B, L), jnp.float32)
    y = jax.random.normal(ky, (B, L), jnp.float32)

    params = init_params(kp)
    prep, geom = prepare_params(params, freq_bins=nfft // 2 + 1)

    score = discriminator_forward(prep, x, y,
                                  nframe=nframe, nhop=nhop, nfft=nfft, geom=geom)
    score = jax.block_until_ready(score)
    assert score.shape == (B, 1)
    assert bool(jnp.all(jnp.isfinite(score)))

    # correctness check vs a plain-JAX reference of the identical forward pass
    mag = compressed_mag_features(x, y, nframe, nhop, nfft)
    ref = jax.block_until_ready(reference_forward(params, prep, mag))
    assert jnp.allclose(score, ref, atol=3e-2, rtol=3e-2), (score, ref)

    print("KERNEL_OK")
</pallas_src>

<mosaic_0001>
module attributes {stable_mosaic.version = 11 : i64} {
  func.func @_disc_kernel(%arg0: i32, %arg1: memref<4x34x34xf32, #tpu.memory_space<vmem>>, %arg2: memref<4x34x128xbf16, #tpu.memory_space<vmem>>, %arg3: memref<4x128x128xbf16, #tpu.memory_space<vmem>>, %arg4: memref<4x128x128xbf16, #tpu.memory_space<vmem>>, %arg5: memref<4x128x128xbf16, #tpu.memory_space<vmem>>, %arg6: memref<3x128xf32, #tpu.memory_space<vmem>>, %arg7: memref<3x128xf32, #tpu.memory_space<vmem>>, %arg8: memref<3x128xf32, #tpu.memory_space<vmem>>, %arg9: memref<3x128xf32, #tpu.memory_space<vmem>>, %arg10: memref<128x64xbf16, #tpu.memory_space<vmem>>, %arg11: memref<3x64xf32, #tpu.memory_space<vmem>>, %arg12: memref<1x2xf32, #tpu.memory_space<vmem>>, %arg13: memref<1x4x1xf32, #tpu.memory_space<vmem>>, %arg14: memref<4x18x128xf32, #tpu.memory_space<vmem>>, %arg15: memref<4x10x128xf32, #tpu.memory_space<vmem>>, %arg16: memref<4x6x128xf32, #tpu.memory_space<vmem>>) attributes {dimension_semantics = [#tpu.dimension_semantics<parallel>], iteration_bounds = array<i64: 2>, scalar_prefetch = 0 : i64, scratch_operands = 3 : i64, tpu.core_type = #tpu.core_type<tc>, window_params = [{transform_indices = @transform_0, window_bounds = array<i64: 4, 34, 34>}, {pipeline_mode = #tpu.pipeline_mode<synchronous>, transform_indices = @transform_1, window_bounds = array<i64: 4, 34, 128>}, {pipeline_mode = #tpu.pipeline_mode<synchronous>, transform_indices = @transform_2, window_bounds = array<i64: 4, 128, 128>}, {pipeline_mode = #tpu.pipeline_mode<synchronous>, transform_indices = @transform_3, window_bounds = array<i64: 4, 128, 128>}, {pipeline_mode = #tpu.pipeline_mode<synchronous>, transform_indices = @transform_4, window_bounds = array<i64: 4, 128, 128>}, {pipeline_mode = #tpu.pipeline_mode<synchronous>, transform_indices = @transform_5, window_bounds = array<i64: 3, 128>}, {pipeline_mode = #tpu.pipeline_mode<synchronous>, transform_indices = @transform_6, window_bounds = array<i64: 3, 128>}, {pipeline_mode = #tpu.pipeline_mode<synchronous>, transform_indices = @transform_7, window_bounds = array<i64: 3, 128>}, {pipeline_mode = #tpu.pipeline_mode<synchronous>, transform_indices = @transform_8, window_bounds = array<i64: 3, 128>}, {pipeline_mode = #tpu.pipeline_mode<synchronous>, transform_indices = @transform_9, window_bounds = array<i64: 128, 64>}, {pipeline_mode = #tpu.pipeline_mode<synchronous>, transform_indices = @transform_10, window_bounds = array<i64: 3, 64>}, {pipeline_mode = #tpu.pipeline_mode<synchronous>, transform_indices = @transform_11, window_bounds = array<i64: 1, 2>}, {transform_indices = @transform_12, window_bounds = array<i64: 1, 4, 1>}]} {
    %c0 = arith.constant 0 : index
    %c0_0 = arith.constant 0 : index
    %c0_1 = arith.constant 0 : index
    %0 = tpu.strided_load %arg1[%c0, %c0_0, %c0_1] {strides = array<i32: 1, 2, 1>} : memref<4x34x34xf32, #tpu.memory_space<vmem>>, vector<4x16x34xf32>
    %1 = vector.shape_cast %0 : vector<4x16x34xf32> to vector<64x34xf32>
    %2 = arith.truncf %1 : vector<64x34xf32> to vector<64x34xbf16>
    %c0_2 = arith.constant 0 : index
    %c0_3 = arith.constant 0 : index
    %c0_4 = arith.constant 0 : index
    %3 = vector.load %arg2[%c0_2, %c0_3, %c0_4] : memref<4x34x128xbf16, #tpu.memory_space<vmem>>, vector<1x34x128xbf16>
    %4 = vector.shape_cast %3 : vector<1x34x128xbf16> to vector<34x128xbf16>
    %cst = arith.constant dense<0.000000e+00> : vector<64x128xf32>
    %5 = tpu.matmul %2, %4, %cst {dimension_numbers = #tpu.dot_dimension_numbers<[1], [0], [0], [1], [0, 0, 1, 1], [], []>} : vector<64x34xbf16>, vector<34x128xbf16>, vector<64x128xf32> -> vector<64x128xf32>
    %c0_5 = arith.constant 0 : index
    %c1 = arith.constant 1 : index
    %c0_6 = arith.constant 0 : index
    %6 = tpu.strided_load %arg1[%c0_5, %c1, %c0_6] {strides = array<i32: 1, 2, 1>} : memref<4x34x34xf32, #tpu.memory_space<vmem>>, vector<4x16x34xf32>
    %7 = vector.shape_cast %6 : vector<4x16x34xf32> to vector<64x34xf32>
    %8 = arith.truncf %7 : vector<64x34xf32> to vector<64x34xbf16>
    %c1_7 = arith.constant 1 : index
    %c0_8 = arith.constant 0 : index
    %c0_9 = arith.constant 0 : index
    %9 = vector.load %arg2[%c1_7, %c0_8, %c0_9] : memref<4x34x128xbf16, #tpu.memory_space<vmem>>, vector<1x34x128xbf16>
    %10 = vector.shape_cast %9 : vector<1x34x128xbf16> to vector<34x128xbf16>
    %cst_10 = arith.constant dense<0.000000e+00> : vector<64x128xf32>
    %11 = tpu.matmul %8, %10, %cst_10 {dimension_numbers = #tpu.dot_dimension_numbers<[1], [0], [0], [1], [0, 0, 1, 1], [], []>} : vector<64x34xbf16>, vector<34x128xbf16>, vector<64x128xf32> -> vector<64x128xf32>
    %12 = arith.addf %5, %11 : vector<64x128xf32>
    %c0_11 = arith.constant 0 : index
    %c2 = arith.constant 2 : index
    %c0_12 = arith.constant 0 : index
    %13 = tpu.strided_load %arg1[%c0_11, %c2, %c0_12] {strides = array<i32: 1, 2, 1>} : memref<4x34x34xf32, #tpu.memory_space<vmem>>, vector<4x16x34xf32>
    %14 = vector.shape_cast %13 : vector<4x16x34xf32> to vector<64x34xf32>
    %15 = arith.truncf %14 : vector<64x34xf32> to vector<64x34xbf16>
    %c2_13 = arith.constant 2 : index
    %c0_14 = arith.constant 0 : index
    %c0_15 = arith.constant 0 : index
    %16 = vector.load %arg2[%c2_13, %c0_14, %c0_15] : memref<4x34x128xbf16, #tpu.memory_space<vmem>>, vector<1x34x128xbf16>
    %17 = vector.shape_cast %16 : vector<1x34x128xbf16> to vector<34x128xbf16>
    %cst_16 = arith.constant dense<0.000000e+00> : vector<64x128xf32>
    %18 = tpu.matmul %15, %17, %cst_16 {dimension_numbers = #tpu.dot_dimension_numbers<[1], [0], [0], [1], [0, 0, 1, 1], [], []>} : vector<64x34xbf16>, vector<34x128xbf16>, vector<64x128xf32> -> vector<64x128xf32>
    %19 = arith.addf %12, %18 : vector<64x128xf32>
    %c0_17 = arith.constant 0 : index
    %c3 = arith.constant 3 : index
    %c0_18 = arith.constant 0 : index
    %20 = tpu.strided_load %arg1[%c0_17, %c3, %c0_18] {strides = array<i32: 1, 2, 1>} : memref<4x34x34xf32, #tpu.memory_space<vmem>>, vector<4x16x34xf32>
    %21 = vector.shape_cast %20 : vector<4x16x34xf32> to vector<64x34xf32>
    %22 = arith.truncf %21 : vector<64x34xf32> to vector<64x34xbf16>
    %c3_19 = arith.constant 3 : index
    %c0_20 = arith.constant 0 : index
    %c0_21 = arith.constant 0 : index
    %23 = vector.load %arg2[%c3_19, %c0_20, %c0_21] : memref<4x34x128xbf16, #tpu.memory_space<vmem>>, vector<1x34x128xbf16>
    %24 = vector.shape_cast %23 : vector<1x34x128xbf16> to vector<34x128xbf16>
    %cst_22 = arith.constant dense<0.000000e+00> : vector<64x128xf32>
    %25 = tpu.matmul %22, %24, %cst_22 {dimension_numbers = #tpu.dot_dimension_numbers<[1], [0], [0], [1], [0, 0, 1, 1], [], []>} : vector<64x34xbf16>, vector<34x128xbf16>, vector<64x128xf32> -> vector<64x128xf32>
    %26 = arith.addf %19, %25 : vector<64x128xf32>
    %27 = vector.shape_cast %26 : vector<64x128xf32> to vector<4x16x128xf32>
    %cst_23 = arith.constant dense<0.000000e+00> : vector<4x128xf32>
    %28 = vector.multi_reduction <add>, %27, %cst_23 [1] : vector<4x16x128xf32> to vector<4x128xf32>
    %29 = arith.mulf %27, %27 : vector<4x16x128xf32>
    %cst_24 = arith.constant dense<0.000000e+00> : vector<4x128xf32>
    %30 = vector.multi_reduction <add>, %29, %cst_24 [1] : vector<4x16x128xf32> to vector<4x128xf32>
    %31 = vector.extract_strided_slice %28 {offsets = [0, 0], sizes = [4, 16], strides = [1, 1]} : vector<4x128xf32> to vector<4x16xf32>
    %32 = vector.extract_strided_slice %30 {offsets = [0, 0], sizes = [4, 16], strides = [1, 1]} : vector<4x128xf32> to vector<4x16xf32>
    %33 = vector.extract_strided_slice %28 {offsets = [0, 16], sizes = [4, 16], strides = [1, 1]} : vector<4x128xf32> to vector<4x16xf32>
    %34 = arith.addf %31, %33 : vector<4x16xf32>
    %35 = vector.extract_strided_slice %30 {offsets = [0, 16], sizes = [4, 16], strides = [1, 1]} : vector<4x128xf32> to vector<4x16xf32>
    %36 = arith.addf %32, %35 : vector<4x16xf32>
    %37 = vector.extract_strided_slice %28 {offsets = [0, 32], sizes = [4, 16], strides = [1, 1]} : vector<4x128xf32> to vector<4x16xf32>
    %38 = arith.addf %34, %37 : vector<4x16xf32>
    %39 = vector.extract_strided_slice %30 {offsets = [0, 32], sizes = [4, 16], strides = [1, 1]} : vector<4x128xf32> to vector<4x16xf32>
    %40 = arith.addf %36, %39 : vector<4x16xf32>
    %41 = vector.extract_strided_slice %28 {offsets = [0, 48], sizes = [4, 16], strides = [1, 1]} : vector<4x128xf32> to vector<4x16xf32>
    %42 = arith.addf %38, %41 : vector<4x16xf32>
    %43 = vector.extract_strided_slice %30 {offsets = [0, 48], sizes = [4, 16], strides = [1, 1]} : vector<4x128xf32> to vector<4x16xf32>
    %44 = arith.addf %40, %43 : vector<4x16xf32>
    %45 = vector.extract_strided_slice %28 {offsets = [0, 64], sizes = [4, 16], strides = [1, 1]} : vector<4x128xf32> to vector<4x16xf32>
    %46 = arith.addf %42, %45 : vector<4x16xf32>
    %47 = vector.extract_strided_slice %30 {offsets = [0, 64], sizes = [4, 16], strides = [1, 1]} : vector<4x128xf32> to vector<4x16xf32>
    %48 = arith.addf %44, %47 : vector<4x16xf32>
    %49 = vector.extract_strided_slice %28 {offsets = [0, 80], sizes = [4, 16], strides = [1, 1]} : vector<4x128xf32> to vector<4x16xf32>
    %50 = arith.addf %46, %49 : vector<4x16xf32>
    %51 = vector.extract_strided_slice %30 {offsets = [0, 80], sizes = [4, 16], strides = [1, 1]} : vector<4x128xf32> to vector<4x16xf32>
    %52 = arith.addf %48, %51 : vector<4x16xf32>
    %53 = vector.extract_strided_slice %28 {offsets = [0, 96], sizes = [4, 16], strides = [1, 1]} : vector<4x128xf32> to vector<4x16xf32>
    %54 = arith.addf %50, %53 : vector<4x16xf32>
    %55 = vector.extract_strided_slice %30 {offsets = [0, 96], sizes = [4, 16], strides = [1, 1]} : vector<4x128xf32> to vector<4x16xf32>
    %56 = arith.addf %52, %55 : vector<4x16xf32>
    %57 = vector.extract_strided_slice %28 {offsets = [0, 112], sizes = [4, 16], strides = [1, 1]} : vector<4x128xf32> to vector<4x16xf32>
    %58 = arith.addf %54, %57 : vector<4x16xf32>
    %59 = vector.extract_strided_slice %30 {offsets = [0, 112], sizes = [4, 16], strides = [1, 1]} : vector<4x128xf32> to vector<4x16xf32>
    %60 = arith.addf %56, %59 : vector<4x16xf32>
    %cst_25 = arith.constant 7.812500e-03 : f32
    %61 = vector.broadcast %cst_25 : f32 to vector<4x16xf32>
    %62 = arith.mulf %58, %61 : vector<4x16xf32>
    %cst_26 = arith.constant 7.812500e-03 : f32
    %63 = vector.broadcast %cst_26 : f32 to vector<4x16xf32>
    %64 = arith.mulf %60, %63 : vector<4x16xf32>
    %65 = arith.mulf %62, %62 : vector<4x16xf32>
    %66 = arith.subf %64, %65 : vector<4x16xf32>
    %cst_27 = arith.constant 0.000000e+00 : f32
    %67 = vector.broadcast %cst_27 : f32 to vector<4x16xf32>
    %68 = arith.maximumf %66, %67 : vector<4x16xf32>
    %cst_28 = arith.constant 9.99999974E-6 : f32
    %69 = vector.broadcast %cst_28 : f32 to vector<4x16xf32>
    %70 = arith.addf %68, %69 : vector<4x16xf32>
    %71 = math.rsqrt %70 : vector<4x16xf32>
    %c0_29 = arith.constant 0 : index
    %c0_30 = arith.constant 0 : index
    %72 = vector.load %arg6[%c0_29, %c0_30] : memref<3x128xf32, #tpu.memory_space<vmem>>, vector<3x128xf32>
    %73 = tpu.concatenate %71, %71, %71, %71, %71, %71, %71, %71 in 1 : vector<4x16xf32>, vector<4x16xf32>, vector<4x16xf32>, vector<4x16xf32>, vector<4x16xf32>, vector<4x16xf32>, vector<4x16xf32>, vector<4x16xf32> -> vector<4x128xf32>
    %74 = vector.shape_cast %73 : vector<4x128xf32> to vector<4x1x128xf32>
    %75 = vector.extract_strided_slice %72 {offsets = [0, 0], sizes = [1, 128], strides = [1, 1]} : vector<3x128xf32> to vector<1x128xf32>
    %76 = vector.shape_cast %75 : vector<1x128xf32> to vector<128xf32>
    %77 = vector.shape_cast %76 : vector<128xf32> to vector<1x1x128xf32>
    %78 = vector.broadcast %77 : vector<1x1x128xf32> to vector<4x1x128xf32>
    %79 = arith.mulf %74, %78 : vector<4x1x128xf32>
    %80 = vector.extract_strided_slice %72 {offsets = [1, 0], sizes = [1, 128], strides = [1, 1]} : vector<3x128xf32> to vector<1x128xf32>
    %81 = vector.shape_cast %80 : vector<1x128xf32> to vector<128xf32>
    %82 = arith.mulf %62, %71 : vector<4x16xf32>
    %83 = tpu.concatenate %82, %82, %82, %82, %82, %82, %82, %82 in 1 : vector<4x16xf32>, vector<4x16xf32>, vector<4x16xf32>, vector<4x16xf32>, vector<4x16xf32>, vector<4x16xf32>, vector<4x16xf32>, vector<4x16xf32> -> vector<4x128xf32>
    %84 = vector.shape_cast %83 : vector<4x128xf32> to vector<4x1x128xf32>
    %85 = vector.extract_strided_slice %72 {offsets = [0, 0], sizes = [1, 128], strides = [1, 1]} : vector<3x128xf32> to vector<1x128xf32>
    %86 = vector.shape_cast %85 : vector<1x128xf32> to vector<128xf32>
    %87 = vector.shape_cast %86 : vector<128xf32> to vector<1x1x128xf32>
    %88 = vector.broadcast %87 : vector<1x1x128xf32> to vector<4x1x128xf32>
    %89 = arith.mulf %84, %88 : vector<4x1x128xf32>
    %90 = vector.shape_cast %81 : vector<128xf32> to vector<1x1x128xf32>
    %91 = vector.broadcast %90 : vector<1x1x128xf32> to vector<4x1x128xf32>
    %92 = arith.subf %91, %89 : vector<4x1x128xf32>
    %93 = vector.broadcast %79 : vector<4x1x128xf32> to vector<4x16x128xf32>
    %94 = arith.mulf %27, %93 : vector<4x16x128xf32>
    %95 = vector.broadcast %92 : vector<4x1x128xf32> to vector<4x16x128xf32>
    %96 = arith.addf %94, %95 : vector<4x16x128xf32>
    %cst_31 = arith.constant 0.000000e+00 : f32
    %97 = vector.broadcast %cst_31 : f32 to vector<4x16x128xf32>
    %98 = arith.cmpf oge, %96, %97 : vector<4x16x128xf32>
    %99 = vector.extract_strided_slice %72 {offsets = [2, 0], sizes = [1, 128], strides = [1, 1]} : vector<3x128xf32> to vector<1x128xf32>
    %100 = vector.shape_cast %99 : vector<1x128xf32> to vector<128xf32>
    %101 = vector.shape_cast %100 : vector<128xf32> to vector<1x1x128xf32>
    %102 = vector.broadcast %101 : vector<1x1x128xf32> to vector<4x16x128xf32>
    %103 = arith.mulf %102, %96 : vector<4x16x128xf32>
    %104 = arith.select %98, %96, %103 : vector<4x16x128xi1>, vector<4x16x128xf32>
    %cst_32 = arith.constant 0.000000e+00 : f32
    %105 = vector.broadcast %cst_32 : f32 to vector<4x1x128xf32>
    %c0_33 = arith.constant 0 : index
    %c0_34 = arith.constant 0 : index
    %c0_35 = arith.constant 0 : index
    %106 = vector.load %arg14[%c0_33, %c0_34, %c0_35] : memref<4x18x128xf32, #tpu.memory_space<vmem>>, vector<4x1x128xf32>
    tpu.vector_store %arg14[%c0_33, %c0_34, %c0_35], %105 {strides = array<i32>} : memref<4x18x128xf32, #tpu.memory_space<vmem>>, vector<4x1x128xf32>,
    %c0_36 = arith.constant 0 : index
    %c17 = arith.constant 17 : index
    %c0_37 = arith.constant 0 : index
    %107 = vector.load %arg14[%c0_36, %c17, %c0_37] : memref<4x18x128xf32, #tpu.memory_space<vmem>>, vector<4x1x128xf32>
    tpu.vector_store %arg14[%c0_36, %c17, %c0_37], %105 {strides = array<i32>} : memref<4x18x128xf32, #tpu.memory_space<vmem>>, vector<4x1x128xf32>,
    %c0_38 = arith.constant 0 : index
    %c1_39 = arith.constant 1 : index
    %c0_40 = arith.constant 0 : index
    %108 = vector.load %arg14[%c0_38, %c1_39, %c0_40] : memref<4x18x128xf32, #tpu.memory_space<vmem>>, vector<4x16x128xf32>
    tpu.vector_store %arg14[%c0_38, %c1_39, %c0_40], %104 {strides = array<i32>} : memref<4x18x128xf32, #tpu.memory_space<vmem>>, vector<4x16x128xf32>,
    %c0_41 = arith.constant 0 : index
    %c0_42 = arith.constant 0 : index
    %c0_43 = arith.constant 0 : index
    %109 = tpu.strided_load %arg14[%c0_41, %c0_42, %c0_43] {strides = array<i32: 1, 2, 1>} : memref<4x18x128xf32, #tpu.memory_space<vmem>>, vector<4x8x128xf32>
    %110 = vector.shape_cast %109 : vector<4x8x128xf32> to vector<32x128xf32>
    %111 = arith.truncf %110 : vector<32x128xf32> to vector<32x128xbf16>
    %c0_44 = arith.constant 0 : index
    %c0_45 = arith.constant 0 : index
    %c0_46 = arith.constant 0 : index
    %112 = vector.load %arg3[%c0_44, %c0_45, %c0_46] : memref<4x128x128xbf16, #tpu.memory_space<vmem>>, vector<1x128x128xbf16>
    %113 = vector.shape_cast %112 : vector<1x128x128xbf16> to vector<128x128xbf16>
    %cst_47 = arith.constant dense<0.000000e+00> : vector<32x128xf32>
    %114 = tpu.matmul %111, %113, %cst_47 {dimension_numbers = #tpu.dot_dimension_numbers<[1], [0], [0], [1], [0, 0, 1, 1], [], []>} : vector<32x128xbf16>, vector<128x128xbf16>, vector<32x128xf32> -> vector<32x128xf32>
    %c0_48 = arith.constant 0 : index
    %c1_49 = arith.constant 1 : index
    %c0_50 = arith.constant 0 : index
    %115 = tpu.strided_load %arg14[%c0_48, %c1_49, %c0_50] {strides = array<i32: 1, 2, 1>} : memref<4x18x128xf32, #tpu.memory_space<vmem>>, vector<4x8x128xf32>
    %116 = vector.shape_cast %115 : vector<4x8x128xf32> to vector<32x128xf32>
    %117 = arith.truncf %116 : vector<32x128xf32> to vector<32x128xbf16>
    %c1_51 = arith.constant 1 : index
    %c0_52 = arith.constant 0 : index
    %c0_53 = arith.constant 0 : index
    %118 = vector.load %arg3[%c1_51, %c0_52, %c0_53] : memref<4x128x128xbf16, #tpu.memory_space<vmem>>, vector<1x128x128xbf16>
    %119 = vector.shape_cast %118 : vector<1x128x128xbf16> to vector<128x128xbf16>
    %cst_54 = arith.constant dense<0.000000e+00> : vector<32x128xf32>
    %120 = tpu.matmul %117, %119, %cst_54 {dimension_numbers = #tpu.dot_dimension_numbers<[1], [0], [0], [1], [0, 0, 1, 1], [], []>} : vector<32x128xbf16>, vector<128x128xbf16>, vector<32x128xf32> -> vector<32x128xf32>
    %121 = arith.addf %114, %120 : vector<32x128xf32>
    %c0_55 = arith.constant 0 : index
    %c2_56 = arith.constant 2 : index
    %c0_57 = arith.constant 0 : index
    %122 = tpu.strided_load %arg14[%c0_55, %c2_56, %c0_57] {strides = array<i32: 1, 2, 1>} : memref<4x18x128xf32, #tpu.memory_space<vmem>>, vector<4x8x128xf32>
    %123 = vector.shape_cast %122 : vector<4x8x128xf32> to vector<32x128xf32>
    %124 = arith.truncf %123 : vector<32x128xf32> to vector<32x128xbf16>
    %c2_58 = arith.constant 2 : index
    %c0_59 = arith.constant 0 : index
    %c0_60 = arith.constant 0 : index
    %125 = vector.load %arg3[%c2_58, %c0_59, %c0_60] : memref<4x128x128xbf16, #tpu.memory_space<vmem>>, vector<1x128x128xbf16>
    %126 = vector.shape_cast %125 : vector<1x128x128xbf16> to vector<128x128xbf16>
    %cst_61 = arith.constant dense<0.000000e+00> : vector<32x128xf32>
    %127 = tpu.matmul %124, %126, %cst_61 {dimension_numbers = #tpu.dot_dimension_numbers<[1], [0], [0], [1], [0, 0, 1, 1], [], []>} : vector<32x128xbf16>, vector<128x128xbf16>, vector<32x128xf32> -> vector<32x128xf32>
    %128 = arith.addf %121, %127 : vector<32x128xf32>
    %c0_62 = arith.constant 0 : index
    %c3_63 = arith.constant 3 : index
    %c0_64 = arith.constant 0 : index
    %129 = tpu.strided_load %arg14[%c0_62, %c3_63, %c0_64] {strides = array<i32: 1, 2, 1>} : memref<4x18x128xf32, #tpu.memory_space<vmem>>, vector<4x8x128xf32>
    %130 = vector.shape_cast %129 : vector<4x8x128xf32> to vector<32x128xf32>
    %131 = arith.truncf %130 : vector<32x128xf32> to vector<32x128xbf16>
    %c3_65 = arith.constant 3 : index
    %c0_66 = arith.constant 0 : index
    %c0_67 = arith.constant 0 : index
    %132 = vector.load %arg3[%c3_65, %c0_66, %c0_67] : memref<4x128x128xbf16, #tpu.memory_space<vmem>>, vector<1x128x128xbf16>
    %133 = vector.shape_cast %132 : vector<1x128x128xbf16> to vector<128x128xbf16>
    %cst_68 = arith.constant dense<0.000000e+00> : vector<32x128xf32>
    %134 = tpu.matmul %131, %133, %cst_68 {dimension_numbers = #tpu.dot_dimension_numbers<[1], [0], [0], [1], [0, 0, 1, 1], [], []>} : vector<32x128xbf16>, vector<128x128xbf16>, vector<32x128xf32> -> vector<32x128xf32>
    %135 = arith.addf %128, %134 : vector<32x128xf32>
    %136 = vector.shape_cast %135 : vector<32x128xf32> to vector<4x8x128xf32>
    %cst_69 = arith.constant dense<0.000000e+00> : vector<4x128xf32>
    %137 = vector.multi_reduction <add>, %136, %cst_69 [1] : vector<4x8x128xf32> to vector<4x128xf32>
    %138 = arith.mulf %136, %136 : vector<4x8x128xf32>
    %cst_70 = arith.constant dense<0.000000e+00> : vector<4x128xf32>
    %139 = vector.multi_reduction <add>, %138, %cst_70 [1] : vector<4x8x128xf32> to vector<4x128xf32>
    %140 = vector.extract_strided_slice %137 {offsets = [0, 0], sizes = [4, 32], strides = [1, 1]} : vector<4x128xf32> to vector<4x32xf32>
    %141 = vector.extract_strided_slice %139 {offsets = [0, 0], sizes = [4, 32], strides = [1, 1]} : vector<4x128xf32> to vector<4x32xf32>
    %142 = vector.extract_strided_slice %137 {offsets = [0, 32], sizes = [4, 32], strides = [1, 1]} : vector<4x128xf32> to vector<4x32xf32>
    %143 = arith.addf %140, %142 : vector<4x32xf32>
    %144 = vector.extract_strided_slice %139 {offsets = [0, 32], sizes = [4, 32], strides = [1, 1]} : vector<4x128xf32> to vector<4x32xf32>
    %145 = arith.addf %141, %144 : vector<4x32xf32>
    %146 = vector.extract_strided_slice %137 {offsets = [0, 64], sizes = [4, 32], strides = [1, 1]} : vector<4x128xf32> to vector<4x32xf32>
    %147 = arith.addf %143, %146 : vector<4x32xf32>
    %148 = vector.extract_strided_slice %139 {offsets = [0, 64], sizes = [4, 32], strides = [1, 1]} : vector<4x128xf32> to vector<4x32xf32>
    %149 = arith.addf %145, %148 : vector<4x32xf32>
    %150 = vector.extract_strided_slice %137 {offsets = [0, 96], sizes = [4, 32], strides = [1, 1]} : vector<4x128xf32> to vector<4x32xf32>
    %151 = arith.addf %147, %150 : vector<4x32xf32>
    %152 = vector.extract_strided_slice %139 {offsets = [0, 96], sizes = [4, 32], strides = [1, 1]} : vector<4x128xf32> to vector<4x32xf32>
    %153 = arith.addf %149, %152 : vector<4x32xf32>
    %cst_71 = arith.constant 3.125000e-02 : f32
    %154 = vector.broadcast %cst_71 : f32 to vector<4x32xf32>
    %155 = arith.mulf %151, %154 : vector<4x32xf32>
    %cst_72 = arith.constant 3.125000e-02 : f32
    %156 = vector.broadcast %cst_72 : f32 to vector<4x32xf32>
    %157 = arith.mulf %153, %156 : vector<4x32xf32>
    %158 = arith.mulf %155, %155 : vector<4x32xf32>
    %159 = arith.subf %157, %158 : vector<4x32xf32>
    %cst_73 = arith.constant 0.000000e+00 : f32
    %160 = vector.broadcast %cst_73 : f32 to vector<4x32xf32>
    %161 = arith.maximumf %159, %160 : vector<4x32xf32>
    %cst_74 = arith.constant 9.99999974E-6 : f32
    %162 = vector.broadcast %cst_74 : f32 to vector<4x32xf32>
    %163 = arith.addf %161, %162 : vector<4x32xf32>
    %164 = math.rsqrt %163 : vector<4x32xf32>
    %c0_75 = arith.constant 0 : index
    %c0_76 = arith.constant 0 : index
    %165 = vector.load %arg7[%c0_75, %c0_76] : memref<3x128xf32, #tpu.memory_space<vmem>>, vector<3x128xf32>
    %166 = tpu.concatenate %164, %164, %164, %164 in 1 : vector<4x32xf32>, vector<4x32xf32>, vector<4x32xf32>, vector<4x32xf32> -> vector<4x128xf32>
    %167 = vector.shape_cast %166 : vector<4x128xf32> to vector<4x1x128xf32>
    %168 = vector.extract_strided_slice %165 {offsets = [0, 0], sizes = [1, 128], strides = [1, 1]} : vector<3x128xf32> to vector<1x128xf32>
    %169 = vector.shape_cast %168 : vector<1x128xf32> to vector<128xf32>
    %170 = vector.shape_cast %169 : vector<128xf32> to vector<1x1x128xf32>
    %171 = vector.broadcast %170 : vector<1x1x128xf32> to vector<4x1x128xf32>
    %172 = arith.mulf %167, %171 : vector<4x1x128xf32>
    %173 = vector.extract_strided_slice %165 {offsets = [1, 0], sizes = [1, 128], strides = [1, 1]} : vector<3x128xf32> to vector<1x128xf32>
    %174 = vector.shape_cast %173 : vector<1x128xf32> to vector<128xf32>
    %175 = arith.mulf %155, %164 : vector<4x32xf32>
    %176 = tpu.concatenate %175, %175, %175, %175 in 1 : vector<4x32xf32>, vector<4x32xf32>, vector<4x32xf32>, vector<4x32xf32> -> vector<4x128xf32>
    %177 = vector.shape_cast %176 : vector<4x128xf32> to vector<4x1x128xf32>
    %178 = vector.extract_strided_slice %165 {offsets = [0, 0], sizes = [1, 128], strides = [1, 1]} : vector<3x128xf32> to vector<1x128xf32>
    %179 = vector.shape_cast %178 : vector<1x128xf32> to vector<128xf32>
    %180 = vector.shape_cast %179 : vector<128xf32> to vector<1x1x128xf32>
    %181 = vector.broadcast %180 : vector<1x1x128xf32> to vector<4x1x128xf32>
    %182 = arith.mulf %177, %181 : vector<4x1x128xf32>
    %183 = vector.shape_cast %174 : vector<128xf32> to vector<1x1x128xf32>
    %184 = vector.broadcast %183 : vector<1x1x128xf32> to vector<4x1x128xf32>
    %185 = arith.subf %184, %182 : vector<4x1x128xf32>
    %186 = vector.broadcast %172 : vector<4x1x128xf32> to vector<4x8x128xf32>
    %187 = arith.mulf %136, %186 : vector<4x8x128xf32>
    %188 = vector.broadcast %185 : vector<4x1x128xf32> to vector<4x8x128xf32>
    %189 = arith.addf %187, %188 : vector<4x8x128xf32>
    %cst_77 = arith.constant 0.000000e+00 : f32
    %190 = vector.broadcast %cst_77 : f32 to vector<4x8x128xf32>
    %191 = arith.cmpf oge, %189, %190 : vector<4x8x128xf32>
    %192 = vector.extract_strided_slice %165 {offsets = [2, 0], sizes = [1, 128], strides = [1, 1]} : vector<3x128xf32> to vector<1x128xf32>
    %193 = vector.shape_cast %192 : vector<1x128xf32> to vector<128xf32>
    %194 = vector.shape_cast %193 : vector<128xf32> to vector<1x1x128xf32>
    %195 = vector.broadcast %194 : vector<1x1x128xf32> to vector<4x8x128xf32>
    %196 = arith.mulf %195, %189 : vector<4x8x128xf32>
    %197 = arith.select %191, %189, %196 : vector<4x8x128xi1>, vector<4x8x128xf32>
    %cst_78 = arith.constant 0.000000e+00 : f32
    %198 = vector.broadcast %cst_78 : f32 to vector<4x1x128xf32>
    %c0_79 = arith.constant 0 : index
    %c0_80 = arith.constant 0 : index
    %c0_81 = arith.constant 0 : index
    %199 = vector.load %arg15[%c0_79, %c0_80, %c0_81] : memref<4x10x128xf32, #tpu.memory_space<vmem>>, vector<4x1x128xf32>
    tpu.vector_store %arg15[%c0_79, %c0_80, %c0_81], %198 {strides = array<i32>} : memref<4x10x128xf32, #tpu.memory_space<vmem>>, vector<4x1x128xf32>,
    %c0_82 = arith.constant 0 : index
    %c9 = arith.constant 9 : index
    %c0_83 = arith.constant 0 : index
    %200 = vector.load %arg15[%c0_82, %c9, %c0_83] : memref<4x10x128xf32, #tpu.memory_space<vmem>>, vector<4x1x128xf32>
    tpu.vector_store %arg15[%c0_82, %c9, %c0_83], %198 {strides = array<i32>} : memref<4x10x128xf32, #tpu.memory_space<vmem>>, vector<4x1x128xf32>,
    %c0_84 = arith.constant 0 : index
    %c1_85 = arith.constant 1 : index
    %c0_86 = arith.constant 0 : index
    %201 = vector.load %arg15[%c0_84, %c1_85, %c0_86] : memref<4x10x128xf32, #tpu.memory_space<vmem>>, vector<4x8x128xf32>
    tpu.vector_store %arg15[%c0_84, %c1_85, %c0_86], %197 {strides = array<i32>} : memref<4x10x128xf32, #tpu.memory_space<vmem>>, vector<4x8x128xf32>,
    %c0_87 = arith.constant 0 : index
    %c0_88 = arith.constant 0 : index
    %c0_89 = arith.constant 0 : index
    %202 = tpu.strided_load %arg15[%c0_87, %c0_88, %c0_89] {strides = array<i32: 1, 2, 1>} : memref<4x10x128xf32, #tpu.memory_space<vmem>>, vector<4x4x128xf32>
    %203 = vector.shape_cast %202 : vector<4x4x128xf32> to vector<16x128xf32>
    %204 = arith.truncf %203 : vector<16x128xf32> to vector<16x128xbf16>
    %c0_90 = arith.constant 0 : index
    %c0_91 = arith.constant 0 : index
    %c0_92 = arith.constant 0 : index
    %205 = vector.load %arg4[%c0_90, %c0_91, %c0_92] : memref<4x128x128xbf16, #tpu.memory_space<vmem>>, vector<1x128x128xbf16>
    %206 = vector.shape_cast %205 : vector<1x128x128xbf16> to vector<128x128xbf16>
    %cst_93 = arith.constant dense<0.000000e+00> : vector<16x128xf32>
    %207 = tpu.matmul %204, %206, %cst_93 {dimension_numbers = #tpu.dot_dimension_numbers<[1], [0], [0], [1], [0, 0, 1, 1], [], []>} : vector<16x128xbf16>, vector<128x128xbf16>, vector<16x128xf32> -> vector<16x128xf32>
    %c0_94 = arith.constant 0 : index
    %c1_95 = arith.constant 1 : index
    %c0_96 = arith.constant 0 : index
    %208 = tpu.strided_load %arg15[%c0_94, %c1_95, %c0_96] {strides = array<i32: 1, 2, 1>} : memref<4x10x128xf32, #tpu.memory_space<vmem>>, vector<4x4x128xf32>
    %209 = vector.shape_cast %208 : vector<4x4x128xf32> to vector<16x128xf32>
    %210 = arith.truncf %209 : vector<16x128xf32> to vector<16x128xbf16>
    %c1_97 = arith.constant 1 : index
    %c0_98 = arith.constant 0 : index
    %c0_99 = arith.constant 0 : index
    %211 = vector.load %arg4[%c1_97, %c0_98, %c0_99] : memref<4x128x128xbf16, #tpu.memory_space<vmem>>, vector<1x128x128xbf16>
    %212 = vector.shape_cast %211 : vector<1x128x128xbf16> to vector<128x128xbf16>
    %cst_100 = arith.constant dense<0.000000e+00> : vector<16x128xf32>
    %213 = tpu.matmul %210, %212, %cst_100 {dimension_numbers = #tpu.dot_dimension_numbers<[1], [0], [0], [1], [0, 0, 1, 1], [], []>} : vector<16x128xbf16>, vector<128x128xbf16>, vector<16x128xf32> -> vector<16x128xf32>
    %214 = arith.addf %207, %213 : vector<16x128xf32>
    %c0_101 = arith.constant 0 : index
    %c2_102 = arith.constant 2 : index
    %c0_103 = arith.constant 0 : index
    %215 = tpu.strided_load %arg15[%c0_101, %c2_102, %c0_103] {strides = array<i32: 1, 2, 1>} : memref<4x10x128xf32, #tpu.memory_space<vmem>>, vector<4x4x128xf32>
    %216 = vector.shape_cast %215 : vector<4x4x128xf32> to vector<16x128xf32>
    %217 = arith.truncf %216 : vector<16x128xf32> to vector<16x128xbf16>
    %c2_104 = arith.constant 2 : index
    %c0_105 = arith.constant 0 : index
    %c0_106 = arith.constant 0 : index
    %218 = vector.load %arg4[%c2_104, %c0_105, %c0_106] : memref<4x128x128xbf16, #tpu.memory_space<vmem>>, vector<1x128x128xbf16>
    %219 = vector.shape_cast %218 : vector<1x128x128xbf16> to vector<128x128xbf16>
    %cst_107 = arith.constant dense<0.000000e+00> : vector<16x128xf32>
    %220 = tpu.matmul %217, %219, %cst_107 {dimension_numbers = #tpu.dot_dimension_numbers<[1], [0], [0], [1], [0, 0, 1, 1], [], []>} : vector<16x128xbf16>, vector<128x128xbf16>, vector<16x128xf32> -> vector<16x128xf32>
    %221 = arith.addf %214, %220 : vector<16x128xf32>
    %c0_108 = arith.constant 0 : index
    %c3_109 = arith.constant 3 : index
    %c0_110 = arith.constant 0 : index
    %222 = tpu.strided_load %arg15[%c0_108, %c3_109, %c0_110] {strides = array<i32: 1, 2, 1>} : memref<4x10x128xf32, #tpu.memory_space<vmem>>, vector<4x4x128xf32>
    %223 = vector.shape_cast %222 : vector<4x4x128xf32> to vector<16x128xf32>
    %224 = arith.truncf %223 : vector<16x128xf32> to vector<16x128xbf16>
    %c3_111 = arith.constant 3 : index
    %c0_112 = arith.constant 0 : index
    %c0_113 = arith.constant 0 : index
    %225 = vector.load %arg4[%c3_111, %c0_112, %c0_113] : memref<4x128x128xbf16, #tpu.memory_space<vmem>>, vector<1x128x128xbf16>
    %226 = vector.shape_cast %225 : vector<1x128x128xbf16> to vector<128x128xbf16>
    %cst_114 = arith.constant dense<0.000000e+00> : vector<16x128xf32>
    %227 = tpu.matmul %224, %226, %cst_114 {dimension_numbers = #tpu.dot_dimension_numbers<[1], [0], [0], [1], [0, 0, 1, 1], [], []>} : vector<16x128xbf16>, vector<128x128xbf16>, vector<16x128xf32> -> vector<16x128xf32>
    %228 = arith.addf %221, %227 : vector<16x128xf32>
    %229 = vector.shape_cast %228 : vector<16x128xf32> to vector<4x4x128xf32>
    %cst_115 = arith.constant dense<0.000000e+00> : vector<4x128xf32>
    %230 = vector.multi_reduction <add>, %229, %cst_115 [1] : vector<4x4x128xf32> to vector<4x128xf32>
    %231 = arith.mulf %229, %229 : vector<4x4x128xf32>
    %cst_116 = arith.constant dense<0.000000e+00> : vector<4x128xf32>
    %232 = vector.multi_reduction <add>, %231, %cst_116 [1] : vector<4x4x128xf32> to vector<4x128xf32>
    %233 = vector.extract_strided_slice %230 {offsets = [0, 0], sizes = [4, 64], strides = [1, 1]} : vector<4x128xf32> to vector<4x64xf32>
    %234 = vector.extract_strided_slice %232 {offsets = [0, 0], sizes = [4, 64], strides = [1, 1]} : vector<4x128xf32> to vector<4x64xf32>
    %235 = vector.extract_strided_slice %230 {offsets = [0, 64], sizes = [4, 64], strides = [1, 1]} : vector<4x128xf32> to vector<4x64xf32>
    %236 = arith.addf %233, %235 : vector<4x64xf32>
    %237 = vector.extract_strided_slice %232 {offsets = [0, 64], sizes = [4, 64], strides = [1, 1]} : vector<4x128xf32> to vector<4x64xf32>
    %238 = arith.addf %234, %237 : vector<4x64xf32>
    %cst_117 = arith.constant 1.250000e-01 : f32
    %239 = vector.broadcast %cst_117 : f32 to vector<4x64xf32>
    %240 = arith.mulf %236, %239 : vector<4x64xf32>
    %cst_118 = arith.constant 1.250000e-01 : f32
    %241 = vector.broadcast %cst_118 : f32 to vector<4x64xf32>
    %242 = arith.mulf %238, %241 : vector<4x64xf32>
    %243 = arith.mulf %240, %240 : vector<4x64xf32>
    %244 = arith.subf %242, %243 : vector<4x64xf32>
    %cst_119 = arith.constant 0.000000e+00 : f32
    %245 = vector.broadcast %cst_119 : f32 to vector<4x64xf32>
    %246 = arith.maximumf %244, %245 : vector<4x64xf32>
    %cst_120 = arith.constant 9.99999974E-6 : f32
    %247 = vector.broadcast %cst_120 : f32 to vector<4x64xf32>
    %248 = arith.addf %246, %247 : vector<4x64xf32>
    %249 = math.rsqrt %248 : vector<4x64xf32>
    %c0_121 = arith.constant 0 : index
    %c0_122 = arith.constant 0 : index
    %250 = vector.load %arg8[%c0_121, %c0_122] : memref<3x128xf32, #tpu.memory_space<vmem>>, vector<3x128xf32>
    %251 = tpu.concatenate %249, %249 in 1 : vector<4x64xf32>, vector<4x64xf32> -> vector<4x128xf32>
    %252 = vector.shape_cast %251 : vector<4x128xf32> to vector<4x1x128xf32>
    %253 = vector.extract_strided_slice %250 {offsets = [0, 0], sizes = [1, 128], strides = [1, 1]} : vector<3x128xf32> to vector<1x128xf32>
    %254 = vector.shape_cast %253 : vector<1x128xf32> to vector<128xf32>
    %255 = vector.shape_cast %254 : vector<128xf32> to vector<1x1x128xf32>
    %256 = vector.broadcast %255 : vector<1x1x128xf32> to vector<4x1x128xf32>
    %257 = arith.mulf %252, %256 : vector<4x1x128xf32>
    %258 = vector.extract_strided_slice %250 {offsets = [1, 0], sizes = [1, 128], strides = [1, 1]} : vector<3x128xf32> to vector<1x128xf32>
    %259 = vector.shape_cast %258 : vector<1x128xf32> to vector<128xf32>
    %260 = arith.mulf %240, %249 : vector<4x64xf32>
    %261 = tpu.concatenate %260, %260 in 1 : vector<4x64xf32>, vector<4x64xf32> -> vector<4x128xf32>
    %262 = vector.shape_cast %261 : vector<4x128xf32> to vector<4x1x128xf32>
    %263 = vector.extract_strided_slice %250 {offsets = [0, 0], sizes = [1, 128], strides = [1, 1]} : vector<3x128xf32> to vector<1x128xf32>
    %264 = vector.shape_cast %263 : vector<1x128xf32> to vector<128xf32>
    %265 = vector.shape_cast %264 : vector<128xf32> to vector<1x1x128xf32>
    %266 = vector.broadcast %265 : vector<1x1x128xf32> to vector<4x1x128xf32>
    %267 = arith.mulf %262, %266 : vector<4x1x128xf32>
    %268 = vector.shape_cast %259 : vector<128xf32> to vector<1x1x128xf32>
    %269 = vector.broadcast %268 : vector<1x1x128xf32> to vector<4x1x128xf32>
    %270 = arith.subf %269, %267 : vector<4x1x128xf32>
    %271 = vector.broadcast %257 : vector<4x1x128xf32> to vector<4x4x128xf32>
    %272 = arith.mulf %229, %271 : vector<4x4x128xf32>
    %273 = vector.broadcast %270 : vector<4x1x128xf32> to vector<4x4x128xf32>
    %274 = arith.addf %272, %273 : vector<4x4x128xf32>
    %cst_123 = arith.constant 0.000000e+00 : f32
    %275 = vector.broadcast %cst_123 : f32 to vector<4x4x128xf32>
    %276 = arith.cmpf oge, %274, %275 : vector<4x4x128xf32>
    %277 = vector.extract_strided_slice %250 {offsets = [2, 0], sizes = [1, 128], strides = [1, 1]} : vector<3x128xf32> to vector<1x128xf32>
    %278 = vector.shape_cast %277 : vector<1x128xf32> to vector<128xf32>
    %279 = vector.shape_cast %278 : vector<128xf32> to vector<1x1x128xf32>
    %280 = vector.broadcast %279 : vector<1x1x128xf32> to vector<4x4x128xf32>
    %281 = arith.mulf %280, %274 : vector<4x4x128xf32>
    %282 = arith.select %276, %274, %281 : vector<4x4x128xi1>, vector<4x4x128xf32>
    %cst_124 = arith.constant 0.000000e+00 : f32
    %283 = vector.broadcast %cst_124 : f32 to vector<4x1x128xf32>
    %c0_125 = arith.constant 0 : index
    %c0_126 = arith.constant 0 : index
    %c0_127 = arith.constant 0 : index
    %284 = vector.load %arg16[%c0_125, %c0_126, %c0_127] : memref<4x6x128xf32, #tpu.memory_space<vmem>>, vector<4x1x128xf32>
    tpu.vector_store %arg16[%c0_125, %c0_126, %c0_127], %283 {strides = array<i32>} : memref<4x6x128xf32, #tpu.memory_space<vmem>>, vector<4x1x128xf32>,
    %c0_128 = arith.constant 0 : index
    %c5 = arith.constant 5 : index
    %c0_129 = arith.constant 0 : index
    %285 = vector.load %arg16[%c0_128, %c5, %c0_129] : memref<4x6x128xf32, #tpu.memory_space<vmem>>, vector<4x1x128xf32>
    tpu.vector_store %arg16[%c0_128, %c5, %c0_129], %283 {strides = array<i32>} : memref<4x6x128xf32, #tpu.memory_space<vmem>>, vector<4x1x128xf32>,
    %c0_130 = arith.constant 0 : index
    %c1_131 = arith.constant 1 : index
    %c0_132 = arith.constant 0 : index
    %286 = vector.load %arg16[%c0_130, %c1_131, %c0_132] : memref<4x6x128xf32, #tpu.memory_space<vmem>>, vector<4x4x128xf32>
    tpu.vector_store %arg16[%c0_130, %c1_131, %c0_132], %282 {strides = array<i32>} : memref<4x6x128xf32, #tpu.memory_space<vmem>>, vector<4x4x128xf32>,
    %c0_133 = arith.constant 0 : index
    %c0_134 = arith.constant 0 : index
    %c0_135 = arith.constant 0 : index
    %287 = tpu.strided_load %arg16[%c0_133, %c0_134, %c0_135] {strides = array<i32: 1, 2, 1>} : memref<4x6x128xf32, #tpu.memory_space<vmem>>, vector<4x2x128xf32>
    %288 = vector.shape_cast %287 : vector<4x2x128xf32> to vector<8x128xf32>
    %289 = arith.truncf %288 : vector<8x128xf32> to vector<8x128xbf16>
    %c0_136 = arith.constant 0 : index
    %c0_137 = arith.constant 0 : index
    %c0_138 = arith.constant 0 : index
    %290 = vector.load %arg5[%c0_136, %c0_137, %c0_138] : memref<4x128x128xbf16, #tpu.memory_space<vmem>>, vector<1x128x128xbf16>
    %291 = vector.shape_cast %290 : vector<1x128x128xbf16> to vector<128x128xbf16>
    %cst_139 = arith.constant dense<0.000000e+00> : vector<8x128xf32>
    %292 = tpu.matmul %289, %291, %cst_139 {dimension_numbers = #tpu.dot_dimension_numbers<[1], [0], [0], [1], [0, 0, 1, 1], [], []>} : vector<8x128xbf16>, vector<128x128xbf16>, vector<8x128xf32> -> vector<8x128xf32>
    %c0_140 = arith.constant 0 : index
    %c1_141 = arith.constant 1 : index
    %c0_142 = arith.constant 0 : index
    %293 = tpu.strided_load %arg16[%c0_140, %c1_141, %c0_142] {strides = array<i32: 1, 2, 1>} : memref<4x6x128xf32, #tpu.memory_space<vmem>>, vector<4x2x128xf32>
    %294 = vector.shape_cast %293 : vector<4x2x128xf32> to vector<8x128xf32>
    %295 = arith.truncf %294 : vector<8x128xf32> to vector<8x128xbf16>
    %c1_143 = arith.constant 1 : index
    %c0_144 = arith.constant 0 : index
    %c0_145 = arith.constant 0 : index
    %296 = vector.load %arg5[%c1_143, %c0_144, %c0_145] : memref<4x128x128xbf16, #tpu.memory_space<vmem>>, vector<1x128x128xbf16>
    %297 = vector.shape_cast %296 : vector<1x128x128xbf16> to vector<128x128xbf16>
    %cst_146 = arith.constant dense<0.000000e+00> : vector<8x128xf32>
    %298 = tpu.matmul %295, %297, %cst_146 {dimension_numbers = #tpu.dot_dimension_numbers<[1], [0], [0], [1], [0, 0, 1, 1], [], []>} : vector<8x128xbf16>, vector<128x128xbf16>, vector<8x128xf32> -> vector<8x128xf32>
    %299 = arith.addf %292, %298 : vector<8x128xf32>
    %c0_147 = arith.constant 0 : index
    %c2_148 = arith.constant 2 : index
    %c0_149 = arith.constant 0 : index
    %300 = tpu.strided_load %arg16[%c0_147, %c2_148, %c0_149] {strides = array<i32: 1, 2, 1>} : memref<4x6x128xf32, #tpu.memory_space<vmem>>, vector<4x2x128xf32>
    %301 = vector.shape_cast %300 : vector<4x2x128xf32> to vector<8x128xf32>
    %302 = arith.truncf %301 : vector<8x128xf32> to vector<8x128xbf16>
    %c2_150 = arith.constant 2 : index
    %c0_151 = arith.constant 0 : index
    %c0_152 = arith.constant 0 : index
    %303 = vector.load %arg5[%c2_150, %c0_151, %c0_152] : memref<4x128x128xbf16, #tpu.memory_space<vmem>>, vector<1x128x128xbf16>
    %304 = vector.shape_cast %303 : vector<1x128x128xbf16> to vector<128x128xbf16>
    %cst_153 = arith.constant dense<0.000000e+00> : vector<8x128xf32>
    %305 = tpu.matmul %302, %304, %cst_153 {dimension_numbers = #tpu.dot_dimension_numbers<[1], [0], [0], [1], [0, 0, 1, 1], [], []>} : vector<8x128xbf16>, vector<128x128xbf16>, vector<8x128xf32> -> vector<8x128xf32>
    %306 = arith.addf %299, %305 : vector<8x128xf32>
    %c0_154 = arith.constant 0 : index
    %c3_155 = arith.constant 3 : index
    %c0_156 = arith.constant 0 : index
    %307 = tpu.strided_load %arg16[%c0_154, %c3_155, %c0_156] {strides = array<i32: 1, 2, 1>} : memref<4x6x128xf32, #tpu.memory_space<vmem>>, vector<4x2x128xf32>
    %308 = vector.shape_cast %307 : vector<4x2x128xf32> to vector<8x128xf32>
    %309 = arith.truncf %308 : vector<8x128xf32> to vector<8x128xbf16>
    %c3_157 = arith.constant 3 : index
    %c0_158 = arith.constant 0 : index
    %c0_159 = arith.constant 0 : index
    %310 = vector.load %arg5[%c3_157, %c0_158, %c0_159] : memref<4x128x128xbf16, #tpu.memory_space<vmem>>, vector<1x128x128xbf16>
    %311 = vector.shape_cast %310 : vector<1x128x128xbf16> to vector<128x128xbf16>
    %cst_160 = arith.constant dense<0.000000e+00> : vector<8x128xf32>
    %312 = tpu.matmul %309, %311, %cst_160 {dimension_numbers = #tpu.dot_dimension_numbers<[1], [0], [0], [1], [0, 0, 1, 1], [], []>} : vector<8x128xbf16>, vector<128x128xbf16>, vector<8x128xf32> -> vector<8x128xf32>
    %313 = arith.addf %306, %312 : vector<8x128xf32>
    %314 = vector.shape_cast %313 : vector<8x128xf32> to vector<4x2x128xf32>
    %cst_161 = arith.constant dense<0.000000e+00> : vector<4x128xf32>
    %315 = vector.multi_reduction <add>, %314, %cst_161 [1] : vector<4x2x128xf32> to vector<4x128xf32>
    %316 = arith.mulf %314, %314 : vector<4x2x128xf32>
    %cst_162 = arith.constant dense<0.000000e+00> : vector<4x128xf32>
    %317 = vector.multi_reduction <add>, %316, %cst_162 [1] : vector<4x2x128xf32> to vector<4x128xf32>
    %cst_163 = arith.constant 5.000000e-01 : f32
    %318 = vector.broadcast %cst_163 : f32 to vector<4x128xf32>
    %319 = arith.mulf %315, %318 : vector<4x128xf32>
    %cst_164 = arith.constant 5.000000e-01 : f32
    %320 = vector.broadcast %cst_164 : f32 to vector<4x128xf32>
    %321 = arith.mulf %317, %320 : vector<4x128xf32>
    %322 = arith.mulf %319, %319 : vector<4x128xf32>
    %323 = arith.subf %321, %322 : vector<4x128xf32>
    %cst_165 = arith.constant 0.000000e+00 : f32
    %324 = vector.broadcast %cst_165 : f32 to vector<4x128xf32>
    %325 = arith.maximumf %323, %324 : vector<4x128xf32>
    %cst_166 = arith.constant 9.99999974E-6 : f32
    %326 = vector.broadcast %cst_166 : f32 to vector<4x128xf32>
    %327 = arith.addf %325, %326 : vector<4x128xf32>
    %328 = math.rsqrt %327 : vector<4x128xf32>
    %c0_167 = arith.constant 0 : index
    %c0_168 = arith.constant 0 : index
    %329 = vector.load %arg9[%c0_167, %c0_168] : memref<3x128xf32, #tpu.memory_space<vmem>>, vector<3x128xf32>
    %330 = vector.shape_cast %328 : vector<4x128xf32> to vector<4x1x128xf32>
    %331 = vector.extract_strided_slice %329 {offsets = [0, 0], sizes = [1, 128], strides = [1, 1]} : vector<3x128xf32> to vector<1x128xf32>
    %332 = vector.shape_cast %331 : vector<1x128xf32> to vector<128xf32>
    %333 = vector.shape_cast %332 : vector<128xf32> to vector<1x1x128xf32>
    %334 = vector.broadcast %333 : vector<1x1x128xf32> to vector<4x1x128xf32>
    %335 = arith.mulf %330, %334 : vector<4x1x128xf32>
    %336 = vector.extract_strided_slice %329 {offsets = [1, 0], sizes = [1, 128], strides = [1, 1]} : vector<3x128xf32> to vector<1x128xf32>
    %337 = vector.shape_cast %336 : vector<1x128xf32> to vector<128xf32>
    %338 = arith.mulf %319, %328 : vector<4x128xf32>
    %339 = vector.shape_cast %338 : vector<4x128xf32> to vector<4x1x128xf32>
    %340 = vector.extract_strided_slice %329 {offsets = [0, 0], sizes = [1, 128], strides = [1, 1]} : vector<3x128xf32> to vector<1x128xf32>
    %341 = vector.shape_cast %340 : vector<1x128xf32> to vector<128xf32>
    %342 = vector.shape_cast %341 : vector<128xf32> to vector<1x1x128xf32>
    %343 = vector.broadcast %342 : vector<1x1x128xf32> to vector<4x1x128xf32>
    %344 = arith.mulf %339, %343 : vector<4x1x128xf32>
    %345 = vector.shape_cast %337 : vector<128xf32> to vector<1x1x128xf32>
    %346 = vector.broadcast %345 : vector<1x1x128xf32> to vector<4x1x128xf32>
    %347 = arith.subf %346, %344 : vector<4x1x128xf32>
    %348 = vector.broadcast %335 : vector<4x1x128xf32> to vector<4x2x128xf32>
    %349 = arith.mulf %314, %348 : vector<4x2x128xf32>
    %350 = vector.broadcast %347 : vector<4x1x128xf32> to vector<4x2x128xf32>
    %351 = arith.addf %349, %350 : vector<4x2x128xf32>
    %cst_169 = arith.constant 0.000000e+00 : f32
    %352 = vector.broadcast %cst_169 : f32 to vector<4x2x128xf32>
    %353 = arith.cmpf oge, %351, %352 : vector<4x2x128xf32>
    %354 = vector.extract_strided_slice %329 {offsets = [2, 0], sizes = [1, 128], strides = [1, 1]} : vector<3x128xf32> to vector<1x128xf32>
    %355 = vector.shape_cast %354 : vector<1x128xf32> to vector<128xf32>
    %356 = vector.shape_cast %355 : vector<128xf32> to vector<1x1x128xf32>
    %357 = vector.broadcast %356 : vector<1x1x128xf32> to vector<4x2x128xf32>
    %358 = arith.mulf %357, %351 : vector<4x2x128xf32>
    %359 = arith.select %353, %351, %358 : vector<4x2x128xi1>, vector<4x2x128xf32>
    %cst_170 = arith.constant dense<0xFF800000> : vector<4x128xf32>
    %360 = vector.multi_reduction <maximumf>, %359, %cst_170 [1] : vector<4x2x128xf32> to vector<4x128xf32>
    %c0_171 = arith.constant 0 : index
    %c0_172 = arith.constant 0 : index
    %361 = vector.load %arg11[%c0_171, %c0_172] : memref<3x64xf32, #tpu.memory_space<vmem>>, vector<3x64xf32>
    %362 = arith.truncf %360 : vector<4x128xf32> to vector<4x128xbf16>
    %c0_173 = arith.constant 0 : index
    %c0_174 = arith.constant 0 : index
    %363 = vector.load %arg10[%c0_173, %c0_174] : memref<128x64xbf16, #tpu.memory_space<vmem>>, vector<128x64xbf16>
    %cst_175 = arith.constant dense<0.000000e+00> : vector<4x64xf32>
    %364 = tpu.matmul %362, %363, %cst_175 {dimension_numbers = #tpu.dot_dimension_numbers<[1], [0], [0], [1], [0, 0, 1, 1], [], []>} : vector<4x128xbf16>, vector<128x64xbf16>, vector<4x64xf32> -> vector<4x64xf32>
    %365 = vector.extract_strided_slice %361 {offsets = [0, 0], sizes = [1, 64], strides = [1, 1]} : vector<3x64xf32> to vector<1x64xf32>
    %366 = vector.shape_cast %365 : vector<1x64xf32> to vector<64xf32>
    %367 = vector.shape_cast %366 : vector<64xf32> to vector<1x64xf32>
    %368 = vector.broadcast %367 : vector<1x64xf32> to vector<4x64xf32>
    %369 = arith.addf %364, %368 : vector<4x64xf32>
    %cst_176 = arith.constant 0.000000e+00 : f32
    %370 = vector.broadcast %cst_176 : f32 to vector<4x64xf32>
    %371 = arith.cmpf oge, %369, %370 : vector<4x64xf32>
    %372 = vector.extract_strided_slice %361 {offsets = [1, 0], sizes = [1, 64], strides = [1, 1]} : vector<3x64xf32> to vector<1x64xf32>
    %373 = vector.shape_cast %372 : vector<1x64xf32> to vector<64xf32>
    %374 = vector.shape_cast %373 : vector<64xf32> to vector<1x64xf32>
    %375 = vector.broadcast %374 : vector<1x64xf32> to vector<4x64xf32>
    %376 = arith.mulf %375, %369 : vector<4x64xf32>
    %377 = arith.select %371, %369, %376 : vector<4x64xi1>, vector<4x64xf32>
    %c0_177 = arith.constant 0 : index
    %c0_178 = arith.constant 0 : index
    %378 = vector.load %arg12[%c0_177, %c0_178] : memref<1x2xf32, #tpu.memory_space<vmem>>, vector<1x2xf32>
    %379 = vector.extract_strided_slice %361 {offsets = [2, 0], sizes = [1, 64], strides = [1, 1]} : vector<3x64xf32> to vector<1x64xf32>
    %380 = vector.shape_cast %379 : vector<1x64xf32> to vector<64xf32>
    %381 = vector.shape_cast %380 : vector<64xf32> to vector<1x64xf32>
    %382 = vector.broadcast %381 : vector<1x64xf32> to vector<4x64xf32>
    %383 = arith.mulf %377, %382 : vector<4x64xf32>
    %cst_179 = arith.constant dense<0.000000e+00> : vector<4xf32>
    %384 = vector.multi_reduction <add>, %383, %cst_179 [1] : vector<4x64xf32> to vector<4xf32>
    %385 = vector.shape_cast %384 : vector<4xf32> to vector<4x1xf32>
    %386 = vector.extract_strided_slice %378 {offsets = [0, 0], sizes = [1, 1], strides = [1, 1]} : vector<1x2xf32> to vector<1x1xf32>
    %387 = vector.broadcast %386 : vector<1x1xf32> to vector<4x1xf32>
    %388 = arith.addf %385, %387 : vector<4x1xf32>
    %389 = vector.extract_strided_slice %378 {offsets = [0, 1], sizes = [1, 1], strides = [1, 1]} : vector<1x2xf32> to vector<1x1xf32>
    %390 = vector.broadcast %389 : vector<1x1xf32> to vector<4x1xf32>
    %391 = arith.mulf %390, %388 : vector<4x1xf32>
    %392 = arith.negf %391 : vector<4x1xf32>
    %393 = math.exp %392 : vector<4x1xf32>
    %cst_180 = arith.constant 1.000000e+00 : f32
    %394 = vector.broadcast %cst_180 : f32 to vector<4x1xf32>
    %395 = arith.addf %394, %393 : vector<4x1xf32>
    %396 = arith.divf %394, %395 : vector<4x1xf32>
    %397 = vector.shape_cast %396 : vector<4x1xf32> to vector<1x4x1xf32>
    %c0_181 = arith.constant 0 : index
    %c0_182 = arith.constant 0 : index
    %c0_183 = arith.constant 0 : index
    %398 = vector.load %arg13[%c0_181, %c0_182, %c0_183] : memref<1x4x1xf32, #tpu.memory_space<vmem>>, vector<1x4x1xf32>
    tpu.vector_store %arg13[%c0_181, %c0_182, %c0_183], %397 {strides = array<i32>} : memref<1x4x1xf32, #tpu.memory_space<vmem>>, vector<1x4x1xf32>,
    return
  }
  func.func @transform_0(%arg0: i32) -> (i32, i32, i32) {
    %c0_i32 = arith.constant 0 : i32
    %c0_i32_0 = arith.constant 0 : i32
    %c0_i32_1 = arith.constant 0 : i32
    return %arg0, %c0_i32, %c0_i32_0 : i32, i32, i32
  }
  func.func @transform_1(%arg0: i32) -> (i32, i32, i32) {
    %c0_i32 = arith.constant 0 : i32
    %c0_i32_0 = arith.constant 0 : i32
    %c0_i32_1 = arith.constant 0 : i32
    %c0_i32_2 = arith.constant 0 : i32
    return %c0_i32, %c0_i32_0, %c0_i32_1 : i32, i32, i32
  }
  func.func @transform_2(%arg0: i32) -> (i32, i32, i32) {
    %c0_i32 = arith.constant 0 : i32
    %c0_i32_0 = arith.constant 0 : i32
    %c0_i32_1 = arith.constant 0 : i32
    %c0_i32_2 = arith.constant 0 : i32
    return %c0_i32, %c0_i32_0, %c0_i32_1 : i32, i32, i32
  }
  func.func @transform_3(%arg0: i32) -> (i32, i32, i32) {
    %c0_i32 = arith.constant 0 : i32
    %c0_i32_0 = arith.constant 0 : i32
    %c0_i32_1 = arith.constant 0 : i32
    %c0_i32_2 = arith.constant 0 : i32
    return %c0_i32, %c0_i32_0, %c0_i32_1 : i32, i32, i32
  }
  func.func @transform_4(%arg0: i32) -> (i32, i32, i32) {
    %c0_i32 = arith.constant 0 : i32
    %c0_i32_0 = arith.constant 0 : i32
    %c0_i32_1 = arith.constant 0 : i32
    %c0_i32_2 = arith.constant 0 : i32
    return %c0_i32, %c0_i32_0, %c0_i32_1 : i32, i32, i32
  }
  func.func @transform_5(%arg0: i32) -> (i32, i32) {
    %c0_i32 = arith.constant 0 : i32
    %c0_i32_0 = arith.constant 0 : i32
    %c0_i32_1 = arith.constant 0 : i32
    return %c0_i32, %c0_i32_0 : i32, i32
  }
  func.func @transform_6(%arg0: i32) -> (i32, i32) {
    %c0_i32 = arith.constant 0 : i32
    %c0_i32_0 = arith.constant 0 : i32
    %c0_i32_1 = arith.constant 0 : i32
    return %c0_i32, %c0_i32_0 : i32, i32
  }
  func.func @transform_7(%arg0: i32) -> (i32, i32) {
    %c0_i32 = arith.constant 0 : i32
    %c0_i32_0 = arith.constant 0 : i32
    %c0_i32_1 = arith.constant 0 : i32
    return %c0_i32, %c0_i32_0 : i32, i32
  }
  func.func @transform_8(%arg0: i32) -> (i32, i32) {
    %c0_i32 = arith.constant 0 : i32
    %c0_i32_0 = arith.constant 0 : i32
    %c0_i32_1 = arith.constant 0 : i32
    return %c0_i32, %c0_i32_0 : i32, i32
  }
  func.func @transform_9(%arg0: i32) -> (i32, i32) {
    %c0_i32 = arith.constant 0 : i32
    %c0_i32_0 = arith.constant 0 : i32
    %c0_i32_1 = arith.constant 0 : i32
    return %c0_i32, %c0_i32_0 : i32, i32
  }
  func.func @transform_10(%arg0: i32) -> (i32, i32) {
    %c0_i32 = arith.constant 0 : i32
    %c0_i32_0 = arith.constant 0 : i32
    %c0_i32_1 = arith.constant 0 : i32
    return %c0_i32, %c0_i32_0 : i32, i32
  }
  func.func @transform_11(%arg0: i32) -> (i32, i32) {
    %c0_i32 = arith.constant 0 : i32
    %c0_i32_0 = arith.constant 0 : i32
    %c0_i32_1 = arith.constant 0 : i32
    return %c0_i32, %c0_i32_0 : i32, i32
  }
  func.func @transform_12(%arg0: i32) -> (i32, i32, i32) {
    %c0_i32 = arith.constant 0 : i32
    %c0_i32_0 = arith.constant 0 : i32
    %c0_i32_1 = arith.constant 0 : i32
    return %arg0, %c0_i32, %c0_i32_0 : i32, i32, i32
  }
}

</mosaic_0001>

<llo_original>
// kernel: discriminator_forward.1
$region0: #{discriminator_forward.1}
  #allocation0 [shape = 'u32[]', space=smem, size = 0x4, offset = 0x4, fixed_abs, tag = 'smem constant byte address 0x4 - core index']
  #allocation1 [shape = 'u32[144,128]{1,0:T(1,128)}', space=vmem, size = 0x12000, scoped, tag = 'internal scratch']
  #allocation2 [shape = 'f32[4,18,128]{2,1,0:T(8,128)}', space=vmem, size = 0xc000, scoped, tag = 'scratch operand']
  #allocation3 [shape = 'f32[4,10,128]{2,1,0:T(8,128)}', space=vmem, size = 0x8000, scoped, tag = 'scratch operand']
  #allocation4 [shape = 'f32[4,6,128]{2,1,0:T(8,128)}', space=vmem, size = 0x4000, scoped, tag = 'scratch operand']
  %s0 = inlined_call_operand.vmem [shape: f32[8,34,34], index: 0, kind: input, shape index: {}]
  %s1 = inlined_call_operand.vmem [shape: bf16[4,34,128], index: 1, kind: input, shape index: {}]
  %s2 = inlined_call_operand.vmem [shape: bf16[4,128,128], index: 2, kind: input, shape index: {}]
  %s3 = inlined_call_operand.vmem [shape: bf16[4,128,128], index: 3, kind: input, shape index: {}]
  %s4 = inlined_call_operand.vmem [shape: bf16[4,128,128], index: 4, kind: input, shape index: {}]
  %s5 = inlined_call_operand.vmem [shape: f32[3,128], index: 5, kind: input, shape index: {}]
  %s6 = inlined_call_operand.vmem [shape: f32[3,128], index: 6, kind: input, shape index: {}]
  %s7 = inlined_call_operand.vmem [shape: f32[3,128], index: 7, kind: input, shape index: {}]
  %s8 = inlined_call_operand.vmem [shape: f32[3,128], index: 8, kind: input, shape index: {}]
  %s9 = inlined_call_operand.vmem [shape: bf16[128,64], index: 9, kind: input, shape index: {}]
  %s10 = inlined_call_operand.vmem [shape: f32[3,64], index: 10, kind: input, shape index: {}]
  %s11 = inlined_call_operand.vmem [shape: f32[1,2], index: 11, kind: input, shape index: {}]
  %s12 = inlined_call_operand.vmem [shape: f32[2,4,1], index: 12, kind: output, shape index: {}]
  %s13 = sld [smem:[#allocation0]]
  $region81: #{discriminator_forward.1} parent=0
    _
  %s15 = ssub.s32 1, %s13
  %s16 = scalar_select 0, %s15, %s13
  loop: start=0, step=1, limit=4
  $region2: #{discriminator_forward.1} parent=0 // loop_pre_header
    _
  $region3: #{discriminator_forward.1} parent=0 // loop_header
    %s18 = sphi 0, %s22
    %p19 = scmp.ge.s32.totalorder %s18, 4
    %s28 = sphi 0, %s30
    %s31 = sphi 0, %s28
    %s32 = sphi 0, %s31
    %s48 = sphi 0, %s32
    %s52 = sphi 0, %s52
    %s54 = sphi 0, %s52
    %s55 = sphi 0, %s54
    %s69 = sphi 0, %s55
    %s73 = sphi 0, %s73
    %s75 = sphi 0, %s73
    %s76 = sphi 0, %s75
    %s90 = sphi 0, %s76
    %s94 = sphi 0, %s94
    %s96 = sphi 0, %s94
    %s97 = sphi 0, %s96
    %s111 = sphi 0, %s97
    %s115 = sphi 0, %s115
    %s117 = sphi 0, %s115
    %s118 = sphi 0, %s117
    %s132 = sphi 0, %s118
    %s136 = sphi 0, %s136
    %s138 = sphi 0, %s136
    %s139 = sphi 0, %s138
    %s153 = sphi 0, %s139
    %s157 = sphi 0, %s157
    %s159 = sphi 0, %s157
    %s160 = sphi 0, %s159
    %s174 = sphi 0, %s160
    %s178 = sphi 0, %s178
    %s180 = sphi 0, %s178
    %s181 = sphi 0, %s180
    %s195 = sphi 0, %s181
    %s199 = sphi 0, %s199
    %s201 = sphi 0, %s199
    %s202 = sphi 0, %s201
    %s216 = sphi 0, %s202
    %s220 = sphi 0, %s220
    %s222 = sphi 0, %s220
    %s223 = sphi 0, %s222
    %s237 = sphi 0, %s223
    %s241 = sphi 0, %s241
    %s243 = sphi 0, %s241
    %s244 = sphi 0, %s243
    %s258 = sphi 0, %s244
    %s262 = sphi 0, %s262
    %s264 = sphi 0, %s262
    %s265 = sphi 0, %s264
    %s279 = sphi 0, %s265
    %s285 = sphi 0, %s287
    %s288 = sphi 0, %s285
    %s289 = sphi 0, %s288
    %s305 = sphi 0, %s289
  $region4: #{discriminator_forward.1} parent=0 // loop_header_branch
    %21 = sbr.rel (%p19) target = $region8
  $region5: #{discriminator_forward.1} parent=0 // loop_body
    %s23 = ssub.s32 %s18, 1
    %s24 = ssub.s32 %s18, 2
    %s25 = sadd.s32 %s18, 1
    %s26 = ssub.s32 %s18, %s25
    %p27 = scmp.eq.s32.totalorder %s26, 0
    %s29 = sadd.s32 %s28, 1
    %s30 = scalar_select %p27, %s28, %s29
    %p33 = pneg %p27
    %p34 = scmp.eq.s32.totalorder %s18, 1
    %p35 = por %p33, %p34
    %p36 = scmp.ne.s32.totalorder %s28, %s31
    %p37 = scmp.eq.s32.totalorder %s18, 0
    %p38 = por %p36, %p37
    %p39 = scmp.ne.s32.totalorder %s28, %s31
    %p40 = scmp.eq.s32.totalorder %s23, 1
    %p41 = por %p39, %p40
    %p42 = scmp.ne.s32.totalorder %s31, %s32
    %p43 = scmp.eq.s32.totalorder %s23, 0
    %p44 = por %p42, %p43
    %p45 = scmp.ne.s32.totalorder %s31, %s32
    %p46 = scmp.eq.s32.totalorder %s24, 1
    %p47 = por %p45, %p46
    %p49 = scmp.ne.s32.totalorder %s32, %s48
    %p50 = scmp.eq.s32.totalorder %s24, 0
    %p51 = por %p49, %p50
    %s53 = sadd.s32 %s52, 1
    %p56 = scmp.eq.s32.totalorder %s18, 1
    %p57 = scmp.ne.s32.totalorder %s52, %s54
    %p58 = scmp.eq.s32.totalorder %s18, 0
    %p59 = por %p57, %p58
    %p60 = scmp.ne.s32.totalorder %s52, %s54
    %p61 = scmp.eq.s32.totalorder %s23, 1
    %p62 = por %p60, %p61
    %p63 = scmp.ne.s32.totalorder %s54, %s55
    %p64 = scmp.eq.s32.totalorder %s23, 0
    %p65 = por %p63, %p64
    %p66 = scmp.ne.s32.totalorder %s54, %s55
    %p67 = scmp.eq.s32.totalorder %s24, 1
    %p68 = por %p66, %p67
    %p70 = scmp.ne.s32.totalorder %s55, %s69
    %p71 = scmp.eq.s32.totalorder %s24, 0
    %p72 = por %p70, %p71
    %s74 = sadd.s32 %s73, 1
    %p77 = scmp.eq.s32.totalorder %s18, 1
    %p78 = scmp.ne.s32.totalorder %s73, %s75
    %p79 = scmp.eq.s32.totalorder %s18, 0
    %p80 = por %p78, %p79
    %p81 = scmp.ne.s32.totalorder %s73, %s75
    %p82 = scmp.eq.s32.totalorder %s23, 1
    %p83 = por %p81, %p82
    %p84 = scmp.ne.s32.totalorder %s75, %s76
    %p85 = scmp.eq.s32.totalorder %s23, 0
    %p86 = por %p84, %p85
    %p87 = scmp.ne.s32.totalorder %s75, %s76
    %p88 = scmp.eq.s32.totalorder %s24, 1
    %p89 = por %p87, %p88
    %p91 = scmp.ne.s32.totalorder %s76, %s90
    %p92 = scmp.eq.s32.totalorder %s24, 0
    %p93 = por %p91, %p92
    %s95 = sadd.s32 %s94, 1
    %p98 = scmp.eq.s32.totalorder %s18, 1
    %p99 = scmp.ne.s32.totalorder %s94, %s96
    %p100 = scmp.eq.s32.totalorder %s18, 0
    %p101 = por %p99, %p100
    %p102 = scmp.ne.s32.totalorder %s94, %s96
    %p103 = scmp.eq.s32.totalorder %s23, 1
    %p104 = por %p102, %p103
    %p105 = scmp.ne.s32.totalorder %s96, %s97
    %p106 = scmp.eq.s32.totalorder %s23, 0
    %p107 = por %p105, %p106
    %p108 = scmp.ne.s32.totalorder %s96, %s97
    %p109 = scmp.eq.s32.totalorder %s24, 1
    %p110 = por %p108, %p109
    %p112 = scmp.ne.s32.totalorder %s97, %s111
    %p113 = scmp.eq.s32.totalorder %s24, 0
    %p114 = por %p112, %p113
    %s116 = sadd.s32 %s115, 1
    %p119 = scmp.eq.s32.totalorder %s18, 1
    %p120 = scmp.ne.s32.totalorder %s115, %s117
    %p121 = scmp.eq.s32.totalorder %s18, 0
    %p122 = por %p120, %p121
    %p123 = scmp.ne.s32.totalorder %s115, %s117
    %p124 = scmp.eq.s32.totalorder %s23, 1
    %p125 = por %p123, %p124
    %p126 = scmp.ne.s32.totalorder %s117, %s118
    %p127 = scmp.eq.s32.totalorder %s23, 0
    %p128 = por %p126, %p127
    %p129 = scmp.ne.s32.totalorder %s117, %s118
    %p130 = scmp.eq.s32.totalorder %s24, 1
    %p131 = por %p129, %p130
    %p133 = scmp.ne.s32.totalorder %s118, %s132
    %p134 = scmp.eq.s32.totalorder %s24, 0
    %p135 = por %p133, %p134
    %s137 = sadd.s32 %s136, 1
    %p140 = scmp.eq.s32.totalorder %s18, 1
    %p141 = scmp.ne.s32.totalorder %s136, %s138
    %p142 = scmp.eq.s32.totalorder %s18, 0
    %p143 = por %p141, %p142
    %p144 = scmp.ne.s32.totalorder %s136, %s138
    %p145 = scmp.eq.s32.totalorder %s23, 1
    %p146 = por %p144, %p145
    %p147 = scmp.ne.s32.totalorder %s138, %s139
    %p148 = scmp.eq.s32.totalorder %s23, 0
    %p149 = por %p147, %p148
    %p150 = scmp.ne.s32.totalorder %s138, %s139
    %p151 = scmp.eq.s32.totalorder %s24, 1
    %p152 = por %p150, %p151
    %p154 = scmp.ne.s32.totalorder %s139, %s153
    %p155 = scmp.eq.s32.totalorder %s24, 0
    %p156 = por %p154, %p155
    %s158 = sadd.s32 %s157, 1
    %p161 = scmp.eq.s32.totalorder %s18, 1
    %p162 = scmp.ne.s32.totalorder %s157, %s159
    %p163 = scmp.eq.s32.totalorder %s18, 0
    %p164 = por %p162, %p163
    %p165 = scmp.ne.s32.totalorder %s157, %s159
    %p166 = scmp.eq.s32.totalorder %s23, 1
    %p167 = por %p165, %p166
    %p168 = scmp.ne.s32.totalorder %s159, %s160
    %p169 = scmp.eq.s32.totalorder %s23, 0
    %p170 = por %p168, %p169
    %p171 = scmp.ne.s32.totalorder %s159, %s160
    %p172 = scmp.eq.s32.totalorder %s24, 1
    %p173 = por %p171, %p172
    %p175 = scmp.ne.s32.totalorder %s160, %s174
    %p176 = scmp.eq.s32.totalorder %s24, 0
    %p177 = por %p175, %p176
    %s179 = sadd.s32 %s178, 1
    %p182 = scmp.eq.s32.totalorder %s18, 1
    %p183 = scmp.ne.s32.totalorder %s178, %s180
    %p184 = scmp.eq.s32.totalorder %s18, 0
    %p185 = por %p183, %p184
    %p186 = scmp.ne.s32.totalorder %s178, %s180
    %p187 = scmp.eq.s32.totalorder %s23, 1
    %p188 = por %p186, %p187
    %p189 = scmp.ne.s32.totalorder %s180, %s181
    %p190 = scmp.eq.s32.totalorder %s23, 0
    %p191 = por %p189, %p190
    %p192 = scmp.ne.s32.totalorder %s180, %s181
    %p193 = scmp.eq.s32.totalorder %s24, 1
    %p194 = por %p192, %p193
    %p196 = scmp.ne.s32.totalorder %s181, %s195
    %p197 = scmp.eq.s32.totalorder %s24, 0
    %p198 = por %p196, %p197
    %s200 = sadd.s32 %s199, 1
    %p203 = scmp.eq.s32.totalorder %s18, 1
    %p204 = scmp.ne.s32.totalorder %s199, %s201
    %p205 = scmp.eq.s32.totalorder %s18, 0
    %p206 = por %p204, %p205
    %p207 = scmp.ne.s32.totalorder %s199, %s201
    %p208 = scmp.eq.s32.totalorder %s23, 1
    %p209 = por %p207, %p208
    %p210 = scmp.ne.s32.totalorder %s201, %s202
    %p211 = scmp.eq.s32.totalorder %s23, 0
    %p212 = por %p210, %p211
    %p213 = scmp.ne.s32.totalorder %s201, %s202
    %p214 = scmp.eq.s32.totalorder %s24, 1
    %p215 = por %p213, %p214
    %p217 = scmp.ne.s32.totalorder %s202, %s216
    %p218 = scmp.eq.s32.totalorder %s24, 0
    %p219 = por %p217, %p218
    %s221 = sadd.s32 %s220, 1
    %p224 = scmp.eq.s32.totalorder %s18, 1
    %p225 = scmp.ne.s32.totalorder %s220, %s222
    %p226 = scmp.eq.s32.totalorder %s18, 0
    %p227 = por %p225, %p226
    %p228 = scmp.ne.s32.totalorder %s220, %s222
    %p229 = scmp.eq.s32.totalorder %s23, 1
    %p230 = por %p228, %p229
    %p231 = scmp.ne.s32.totalorder %s222, %s223
    %p232 = scmp.eq.s32.totalorder %s23, 0
    %p233 = por %p231, %p232
    %p234 = scmp.ne.s32.totalorder %s222, %s223
    %p235 = scmp.eq.s32.totalorder %s24, 1
    %p236 = por %p234, %p235
    %p238 = scmp.ne.s32.totalorder %s223, %s237
    %p239 = scmp.eq.s32.totalorder %s24, 0
    %p240 = por %p238, %p239
    %s242 = sadd.s32 %s241, 1
    %p245 = scmp.eq.s32.totalorder %s18, 1
    %p246 = scmp.ne.s32.totalorder %s241, %s243
    %p247 = scmp.eq.s32.totalorder %s18, 0
    %p248 = por %p246, %p247
    %p249 = scmp.ne.s32.totalorder %s241, %s243
    %p250 = scmp.eq.s32.totalorder %s23, 1
    %p251 = por %p249, %p250
    %p252 = scmp.ne.s32.totalorder %s243, %s244
    %p253 = scmp.eq.s32.totalorder %s23, 0
    %p254 = por %p252, %p253
    %p255 = scmp.ne.s32.totalorder %s243, %s244
    %p256 = scmp.eq.s32.totalorder %s24, 1
    %p257 = por %p255, %p256
    %p259 = scmp.ne.s32.totalorder %s244, %s258
    %p260 = scmp.eq.s32.totalorder %s24, 0
    %p261 = por %p259, %p260
    %s263 = sadd.s32 %s262, 1
    %p266 = scmp.eq.s32.totalorder %s18, 1
    %p267 = scmp.ne.s32.totalorder %s262, %s264
    %p268 = scmp.eq.s32.totalorder %s18, 0
    %p269 = por %p267, %p268
    %p270 = scmp.ne.s32.totalorder %s262, %s264
    %p271 = scmp.eq.s32.totalorder %s23, 1
    %p272 = por %p270, %p271
    %p273 = scmp.ne.s32.totalorder %s264, %s265
    %p274 = scmp.eq.s32.totalorder %s23, 0
    %p275 = por %p273, %p274
    %p276 = scmp.ne.s32.totalorder %s264, %s265
    %p277 = scmp.eq.s32.totalorder %s24, 1
    %p278 = por %p276, %p277
    %p280 = scmp.ne.s32.totalorder %s265, %s279
    %p281 = scmp.eq.s32.totalorder %s24, 0
    %p282 = por %p280, %p281
    %s283 = ssub.s32 %s18, %s25
    %p284 = scmp.eq.s32.totalorder %s283, 0
    %s286 = sadd.s32 %s285, 1
    %s287 = scalar_select %p284, %s285, %s286
    %p290 = pneg %p284
    %p291 = scmp.eq.s32.totalorder %s18, 1
    %p292 = por %p290, %p291
    %p293 = scmp.ne.s32.totalorder %s285, %s288
    %p294 = scmp.eq.s32.totalorder %s18, 0
    %p295 = por %p293, %p294
    %p296 = scmp.ne.s32.totalorder %s285, %s288
    %p297 = scmp.eq.s32.totalorder %s23, 1
    %p298 = por %p296, %p297
    %p299 = scmp.ne.s32.totalorder %s288, %s289
    %p300 = scmp.eq.s32.totalorder %s23, 0
    %p301 = por %p299, %p300
    %p302 = scmp.ne.s32.totalorder %s288, %s289
    %p303 = scmp.eq.s32.totalorder %s24, 1
    %p304 = por %p302, %p303
    %p306 = scmp.ne.s32.totalorder %s289, %s305
    %p307 = scmp.eq.s32.totalorder %s24, 0
    %p308 = por %p306, %p307
    %p309 = scmp.le.s32.totalorder 1, %s18
    %p310 = scmp.lt.s32.totalorder %s18, 3
    %p311 = pnand %p309, %p310
    %p312 = pneg %p311
    // Predicated region
    $region9: #{discriminator_forward.1} parent=5 // pred_check
      _
    $region10: #{discriminator_forward.1} parent=5 // pred_check_branch
      %314 = sbr.rel (%p311) target = $region12
    $region11: #{discriminator_forward.1} parent=5 // pred_region
      %s315 = ssub.s32 %s18, 1
      // Predicated region
      $region13: #{discriminator_forward.1} parent=11 // pred_check
        %p316 = pneg %p65
      $region14: #{discriminator_forward.1} parent=11 // pred_check_branch
        %318 = sbr.rel (%p316) target = $region16
      $region15: #{discriminator_forward.1} parent=11 // pred_region
        _
      $region16: #{discriminator_forward.1} parent=11 // pred_fallthru
        _
      // Predicated region
      $region17: #{discriminator_forward.1} parent=11 // pred_check
        %p319 = pneg %p86
      $region18: #{discriminator_forward.1} parent=11 // pred_check_branch
        %321 = sbr.rel (%p319) target = $region20
      $region19: #{discriminator_forward.1} parent=11 // pred_region
        _
      $region20: #{discriminator_forward.1} parent=11 // pred_fallthru
        _
      // Predicated region
      $region21: #{discriminator_forward.1} parent=11 // pred_check
        %p322 = pneg %p107
      $region22: #{discriminator_forward.1} parent=11 // pred_check_branch
        %324 = sbr.rel (%p322) target = $region24
      $region23: #{discriminator_forward.1} parent=11 // pred_region
        _
      $region24: #{discriminator_forward.1} parent=11 // pred_fallthru
        _
      // Predicated region
      $region25: #{discriminator_forward.1} parent=11 // pred_check
        %p325 = pneg %p128
      $region26: #{discriminator_forward.1} parent=11 // pred_check_branch
        %327 = sbr.rel (%p325) target = $region28
      $region27: #{discriminator_forward.1} parent=11 // pred_region
        _
      $region28: #{discriminator_forward.1} parent=11 // pred_fallthru
        _
      // Predicated region
      $region29: #{discriminator_forward.1} parent=11 // pred_check
        %p328 = pneg %p149
      $region30: #{discriminator_forward.1} parent=11 // pred_check_branch
        %330 = sbr.rel (%p328) target = $region32
      $region31: #{discriminator_forward.1} parent=11 // pred_region
        _
      $region32: #{discriminator_forward.1} parent=11 // pred_fallthru
        _
      // Predicated region
      $region33: #{discriminator_forward.1} parent=11 // pred_check
        %p331 = pneg %p170
      $region34: #{discriminator_forward.1} parent=11 // pred_check_branch
        %333 = sbr.rel (%p331) target = $region36
      $region35: #{discriminator_forward.1} parent=11 // pred_region
        _
      $region36: #{discriminator_forward.1} parent=11 // pred_fallthru
        _
      // Predicated region
      $region37: #{discriminator_forward.1} parent=11 // pred_check
        %p334 = pneg %p191
      $region38: #{discriminator_forward.1} parent=11 // pred_check_branch
        %336 = sbr.rel (%p334) target = $region40
      $region39: #{discriminator_forward.1} parent=11 // pred_region
        _
      $region40: #{discriminator_forward.1} parent=11 // pred_fallthru
        _
      // Predicated region
      $region41: #{discriminator_forward.1} parent=11 // pred_check
        %p337 = pneg %p212
      $region42: #{discriminator_forward.1} parent=11 // pred_check_branch
        %339 = sbr.rel (%p337) target = $region44
      $region43: #{discriminator_forward.1} parent=11 // pred_region
        _
      $region44: #{discriminator_forward.1} parent=11 // pred_fallthru
        _
      // Predicated region
      $region45: #{discriminator_forward.1} parent=11 // pred_check
        %p340 = pneg %p233
      $region46: #{discriminator_forward.1} parent=11 // pred_check_branch
        %342 = sbr.rel (%p340) target = $region48
      $region47: #{discriminator_forward.1} parent=11 // pred_region
        _
      $region48: #{discriminator_forward.1} parent=11 // pred_fallthru
        _
      // Predicated region
      $region49: #{discriminator_forward.1} parent=11 // pred_check
        %p343 = pneg %p254
      $region50: #{discriminator_forward.1} parent=11 // pred_check_branch
        %345 = sbr.rel (%p343) target = $region52
      $region51: #{discriminator_forward.1} parent=11 // pred_region
        _
      $region52: #{discriminator_forward.1} parent=11 // pred_fallthru
        _
      // Predicated region
      $region53: #{discriminator_forward.1} parent=11 // pred_check
        %p346 = pneg %p275
      $region54: #{discriminator_forward.1} parent=11 // pred_check_branch
        %348 = sbr.rel (%p346) target = $region56
      $region55: #{discriminator_forward.1} parent=11 // pred_region
        _
      $region56: #{discriminator_forward.1} parent=11 // pred_fallthru
        _
    $region12: #{discriminator_forward.1} parent=5 // pred_fallthru
      _
    %p349 = scmp.lt.s32.totalorder %s18, 2
    // Predicated region
    $region57: #{discriminator_forward.1} parent=5 // pred_check
      %p350 = pneg %p349
    $region58: #{discriminator_forward.1} parent=5 // pred_check_branch
      %352 = sbr.rel (%p350) target = $region60
    $region59: #{discriminator_forward.1} parent=5 // pred_region
      // Predicated region
      $region61: #{discriminator_forward.1} parent=59 // pred_check
        %p353 = pneg %p38
      $region62: #{discriminator_forward.1} parent=59 // pred_check_branch
        %355 = sbr.rel (%p353) target = $region64
      $region63: #{discriminator_forward.1} parent=59 // pred_region
        %s356 = smul.u32 4, %s18
        %p357 = scmp.lt.s32.totalorder %s356, 7
        %s358 = scalar_select %p357, %s356, 7
        %s359 = smul.addr %s358, 5
        %s360 = smul.addr %s359, 8
        %s361 = scalar_lea.vmem %s0, %s360
        %s362 = smul.u32 4, %s18
      $region64: #{discriminator_forward.1} parent=59 // pred_fallthru
        _
    $region60: #{discriminator_forward.1} parent=5 // pred_fallthru
      _
    %p363 = scmp.le.s32.totalorder 1, %s18
    %p364 = scmp.lt.s32.totalorder %s18, 3
    %p365 = pnand %p363, %p364
    %p366 = pneg %p365
    // Predicated region
    $region65: #{discriminator_forward.1} parent=5 // pred_check
      _
    $region66: #{discriminator_forward.1} parent=5 // pred_check_branch
      %368 = sbr.rel (%p365) target = $region68
    $region67: #{discriminator_forward.1} parent=5 // pred_region
      %s369 = ssub.s32 %s18, 1
      %s370 = smul.u32 4, %s23
      %p371 = scmp.lt.s32.totalorder %s370, 7
      %s372 = scalar_select %p371, %s370, 7
      %s373 = smul.addr %s372, 5
      %s374 = smul.addr %s373, 8
      %s375 = scalar_lea.vmem %s0, %s374
      %p376 = pneg %p44
      %p377 = pneg %p41
      %p378 = pneg %p65
      %p379 = pneg %p62
      %p380 = pneg %p86
      %p381 = pneg %p83
      %p382 = pneg %p107
      %p383 = pneg %p104
      %p384 = pneg %p128
      %p385 = pneg %p125
      %p386 = pneg %p149
      %p387 = pneg %p146
      %p388 = pneg %p170
      %p389 = pneg %p167
      %p390 = pneg %p191
      %p391 = pneg %p188
      %p392 = pneg %p212
      %p393 = pneg %p209
      %p394 = pneg %p233
      %p395 = pneg %p230
      %p396 = pneg %p254
      %p397 = pneg %p251
      %p398 = pneg %p275
      %p399 = pneg %p272
      %p400 = pneg %p301
      %p401 = pneg %p298
      %p402 = scmp.lt.s32.totalorder %s23, 1
      %s403 = scalar_select %p402, %s23, 1
      %s404 = smul.addr %s403, 4
      %s405 = scalar_lea.vmem %s12, %s404
      %s406 = smul.u32 4, %s23
      %p407 = scmp.lt.s32.totalorder %s406, 7
      %s408 = scalar_select %p407, %s406, 7
      %s409 = smul.addr %s408, 5
      %s410 = smul.addr %s409, 8
      %s411 = scalar_lea.vmem %s0, %s410
      %s412 = smul.u32 4, %s23
      %p413 = scmp.lt.s32.totalorder %s23, 1
      %s414 = scalar_select %p413, %s23, 1
      %s415 = smul.addr %s414, 4
      %s416 = scalar_lea.vmem %s12, %s415
      %v418 = vld [vmem:[%s411] ss:$2 sm:$0xff]
      %s419 = scalar_lea.vmem %s411, 16
      %v420 = vld [vmem:[%s419] ss:$2 sm:$0xff]
      %s421 = scalar_lea.vmem %s411, 40
      %v422 = vld [vmem:[%s421] ss:$2 sm:$0xff]
      %s423 = scalar_lea.vmem %s411, 56
      %v424 = vld [vmem:[%s423] ss:$2 sm:$0xff]
      %s425 = scalar_lea.vmem %s411, 80
      %v426 = vld [vmem:[%s425] ss:$2 sm:$0xff]
      %s427 = scalar_lea.vmem %s411, 96
      %v428 = vld [vmem:[%s427] ss:$2 sm:$0xff]
      %s429 = scalar_lea.vmem %s411, 120
      %v430 = vld [vmem:[%s429] ss:$2 sm:$0xff]
      %s431 = scalar_lea.vmem %s411, 136
      %v432 = vld [vmem:[%s431] ss:$2 sm:$0xff]
      %v433 = vpack.c.bf16 %v420, %v418
      %v434 = vpack.c.bf16 %v424, %v422
      %v435 = vpack.c.bf16 %v428, %v426
      %v436 = vpack.c.bf16 %v432, %v430
      %v437 = vld [vmem:[%s1] sm:$0xf]
      %v438 = vld [vmem:[%s1 + $0x4] sm:$0xf]
      %v439 = vld [vmem:[%s1 + $0x8] sm:$0xf]
      %v440 = vld [vmem:[%s1 + $0xc] sm:$0xf]
      %v441 = vld [vmem:[%s1 + $0x10] sm:$0x1]
      %s442 = scalar_lea.vmem %s411, 1
      %v443 = vld [vmem:[%s442] ss:$2 sm:$0xff]
      %s444 = scalar_lea.vmem %s411, 17
      %v445 = vld [vmem:[%s444] ss:$2 sm:$0xff]
      %s446 = scalar_lea.vmem %s411, 41
      %v447 = vld [vmem:[%s446] ss:$2 sm:$0xff]
      %s448 = scalar_lea.vmem %s411, 57
      %v449 = vld [vmem:[%s448] ss:$2 sm:$0xff]
      %s450 = scalar_lea.vmem %s411, 81
      %v451 = vld [vmem:[%s450] ss:$2 sm:$0xff]
      %s452 = scalar_lea.vmem %s411, 97
      %v453 = vld [vmem:[%s452] ss:$2 sm:$0xff]
      %s454 = scalar_lea.vmem %s411, 121
      %v455 = vld [vmem:[%s454] ss:$2 sm:$0xff]
      %s456 = scalar_lea.vmem %s411, 137
      %v457 = vld [vmem:[%s456] ss:$2 sm:$0xff]
      %v458 = vpack.c.bf16 %v445, %v443
      %v459 = vpack.c.bf16 %v449, %v447
      %v460 = vpack.c.bf16 %v453, %v451
      %v461 = vpack.c.bf16 %v457, %v455
      %s462 = scalar_lea.vmem %s1, 20
      %v463 = vld [vmem:[%s462] sm:$0xf]
      %v464 = vld [vmem:[%s462 + $0x4] sm:$0xf]
      %v465 = vld [vmem:[%s462 + $0x8] sm:$0xf]
      %v466 = vld [vmem:[%s462 + $0xc] sm:$0xf]
      %v467 = vld [vmem:[%s462 + $0x10] sm:$0x1]
      %v473 = vunpack.c.l.b16 %v463
      %v474 = vunpack.c.l.b16 %v464
      %v475 = vunpack.c.l.b16 %v465
      %v476 = vunpack.c.l.b16 %v466
      %v477 = vunpack.c.l.b16 %v467
      %v478 = vpack.c.b16 %v474, %v473
      %v479 = vpack.c.b16 %v476, %v475
      %v480 = vpack.c.b16 %v477, %v477
      %vm483 = vcmask 277504
      %v485 = vsel %vm483, %v458, 0
      %v488 = vsel %vm483, %v459, 0
      %v491 = vsel %vm483, %v460, 0
      %v494 = vsel %vm483, %v461, 0
      %vm496 = vcmask 1040384
      %v498 = vsel %vm496, %v480, 0
      %500 = vmatprep.subr.bf16.mxu0 0
      %501 = vmatpush1.bf16.msra.mxu0 %v478
      %502 = vmatprep.subr.bf16.mxu0 0
      %503 = vmatpush1.bf16.msra.mxu0 %v479
      %504 = vmatprep.subr.bf16.mxu0 0
      %505 = vmatpush1.bf16.msra.mxu0 %v498
      %506 = vmatprep.subr.bf16.mxu0 0
      %507 = vmatpush1.bf16.msra.mxu0 0
      %508 = vmatprep.subr.bf16.mxu0 0
      %509 = vmatpush1.bf16.msra.mxu0 0
      %510 = vmatprep.subr.bf16.mxu0 0
      %511 = vmatpush1.bf16.msra.mxu0 0
      %512 = vmatprep.subr.bf16.mxu0 0
      %513 = vmatpush1.bf16.msra.mxu0 0
      %514 = vmatprep.subr.bf16.mxu0 0
      %515 = vmatpush1.bf16.msra.mxu0 0
      %516 = vmatprep.subr.bf16.mxu0 0
      %517 = vmatpush1.bf16.msra.mxu0 0
      %518 = vmatprep.subr.bf16.mxu0 0
      %519 = vmatpush1.bf16.msra.mxu0 0
      %520 = vmatprep.subr.bf16.mxu0 0
      %521 = vmatpush1.bf16.msra.mxu0 0
      %522 = vmatprep.subr.bf16.mxu0 0
      %523 = vmatpush1.bf16.msra.mxu0 0
      %524 = vmatprep.subr.bf16.mxu0 0
      %525 = vmatpush1.bf16.msra.mxu0 0
      %526 = vmatprep.subr.bf16.mxu0 0
      %527 = vmatpush1.bf16.msra.mxu0 0
      %528 = vmatprep.subr.bf16.mxu0 0
      %529 = vmatpush1.bf16.msra.mxu0 0
      %530 = vmatprep.subr.bf16.mxu0 0
      %531 = vmatpush1.bf16.msra.mxu0 0
      %532 = vmatprep.mubr.bf16.mxu0 0
      %533 = vmatmul.mubr.bf16.gmra.mrb[0].mxu0 %v485
      %v534 = vpop.f32.mrb[0].mxu0
      %v535 = vadd.f32 0.0, %v534
      %v536 = vpop.f32.mrb[0].mxu0
      %v537 = vpop.f32.mrb[0].mxu0
      %v538 = vadd.f32 0.0, %v537
      %v539 = vpop.f32.mrb[0].mxu0
      %540 = vmatprep.mubr.bf16.mxu0 0
      %541 = vmatmul.mubr.bf16.gmra.mrb[0].mxu0 %v488
      %v542 = vpop.f32.mrb[0].mxu0
      %v543 = vadd.f32 0.0, %v542
      %v544 = vpop.f32.mrb[0].mxu0
      %v545 = vpop.f32.mrb[0].mxu0
      %v546 = vadd.f32 0.0, %v545
      %v547 = vpop.f32.mrb[0].mxu0
      %548 = vmatprep.mubr.bf16.mxu0 0
      %549 = vmatmul.mubr.bf16.gmra.mrb[0].mxu0 %v491
      %v550 = vpop.f32.mrb[0].mxu0
      %v551 = vadd.f32 0.0, %v550
      %v552 = vpop.f32.mrb[0].mxu0
      %v553 = vpop.f32.mrb[0].mxu0
      %v554 = vadd.f32 0.0, %v553
      %v555 = vpop.f32.mrb[0].mxu0
      %556 = vmatprep.mubr.bf16.mxu0 0
      %557 = vmatmul.mubr.bf16.gmra.mrb[0].mxu0 %v494
      %v558 = vpop.f32.mrb[0].mxu0
      %v559 = vadd.f32 0.0, %v558
      %v560 = vpop.f32.mrb[0].mxu0
      %v561 = vpop.f32.mrb[0].mxu0
      %v562 = vadd.f32 0.0, %v561
      %v563 = vpop.f32.mrb[0].mxu0
      %564 = vdwg.mxu0
      %v570 = vunpack.c.l.b16 %v437
      %v571 = vunpack.c.l.b16 %v438
      %v572 = vunpack.c.l.b16 %v439
      %v573 = vunpack.c.l.b16 %v440
      %v574 = vunpack.c.l.b16 %v441
      %v575 = vpack.c.b16 %v571, %v570
      %v576 = vpack.c.b16 %v573, %v572
      %v577 = vpack.c.b16 %v574, %v574
      %v581 = vsel %vm483, %v433, 0
      %v584 = vsel %vm483, %v434, 0
      %v587 = vsel %vm483, %v435, 0
      %v590 = vsel %vm483, %v436, 0
      %v593 = vsel %vm496, %v577, 0
      %595 = vmatprep.subr.bf16.mxu0 0
      %596 = vmatpush1.bf16.msra.mxu0 %v575
      %597 = vmatprep.subr.bf16.mxu0 0
      %598 = vmatpush1.bf16.msra.mxu0 %v576
      %599 = vmatprep.subr.bf16.mxu0 0
      %600 = vmatpush1.bf16.msra.mxu0 %v593
      %601 = vmatprep.subr.bf16.mxu0 0
      %602 = vmatpush1.bf16.msra.mxu0 0
      %603 = vmatprep.subr.bf16.mxu0 0
      %604 = vmatpush1.bf16.msra.mxu0 0
      %605 = vmatprep.subr.bf16.mxu0 0
      %606 = vmatpush1.bf16.msra.mxu0 0
      %607 = vmatprep.subr.bf16.mxu0 0
      %608 = vmatpush1.bf16.msra.mxu0 0
      %609 = vmatprep.subr.bf16.mxu0 0
      %610 = vmatpush1.bf16.msra.mxu0 0
      %611 = vmatprep.subr.bf16.mxu0 0
      %612 = vmatpush1.bf16.msra.mxu0 0
      %613 = vmatprep.subr.bf16.mxu0 0
      %614 = vmatpush1.bf16.msra.mxu0 0
      %615 = vmatprep.subr.bf16.mxu0 0
      %616 = vmatpush1.bf16.msra.mxu0 0
      %617 = vmatprep.subr.bf16.mxu0 0
      %618 = vmatpush1.bf16.msra.mxu0 0
      %619 = vmatprep.subr.bf16.mxu0 0
      %620 = vmatpush1.bf16.msra.mxu0 0
      %621 = vmatprep.subr.bf16.mxu0 0
      %622 = vmatpush1.bf16.msra.mxu0 0
      %623 = vmatprep.subr.bf16.mxu0 0
      %624 = vmatpush1.bf16.msra.mxu0 0
      %625 = vmatprep.subr.bf16.mxu0 0
      %626 = vmatpush1.bf16.msra.mxu0 0
      %627 = vmatprep.mubr.bf16.mxu0 0
      %628 = vmatmul.mubr.bf16.gmra.mrb[0].mxu0 %v581
      %v629 = vpop.f32.mrb[0].mxu0
      %v630 = vadd.f32 %v535, %v629
      %v631 = vpop.f32.mrb[0].mxu0
      %v632 = vpop.f32.mrb[0].mxu0
      %v633 = vadd.f32 %v538, %v632
      %v634 = vpop.f32.mrb[0].mxu0
      %635 = vmatprep.mubr.bf16.mxu0 0
      %636 = vmatmul.mubr.bf16.gmra.mrb[0].mxu0 %v584
      %v637 = vpop.f32.mrb[0].mxu0
      %v638 = vadd.f32 %v543, %v637
      %v639 = vpop.f32.mrb[0].mxu0
      %v640 = vpop.f32.mrb[0].mxu0
      %v641 = vadd.f32 %v546, %v640
      %v642 = vpop.f32.mrb[0].mxu0
      %643 = vmatprep.mubr.bf16.mxu0 0
      %644 = vmatmul.mubr.bf16.gmra.mrb[0].mxu0 %v587
      %v645 = vpop.f32.mrb[0].mxu0
      %v646 = vadd.f32 %v551, %v645
      %v647 = vpop.f32.mrb[0].mxu0
      %v648 = vpop.f32.mrb[0].mxu0
      %v649 = vadd.f32 %v554, %v648
      %v650 = vpop.f32.mrb[0].mxu0
      %651 = vmatprep.mubr.bf16.mxu0 0
      %652 = vmatmul.mubr.bf16.gmra.mrb[0].mxu0 %v590
      %v653 = vpop.f32.mrb[0].mxu0
      %v654 = vadd.f32 %v559, %v653
      %v655 = vpop.f32.mrb[0].mxu0
      %v656 = vpop.f32.mrb[0].mxu0
      %v657 = vadd.f32 %v562, %v656
      %v658 = vpop.f32.mrb[0].mxu0
      %659 = vdwg.mxu0
      %s660 = scalar_lea.vmem %s411, 2
      %v661 = vld [vmem:[%s660] ss:$2 sm:$0xff]
      %s662 = scalar_lea.vmem %s411, 18
      %v663 = vld [vmem:[%s662] ss:$2 sm:$0xff]
      %s664 = scalar_lea.vmem %s411, 42
      %v665 = vld [vmem:[%s664] ss:$2 sm:$0xff]
      %s666 = scalar_lea.vmem %s411, 58
      %v667 = vld [vmem:[%s666] ss:$2 sm:$0xff]
      %s668 = scalar_lea.vmem %s411, 82
      %v669 = vld [vmem:[%s668] ss:$2 sm:$0xff]
      %s670 = scalar_lea.vmem %s411, 98
      %v671 = vld [vmem:[%s670] ss:$2 sm:$0xff]
      %s672 = scalar_lea.vmem %s411, 122
      %v673 = vld [vmem:[%s672] ss:$2 sm:$0xff]
      %s674 = scalar_lea.vmem %s411, 138
      %v675 = vld [vmem:[%s674] ss:$2 sm:$0xff]
      %v676 = vpack.c.bf16 %v663, %v661
      %v677 = vpack.c.bf16 %v667, %v665
      %v678 = vpack.c.bf16 %v671, %v669
      %v679 = vpack.c.bf16 %v675, %v673
      %s680 = scalar_lea.vmem %s1, 40
      %v681 = vld [vmem:[%s680] sm:$0xf]
      %v682 = vld [vmem:[%s680 + $0x4] sm:$0xf]
      %v683 = vld [vmem:[%s680 + $0x8] sm:$0xf]
      %v684 = vld [vmem:[%s680 + $0xc] sm:$0xf]
      %v685 = vld [vmem:[%s680 + $0x10] sm:$0x1]
      %v691 = vunpack.c.l.b16 %v681
      %v692 = vunpack.c.l.b16 %v682
      %v693 = vunpack.c.l.b16 %v683
      %v694 = vunpack.c.l.b16 %v684
      %v695 = vunpack.c.l.b16 %v685
      %v696 = vpack.c.b16 %v692, %v691
      %v697 = vpack.c.b16 %v694, %v693
      %v698 = vpack.c.b16 %v695, %v695
      %v702 = vsel %vm483, %v676, 0
      %v705 = vsel %vm483, %v677, 0
      %v708 = vsel %vm483, %v678, 0
      %v711 = vsel %vm483, %v679, 0
      %v714 = vsel %vm496, %v698, 0
      %716 = vmatprep.subr.bf16.mxu0 0
      %717 = vmatpush1.bf16.msra.mxu0 %v696
      %718 = vmatprep.subr.bf16.mxu0 0
      %719 = vmatpush1.bf16.msra.mxu0 %v697
      %720 = vmatprep.subr.bf16.mxu0 0
      %721 = vmatpush1.bf16.msra.mxu0 %v714
      %722 = vmatprep.subr.bf16.mxu0 0
      %723 = vmatpush1.bf16.msra.mxu0 0
      %724 = vmatprep.subr.bf16.mxu0 0
      %725 = vmatpush1.bf16.msra.mxu0 0
      %726 = vmatprep.subr.bf16.mxu0 0
      %727 = vmatpush1.bf16.msra.mxu0 0
      %728 = vmatprep.subr.bf16.mxu0 0
      %729 = vmatpush1.bf16.msra.mxu0 0
      %730 = vmatprep.subr.bf16.mxu0 0
      %731 = vmatpush1.bf16.msra.mxu0 0
      %732 = vmatprep.subr.bf16.mxu0 0
      %733 = vmatpush1.bf16.msra.mxu0 0
      %734 = vmatprep.subr.bf16.mxu0 0
      %735 = vmatpush1.bf16.msra.mxu0 0
      %736 = vmatprep.subr.bf16.mxu0 0
      %737 = vmatpush1.bf16.msra.mxu0 0
      %738 = vmatprep.subr.bf16.mxu0 0
      %739 = vmatpush1.bf16.msra.mxu0 0
      %740 = vmatprep.subr.bf16.mxu0 0
      %741 = vmatpush1.bf16.msra.mxu0 0
      %742 = vmatprep.subr.bf16.mxu0 0
      %743 = vmatpush1.bf16.msra.mxu0 0
      %744 = vmatprep.subr.bf16.mxu0 0
      %745 = vmatpush1.bf16.msra.mxu0 0
      %746 = vmatprep.subr.bf16.mxu0 0
      %747 = vmatpush1.bf16.msra.mxu0 0
      %748 = vmatprep.mubr.bf16.mxu0 0
      %749 = vmatmul.mubr.bf16.gmra.mrb[0].mxu0 %v702
      %v750 = vpop.f32.mrb[0].mxu0
      %v751 = vadd.f32 0.0, %v750
      %v752 = vpop.f32.mrb[0].mxu0
      %v753 = vpop.f32.mrb[0].mxu0
      %v754 = vadd.f32 0.0, %v753
      %v755 = vpop.f32.mrb[0].mxu0
      %756 = vmatprep.mubr.bf16.mxu0 0
      %757 = vmatmul.mubr.bf16.gmra.mrb[0].mxu0 %v705
      %v758 = vpop.f32.mrb[0].mxu0
      %v759 = vadd.f32 0.0, %v758
      %v760 = vpop.f32.mrb[0].mxu0
      %v761 = vpop.f32.mrb[0].mxu0
      %v762 = vadd.f32 0.0, %v761
      %v763 = vpop.f32.mrb[0].mxu0
      %764 = vmatprep.mubr.bf16.mxu0 0
      %765 = vmatmul.mubr.bf16.gmra.mrb[0].mxu0 %v708
      %v766 = vpop.f32.mrb[0].mxu0
      %v767 = vadd.f32 0.0, %v766
      %v768 = vpop.f32.mrb[0].mxu0
      %v769 = vpop.f32.mrb[0].mxu0
      %v770 = vadd.f32 0.0, %v769
      %v771 = vpop.f32.mrb[0].mxu0
      %772 = vmatprep.mubr.bf16.mxu0 0
      %773 = vmatmul.mubr.bf16.gmra.mrb[0].mxu0 %v711
      %v774 = vpop.f32.mrb[0].mxu0
      %v775 = vadd.f32 0.0, %v774
      %v776 = vpop.f32.mrb[0].mxu0
      %v777 = vpop.f32.mrb[0].mxu0
      %v778 = vadd.f32 0.0, %v777
      %v779 = vpop.f32.mrb[0].mxu0
      %780 = vdwg.mxu0
      %v781 = vadd.f32 %v630, %v751
      %v782 = vadd.f32 %v633, %v754
      %v783 = vadd.f32 %v638, %v759
      %v784 = vadd.f32 %v641, %v762
      %v785 = vadd.f32 %v646, %v767
      %v786 = vadd.f32 %v649, %v770
      %v787 = vadd.f32 %v654, %v775
      %v788 = vadd.f32 %v657, %v778
      %s789 = scalar_lea.vmem %s411, 3
      %v790 = vld [vmem:[%s789] ss:$2 sm:$0xff]
      %s791 = scalar_lea.vmem %s411, 19
      %v792 = vld [vmem:[%s791] ss:$2 sm:$0xff]
      %s793 = scalar_lea.vmem %s411, 43
      %v794 = vld [vmem:[%s793] ss:$2 sm:$0xff]
      %s795 = scalar_lea.vmem %s411, 59
      %v796 = vld [vmem:[%s795] ss:$2 sm:$0xff]
      %s797 = scalar_lea.vmem %s411, 83
      %v798 = vld [vmem:[%s797] ss:$2 sm:$0xff]
      %s799 = scalar_lea.vmem %s411, 99
      %v800 = vld [vmem:[%s799] ss:$2 sm:$0xff]
      %s801 = scalar_lea.vmem %s411, 123
      %v802 = vld [vmem:[%s801] ss:$2 sm:$0xff]
      %s803 = scalar_lea.vmem %s411, 139
      %v804 = vld [vmem:[%s803] ss:$2 sm:$0xff]
      %v805 = vpack.c.bf16 %v792, %v790
      %v806 = vpack.c.bf16 %v796, %v794
      %v807 = vpack.c.bf16 %v800, %v798
      %v808 = vpack.c.bf16 %v804, %v802
      %s809 = scalar_lea.vmem %s1, 60
      %v810 = vld [vmem:[%s809] sm:$0xf]
      %v811 = vld [vmem:[%s809 + $0x4] sm:$0xf]
      %v812 = vld [vmem:[%s809 + $0x8] sm:$0xf]
      %v813 = vld [vmem:[%s809 + $0xc] sm:$0xf]
      %v814 = vld [vmem:[%s809 + $0x10] sm:$0x1]
      %v820 = vunpack.c.l.b16 %v810
      %v821 = vunpack.c.l.b16 %v811
      %v822 = vunpack.c.l.b16 %v812
      %v823 = vunpack.c.l.b16 %v813
      %v824 = vunpack.c.l.b16 %v814
      %v825 = vpack.c.b16 %v821, %v820
      %v826 = vpack.c.b16 %v823, %v822
      %v827 = vpack.c.b16 %v824, %v824
      %v831 = vsel %vm483, %v805, 0
      %v834 = vsel %vm483, %v806, 0
      %v837 = vsel %vm483, %v807, 0
      %v840 = vsel %vm483, %v808, 0
      %v843 = vsel %vm496, %v827, 0
      %845 = vmatprep.subr.bf16.mxu0 0
      %846 = vmatpush1.bf16.msra.mxu0 %v825
      %847 = vmatprep.subr.bf16.mxu0 0
      %848 = vmatpush1.bf16.msra.mxu0 %v826
      %849 = vmatprep.subr.bf16.mxu0 0
      %850 = vmatpush1.bf16.msra.mxu0 %v843
      %851 = vmatprep.subr.bf16.mxu0 0
      %852 = vmatpush1.bf16.msra.mxu0 0
      %853 = vmatprep.subr.bf16.mxu0 0
      %854 = vmatpush1.bf16.msra.mxu0 0
      %855 = vmatprep.subr.bf16.mxu0 0
      %856 = vmatpush1.bf16.msra.mxu0 0
      %857 = vmatprep.subr.bf16.mxu0 0
      %858 = vmatpush1.bf16.msra.mxu0 0
      %859 = vmatprep.subr.bf16.mxu0 0
      %860 = vmatpush1.bf16.msra.mxu0 0
      %861 = vmatprep.subr.bf16.mxu0 0
      %862 = vmatpush1.bf16.msra.mxu0 0
      %863 = vmatprep.subr.bf16.mxu0 0
      %864 = vmatpush1.bf16.msra.mxu0 0
      %865 = vmatprep.subr.bf16.mxu0 0
      %866 = vmatpush1.bf16.msra.mxu0 0
      %867 = vmatprep.subr.bf16.mxu0 0
      %868 = vmatpush1.bf16.msra.mxu0 0
      %869 = vmatprep.subr.bf16.mxu0 0
      %870 = vmatpush1.bf16.msra.mxu0 0
      %871 = vmatprep.subr.bf16.mxu0 0
      %872 = vmatpush1.bf16.msra.mxu0 0
      %873 = vmatprep.subr.bf16.mxu0 0
      %874 = vmatpush1.bf16.msra.mxu0 0
      %875 = vmatprep.subr.bf16.mxu0 0
      %876 = vmatpush1.bf16.msra.mxu0 0
      %877 = vmatprep.mubr.bf16.mxu0 0
      %878 = vmatmul.mubr.bf16.gmra.mrb[0].mxu0 %v831
      %v879 = vpop.f32.mrb[0].mxu0
      %v880 = vadd.f32 0.0, %v879
      %v881 = vpop.f32.mrb[0].mxu0
      %v882 = vpop.f32.mrb[0].mxu0
      %v883 = vadd.f32 0.0, %v882
      %v884 = vpop.f32.mrb[0].mxu0
      %885 = vmatprep.mubr.bf16.mxu0 0
      %886 = vmatmul.mubr.bf16.gmra.mrb[0].mxu0 %v834
      %v887 = vpop.f32.mrb[0].mxu0
      %v888 = vadd.f32 0.0, %v887
      %v889 = vpop.f32.mrb[0].mxu0
      %v890 = vpop.f32.mrb[0].mxu0
      %v891 = vadd.f32 0.0, %v890
      %v892 = vpop.f32.mrb[0].mxu0
      %893 = vmatprep.mubr.bf16.mxu0 0
      %894 = vmatmul.mubr.bf16.gmra.mrb[0].mxu0 %v837
      %v895 = vpop.f32.mrb[0].mxu0
      %v896 = vadd.f32 0.0, %v895
      %v897 = vpop.f32.mrb[0].mxu0
      %v898 = vpop.f32.mrb[0].mxu0
      %v899 = vadd.f32 0.0, %v898
      %v900 = vpop.f32.mrb[0].mxu0
      %901 = vmatprep.mubr.bf16.mxu0 0
      %902 = vmatmul.mubr.bf16.gmra.mrb[0].mxu0 %v840
      %v903 = vpop.f32.mrb[0].mxu0
      %v904 = vadd.f32 0.0, %v903
      %v905 = vpop.f32.mrb[0].mxu0
      %v906 = vpop.f32.mrb[0].mxu0
      %v907 = vadd.f32 0.0, %v906
      %v908 = vpop.f32.mrb[0].mxu0
      %909 = vdwg.mxu0
      %v910 = vadd.f32 %v781, %v880
      %v911 = vadd.f32 %v782, %v883
      %v912 = vadd.f32 %v783, %v888
      %v913 = vadd.f32 %v784, %v891
      %v914 = vadd.f32 %v785, %v896
      %v915 = vadd.f32 %v786, %v899
      %v916 = vadd.f32 %v787, %v904
      %v917 = vadd.f32 %v788, %v907
      %v918 = vadd.f32 %v910, %v911
      %v919 = vrot.slane %v918, 4
      %v920 = vadd.f32 %v918, %v919
      %v921 = vrot.slane %v920, 2
      %v922 = vadd.f32 %v920, %v921
      %v923 = vrot.slane %v922, 1
      %v924 = vadd.f32 %v922, %v923
      %v925 = vadd.f32 %v912, %v913
      %v926 = vrot.slane %v925, 4
      %v927 = vadd.f32 %v925, %v926
      %v928 = vrot.slane %v927, 2
      %v929 = vadd.f32 %v927, %v928
      %v930 = vrot.slane %v929, 1
      %v931 = vadd.f32 %v929, %v930
      %v932 = vadd.f32 %v914, %v915
      %v933 = vrot.slane %v932, 4
      %v934 = vadd.f32 %v932, %v933
      %v935 = vrot.slane %v934, 2
      %v936 = vadd.f32 %v934, %v935
      %v937 = vrot.slane %v936, 1
      %v938 = vadd.f32 %v936, %v937
      %v939 = vadd.f32 %v916, %v917
      %v940 = vrot.slane %v939, 4
      %v941 = vadd.f32 %v939, %v940
      %v942 = vrot.slane %v941, 2
      %v943 = vadd.f32 %v941, %v942
      %v944 = vrot.slane %v943, 1
      %v945 = vadd.f32 %v943, %v944
      %v946 = vmul.f32 %v910, %v910
      %v947 = vmul.f32 %v911, %v911
      %v948 = vmul.f32 %v912, %v912
      %v949 = vmul.f32 %v913, %v913
      %v950 = vmul.f32 %v914, %v914
      %v951 = vmul.f32 %v915, %v915
      %v952 = vmul.f32 %v916, %v916
      %v953 = vmul.f32 %v917, %v917
      %v954 = vadd.f32 %v946, %v947
      %v955 = vrot.slane %v954, 4
      %v956 = vadd.f32 %v954, %v955
      %v957 = vrot.slane %v956, 2
      %v958 = vadd.f32 %v956, %v957
      %v959 = vrot.slane %v958, 1
      %v960 = vadd.f32 %v958, %v959
      %v961 = vadd.f32 %v948, %v949
      %v962 = vrot.slane %v961, 4
      %v963 = vadd.f32 %v961, %v962
      %v964 = vrot.slane %v963, 2
      %v965 = vadd.f32 %v963, %v964
      %v966 = vrot.slane %v965, 1
      %v967 = vadd.f32 %v965, %v966
      %v968 = vadd.f32 %v950, %v951
      %v969 = vrot.slane %v968, 4
      %v970 = vadd.f32 %v968, %v969
      %v971 = vrot.slane %v970, 2
      %v972 = vadd.f32 %v970, %v971
      %v973 = vrot.slane %v972, 1
      %v974 = vadd.f32 %v972, %v973
      %v975 = vadd.f32 %v952, %v953
      %v976 = vrot.slane %v975, 4
      %v977 = vadd.f32 %v975, %v976
      %v978 = vrot.slane %v977, 2
      %v979 = vadd.f32 %v977, %v978
      %v980 = vrot.slane %v979, 1
      %v981 = vadd.f32 %v979, %v980
      %986 = vrot.lane.b32.xlu0 %v924, 112
      %v987 = vpop.permute.xlu0 %986
      %988 = vrot.lane.b32.xlu0 %v931, 112
      %v989 = vpop.permute.xlu0 %988
      %990 = vrot.lane.b32.xlu0 %v938, 112
      %v991 = vpop.permute.xlu0 %990
      %992 = vrot.lane.b32.xlu0 %v945, 112
      %v993 = vpop.permute.xlu0 %992
      %v998 = vadd.f32 %v924, %v987
      %v999 = vadd.f32 %v931, %v989
      %v1000 = vadd.f32 %v938, %v991
      %v1001 = vadd.f32 %v945, %v993
      %1006 = vrot.lane.b32.xlu0 %v960, 112
      %v1007 = vpop.permute.xlu0 %1006
      %1008 = vrot.lane.b32.xlu0 %v967, 112
      %v1009 = vpop.permute.xlu0 %1008
      %1010 = vrot.lane.b32.xlu0 %v974, 112
      %v1011 = vpop.permute.xlu0 %1010
      %1012 = vrot.lane.b32.xlu0 %v981, 112
      %v1013 = vpop.permute.xlu0 %1012
      %v1018 = vadd.f32 %v960, %v1007
      %v1019 = vadd.f32 %v967, %v1009
      %v1020 = vadd.f32 %v974, %v1011
      %v1021 = vadd.f32 %v981, %v1013
      %1022 = vrot.lane.b32.xlu0 %v924, 96
      %v1023 = vpop.permute.xlu0 %1022
      %1024 = vrot.lane.b32.xlu0 %v931, 96
      %v1025 = vpop.permute.xlu0 %1024
      %1026 = vrot.lane.b32.xlu0 %v938, 96
      %v1027 = vpop.permute.xlu0 %1026
      %1028 = vrot.lane.b32.xlu0 %v945, 96
      %v1029 = vpop.permute.xlu0 %1028
      %v1034 = vadd.f32 %v998, %v1023
      %v1035 = vadd.f32 %v999, %v1025
      %v1036 = vadd.f32 %v1000, %v1027
      %v1037 = vadd.f32 %v1001, %v1029
      %1038 = vrot.lane.b32.xlu0 %v960, 96
      %v1039 = vpop.permute.xlu0 %1038
      %1040 = vrot.lane.b32.xlu0 %v967, 96
      %v1041 = vpop.permute.xlu0 %1040
      %1042 = vrot.lane.b32.xlu0 %v974, 96
      %v1043 = vpop.permute.xlu0 %1042
      %1044 = vrot.lane.b32.xlu0 %v981, 96
      %v1045 = vpop.permute.xlu0 %1044
      %v1050 = vadd.f32 %v1018, %v1039
      %v1051 = vadd.f32 %v1019, %v1041
      %v1052 = vadd.f32 %v1020, %v1043
      %v1053 = vadd.f32 %v1021, %v1045
      %1054 = vrot.lane.b32.xlu0 %v924, 80
      %v1055 = vpop.permute.xlu0 %1054
      %1056 = vrot.lane.b32.xlu0 %v931, 80
      %v1057 = vpop.permute.xlu0 %1056
      %1058 = vrot.lane.b32.xlu0 %v938, 80
      %v1059 = vpop.permute.xlu0 %1058
      %1060 = vrot.lane.b32.xlu0 %v945, 80
      %v1061 = vpop.permute.xlu0 %1060
      %v1066 = vadd.f32 %v1034, %v1055
      %v1067 = vadd.f32 %v1035, %v1057
      %v1068 = vadd.f32 %v1036, %v1059
      %v1069 = vadd.f32 %v1037, %v1061
      %1070 = vrot.lane.b32.xlu0 %v960, 80
      %v1071 = vpop.permute.xlu0 %1070
      %1072 = vrot.lane.b32.xlu0 %v967, 80
      %v1073 = vpop.permute.xlu0 %1072
      %1074 = vrot.lane.b32.xlu0 %v974, 80
      %v1075 = vpop.permute.xlu0 %1074
      %1076 = vrot.lane.b32.xlu0 %v981, 80
      %v1077 = vpop.permute.xlu0 %1076
      %v1082 = vadd.f32 %v1050, %v1071
      %v1083 = vadd.f32 %v1051, %v1073
      %v1084 = vadd.f32 %v1052, %v1075
      %v1085 = vadd.f32 %v1053, %v1077
      %1086 = vrot.lane.b32.xlu0 %v924, 64
      %v1087 = vpop.permute.xlu0 %1086
      %1088 = vrot.lane.b32.xlu0 %v931, 64
      %v1089 = vpop.permute.xlu0 %1088
      %1090 = vrot.lane.b32.xlu0 %v938, 64
      %v1091 = vpop.permute.xlu0 %1090
      %1092 = vrot.lane.b32.xlu0 %v945, 64
      %v1093 = vpop.permute.xlu0 %1092
      %v1098 = vadd.f32 %v1066, %v1087
      %v1099 = vadd.f32 %v1067, %v1089
      %v1100 = vadd.f32 %v1068, %v1091
      %v1101 = vadd.f32 %v1069, %v1093
      %1102 = vrot.lane.b32.xlu0 %v960, 64
      %v1103 = vpop.permute.xlu0 %1102
      %1104 = vrot.lane.b32.xlu0 %v967, 64
      %v1105 = vpop.permute.xlu0 %1104
      %1106 = vrot.lane.b32.xlu0 %v974, 64
      %v1107 = vpop.permute.xlu0 %1106
      %1108 = vrot.lane.b32.xlu0 %v981, 64
      %v1109 = vpop.permute.xlu0 %1108
      %v1114 = vadd.f32 %v1082, %v1103
      %v1115 = vadd.f32 %v1083, %v1105
      %v1116 = vadd.f32 %v1084, %v1107
      %v1117 = vadd.f32 %v1085, %v1109
      %1118 = vrot.lane.b32.xlu0 %v924, 48
      %v1119 = vpop.permute.xlu0 %1118
      %1120 = vrot.lane.b32.xlu0 %v931, 48
      %v1121 = vpop.permute.xlu0 %1120
      %1122 = vrot.lane.b32.xlu0 %v938, 48
      %v1123 = vpop.permute.xlu0 %1122
      %1124 = vrot.lane.b32.xlu0 %v945, 48
      %v1125 = vpop.permute.xlu0 %1124
      %v1130 = vadd.f32 %v1098, %v1119
      %v1131 = vadd.f32 %v1099, %v1121
      %v1132 = vadd.f32 %v1100, %v1123
      %v1133 = vadd.f32 %v1101, %v1125
      %1134 = vrot.lane.b32.xlu0 %v960, 48
      %v1135 = vpop.permute.xlu0 %1134
      %1136 = vrot.lane.b32.xlu0 %v967, 48
      %v1137 = vpop.permute.xlu0 %1136
      %1138 = vrot.lane.b32.xlu0 %v974, 48
      %v1139 = vpop.permute.xlu0 %1138
      %1140 = vrot.lane.b32.xlu0 %v981, 48
      %v1141 = vpop.permute.xlu0 %1140
      %v1146 = vadd.f32 %v1114, %v1135
      %v1147 = vadd.f32 %v1115, %v1137
      %v1148 = vadd.f32 %v1116, %v1139
      %v1149 = vadd.f32 %v1117, %v1141
      %1150 = vrot.lane.b32.xlu0 %v924, 32
      %v1151 = vpop.permute.xlu0 %1150
      %1152 = vrot.lane.b32.xlu0 %v931, 32
      %v1153 = vpop.permute.xlu0 %1152
      %1154 = vrot.lane.b32.xlu0 %v938, 32
      %v1155 = vpop.permute.xlu0 %1154
      %1156 = vrot.lane.b32.xlu0 %v945, 32
      %v1157 = vpop.permute.xlu0 %1156
      %v1162 = vadd.f32 %v1130, %v1151
      %v1163 = vadd.f32 %v1131, %v1153
      %v1164 = vadd.f32 %v1132, %v1155
      %v1165 = vadd.f32 %v1133, %v1157
      %1166 = vrot.lane.b32.xlu0 %v960, 32
      %v1167 = vpop.permute.xlu0 %1166
      %1168 = vrot.lane.b32.xlu0 %v967, 32
      %v1169 = vpop.permute.xlu0 %1168
      %1170 = vrot.lane.b32.xlu0 %v974, 32
      %v1171 = vpop.permute.xlu0 %1170
      %1172 = vrot.lane.b32.xlu0 %v981, 32
      %v1173 = vpop.permute.xlu0 %1172
      %v1178 = vadd.f32 %v1146, %v1167
      %v1179 = vadd.f32 %v1147, %v1169
      %v1180 = vadd.f32 %v1148, %v1171
      %v1181 = vadd.f32 %v1149, %v1173
      %1182 = vrot.lane.b32.xlu0 %v924, 16
      %v1183 = vpop.permute.xlu0 %1182
      %1184 = vrot.lane.b32.xlu0 %v931, 16
      %v1185 = vpop.permute.xlu0 %1184
      %1186 = vrot.lane.b32.xlu0 %v938, 16
      %v1187 = vpop.permute.xlu0 %1186
      %1188 = vrot.lane.b32.xlu0 %v945, 16
      %v1189 = vpop.permute.xlu0 %1188
      %v1194 = vadd.f32 %v1162, %v1183
      %v1195 = vadd.f32 %v1163, %v1185
      %v1196 = vadd.f32 %v1164, %v1187
      %v1197 = vadd.f32 %v1165, %v1189
      %1198 = vrot.lane.b32.xlu0 %v960, 16
      %v1199 = vpop.permute.xlu0 %1198
      %1200 = vrot.lane.b32.xlu0 %v967, 16
      %v1201 = vpop.permute.xlu0 %1200
      %1202 = vrot.lane.b32.xlu0 %v974, 16
      %v1203 = vpop.permute.xlu0 %1202
      %1204 = vrot.lane.b32.xlu0 %v981, 16
      %v1205 = vpop.permute.xlu0 %1204
      %v1210 = vadd.f32 %v1178, %v1199
      %v1211 = vadd.f32 %v1179, %v1201
      %v1212 = vadd.f32 %v1180, %v1203
      %v1213 = vadd.f32 %v1181, %v1205
      %v1214 = vmul.f32 %v1194, 0.0078125
      %v1215 = vmul.f32 %v1195, 0.0078125
      %v1216 = vmul.f32 %v1196, 0.0078125
      %v1217 = vmul.f32 %v1197, 0.0078125
      %v1218 = vmul.f32 %v1210, 0.0078125
      %v1219 = vmul.f32 %v1211, 0.0078125
      %v1220 = vmul.f32 %v1212, 0.0078125
      %v1221 = vmul.f32 %v1213, 0.0078125
      %v1222 = vmul.f32 %v1214, %v1214
      %v1223 = vmul.f32 %v1215, %v1215
      %v1224 = vmul.f32 %v1216, %v1216
      %v1225 = vmul.f32 %v1217, %v1217
      %v1226 = vsub.f32 %v1218, %v1222
      %v1227 = vsub.f32 %v1219, %v1223
      %v1228 = vsub.f32 %v1220, %v1224
      %v1229 = vsub.f32 %v1221, %v1225
      %v1230 = vmax.f32 %v1226, 0.0
      %v1231 = vmax.f32 %v1227, 0.0
      %v1232 = vmax.f32 %v1228, 0.0
      %v1233 = vmax.f32 %v1229, 0.0
      %v1234 = vadd.f32 %v1230, 1e-05
      %v1235 = vadd.f32 %v1231, 1e-05
      %v1236 = vadd.f32 %v1232, 1e-05
      %v1237 = vadd.f32 %v1233, 1e-05
      %v1238 = vrsqrt.pop %v1234
      %v1239 = vrsqrt.pop %v1235
      %v1240 = vrsqrt.pop %v1236
      %v1241 = vrsqrt.pop %v1237
      %v1242 = vld [vmem:[%s5] sm:$0x7]
      %v1247 = vrot.slane %v1239, 7
      %vm1248 = vcmask 1041409
      %v1249 = vsel %vm1248, %v1247, %v1238
      %v1250 = vrot.slane %v1240, 6
      %vm1251 = vcmask 1042434
      %v1252 = vsel %vm1251, %v1250, %v1249
      %v1253 = vrot.slane %v1241, 5
      %vm1254 = vcmask 1043459
      %v1255 = vsel %vm1254, %v1253, %v1252
      %1257 = vrot.lane.b32.xlu0 %v1255, 16
      %v1258 = vpop.permute.xlu0 %1257
      %1260 = vrot.lane.b32.xlu0 %v1255, 32
      %v1261 = vpop.permute.xlu0 %1260
      %1263 = vrot.lane.b32.xlu0 %v1255, 48
      %v1264 = vpop.permute.xlu0 %1263
      %1266 = vrot.lane.b32.xlu0 %v1255, 64
      %v1267 = vpop.permute.xlu0 %1266
      %1269 = vrot.lane.b32.xlu0 %v1255, 80
      %v1270 = vpop.permute.xlu0 %1269
      %1272 = vrot.lane.b32.xlu0 %v1255, 96
      %v1273 = vpop.permute.xlu0 %1272
      %1275 = vrot.lane.b32.xlu0 %v1255, 112
      %v1276 = vpop.permute.xlu0 %1275
      %vm1278 = vcmask 130048
      %v1279 = vsel %vm1278, %v1255, %v1258
      %vm1280 = vcmask 261120
      %v1281 = vsel %vm1280, %v1279, %v1261
      %vm1282 = vcmask 392192
      %v1283 = vsel %vm1282, %v1281, %v1264
      %vm1284 = vcmask 523264
      %v1285 = vsel %vm1284, %v1283, %v1267
      %vm1286 = vcmask 654336
      %v1287 = vsel %vm1286, %v1285, %v1270
      %vm1288 = vcmask 785408
      %v1289 = vsel %vm1288, %v1287, %v1273
      %vm1290 = vcmask 916480
      %v1291 = vsel %vm1290, %v1289, %v1276
      %v1294 = vunpack.c.l.s4 1966171168
      %v1295 = vunpack.c.0.s8 %v1294
      %v1296 = vlaneseq
      %v1297 = vshrl.u32 %v1296, 7
      %v1298 = vsub.s32 %v1295, %v1297
      %v1299 = vrot.slane %v1291, %v1298
      %v1300 = vcombine.high %v1299, %v1299
      %v1302 = vunpack.c.l.s4 1966171168
      %v1303 = vunpack.c.0.s8 %v1302
      %v1304 = vlaneseq
      %v1305 = vshrl.u32 %v1304, 7
      %v1306 = vsub.s32 %v1303, %v1305
      %v1307 = vrot.slane %v1299, %v1306
      %v1309 = vunpack.c.l.s4 1966171168
      %v1310 = vunpack.c.0.s8 %v1309
      %v1311 = vlaneseq
      %v1312 = vshrl.u32 %v1311, 7
      %v1313 = vsub.s32 %v1310, %v1312
      %v1314 = vrot.slane %v1300, %v1313
      %v1315 = vcombine.high %v1307, %v1307
      %v1316 = vcombine.high %v1314, %v1314
      %v1321 = vmul.f32 %v1307, %v1242
      %v1322 = vmul.f32 %v1314, %v1242
      %v1323 = vmul.f32 %v1315, %v1242
      %v1324 = vmul.f32 %v1316, %v1242
      %v1325 = vmul.f32 %v1214, %v1238
      %v1326 = vmul.f32 %v1215, %v1239
      %v1327 = vmul.f32 %v1216, %v1240
      %v1328 = vmul.f32 %v1217, %v1241
      %v1333 = vrot.slane %v1326, 7
      %v1334 = vsel %vm1248, %v1333, %v1325
      %v1335 = vrot.slane %v1327, 6
      %v1336 = vsel %vm1251, %v1335, %v1334
      %v1337 = vrot.slane %v1328, 5
      %v1338 = vsel %vm1254, %v1337, %v1336
      %1340 = vrot.lane.b32.xlu0 %v1338, 16
      %v1341 = vpop.permute.xlu0 %1340
      %1343 = vrot.lane.b32.xlu0 %v1338, 32
      %v1344 = vpop.permute.xlu0 %1343
      %1346 = vrot.lane.b32.xlu0 %v1338, 48
      %v1347 = vpop.permute.xlu0 %1346
      %1349 = vrot.lane.b32.xlu0 %v1338, 64
      %v1350 = vpop.permute.xlu0 %1349
      %1352 = vrot.lane.b32.xlu0 %v1338, 80
      %v1353 = vpop.permute.xlu0 %1352
      %1355 = vrot.lane.b32.xlu0 %v1338, 96
      %v1356 = vpop.permute.xlu0 %1355
      %1358 = vrot.lane.b32.xlu0 %v1338, 112
      %v1359 = vpop.permute.xlu0 %1358
      %v1361 = vsel %vm1278, %v1338, %v1341
      %v1362 = vsel %vm1280, %v1361, %v1344
      %v1363 = vsel %vm1282, %v1362, %v1347
      %v1364 = vsel %vm1284, %v1363, %v1350
      %v1365 = vsel %vm1286, %v1364, %v1353
      %v1366 = vsel %vm1288, %v1365, %v1356
      %v1367 = vsel %vm1290, %v1366, %v1359
      %v1370 = vunpack.c.l.s4 1966171168
      %v1371 = vunpack.c.0.s8 %v1370
      %v1372 = vlaneseq
      %v1373 = vshrl.u32 %v1372, 7
      %v1374 = vsub.s32 %v1371, %v1373
      %v1375 = vrot.slane %v1367, %v1374
      %v1376 = vcombine.high %v1375, %v1375
      %v1378 = vunpack.c.l.s4 1966171168
      %v1379 = vunpack.c.0.s8 %v1378
      %v1380 = vlaneseq
      %v1381 = vshrl.u32 %v1380, 7
      %v1382 = vsub.s32 %v1379, %v1381
      %v1383 = vrot.slane %v1375, %v1382
      %v1385 = vunpack.c.l.s4 1966171168
      %v1386 = vunpack.c.0.s8 %v1385
      %v1387 = vlaneseq
      %v1388 = vshrl.u32 %v1387, 7
      %v1389 = vsub.s32 %v1386, %v1388
      %v1390 = vrot.slane %v1376, %v1389
      %v1391 = vcombine.high %v1383, %v1383
      %v1392 = vcombine.high %v1390, %v1390
      %v1397 = vmul.f32 %v1383, %v1242
      %v1398 = vmul.f32 %v1390, %v1242
      %v1399 = vmul.f32 %v1391, %v1242
      %v1400 = vmul.f32 %v1392, %v1242
      %v1405 = vlaneseq
      %v1406 = vshrl.u32 %v1405, 7
      %v1407 = vsub.s32 0, %v1406
      %v1408 = vrot.slane %v1397, %v1407
      %v1409 = vlaneseq
      %v1410 = vshrl.u32 %v1409, 7
      %v1411 = vsub.s32 0, %v1410
      %v1412 = vrot.slane %v1398, %v1411
      %v1413 = vlaneseq
      %v1414 = vshrl.u32 %v1413, 7
      %v1415 = vsub.s32 0, %v1414
      %v1416 = vrot.slane %v1399, %v1415
      %v1417 = vlaneseq
      %v1418 = vshrl.u32 %v1417, 7
      %v1419 = vsub.s32 0, %v1418
      %v1420 = vrot.slane %v1400, %v1419
      %v1425 = vsub.f32 %v1242, %v1408
      %v1426 = vsub.f32 %v1242, %v1412
      %v1427 = vsub.f32 %v1242, %v1416
      %v1428 = vsub.f32 %v1242, %v1420
      %v1433 = vlaneseq
      %v1434 = vshrl.u32 %v1433, 7
      %v1435 = vsub.s32 0, %v1434
      %v1436 = vrot.slane %v1321, %v1435
      %v1437 = vlaneseq
      %v1438 = vshrl.u32 %v1437, 7
      %v1439 = vsub.s32 0, %v1438
      %v1440 = vrot.slane %v1322, %v1439
      %v1441 = vlaneseq
      %v1442 = vshrl.u32 %v1441, 7
      %v1443 = vsub.s32 0, %v1442
      %v1444 = vrot.slane %v1323, %v1443
      %v1445 = vlaneseq
      %v1446 = vshrl.u32 %v1445, 7
      %v1447 = vsub.s32 0, %v1446
      %v1448 = vrot.slane %v1324, %v1447
      %v1453 = vmul.f32 %v910, %v1436
      %v1454 = vmul.f32 %v911, %v1436
      %v1455 = vmul.f32 %v912, %v1440
      %v1456 = vmul.f32 %v913, %v1440
      %v1457 = vmul.f32 %v914, %v1444
      %v1458 = vmul.f32 %v915, %v1444
      %v1459 = vmul.f32 %v916, %v1448
      %v1460 = vmul.f32 %v917, %v1448
      %v1461 = vlaneseq
      %v1462 = vshrl.u32 %v1461, 7
      %v1463 = vsub.s32 1, %v1462
      %v1464 = vrot.slane %v1425, %v1463
      %v1465 = vlaneseq
      %v1466 = vshrl.u32 %v1465, 7
      %v1467 = vsub.s32 1, %v1466
      %v1468 = vrot.slane %v1426, %v1467
      %v1469 = vlaneseq
      %v1470 = vshrl.u32 %v1469, 7
      %v1471 = vsub.s32 1, %v1470
      %v1472 = vrot.slane %v1427, %v1471
      %v1473 = vlaneseq
      %v1474 = vshrl.u32 %v1473, 7
      %v1475 = vsub.s32 1, %v1474
      %v1476 = vrot.slane %v1428, %v1475
      %v1477 = vadd.f32 %v1453, %v1464
      %v1478 = vadd.f32 %v1454, %v1464
      %v1479 = vadd.f32 %v1455, %v1468
      %v1480 = vadd.f32 %v1456, %v1468
      %v1481 = vadd.f32 %v1457, %v1472
      %v1482 = vadd.f32 %v1458, %v1472
      %v1483 = vadd.f32 %v1459, %v1476
      %v1484 = vadd.f32 %v1460, %v1476
      %vm1485 = vcmp.ge.f32.partialorder %v1477, 0.0
      %vm1486 = vcmp.ge.f32.partialorder %v1478, 0.0
      %vm1487 = vcmp.ge.f32.partialorder %v1479, 0.0
      %vm1488 = vcmp.ge.f32.partialorder %v1480, 0.0
      %vm1489 = vcmp.ge.f32.partialorder %v1481, 0.0
      %vm1490 = vcmp.ge.f32.partialorder %v1482, 0.0
      %vm1491 = vcmp.ge.f32.partialorder %v1483, 0.0
      %vm1492 = vcmp.ge.f32.partialorder %v1484, 0.0
      %v1493 = vlaneseq
      %v1494 = vshrl.u32 %v1493, 7
      %v1495 = vsub.s32 2, %v1494
      %v1496 = vrot.slane %v1242, %v1495
      %v1497 = vmul.f32 %v1496, %v1477
      %v1498 = vmul.f32 %v1496, %v1478
      %v1499 = vmul.f32 %v1496, %v1479
      %v1500 = vmul.f32 %v1496, %v1480
      %v1501 = vmul.f32 %v1496, %v1481
      %v1502 = vmul.f32 %v1496, %v1482
      %v1503 = vmul.f32 %v1496, %v1483
      %v1504 = vmul.f32 %v1496, %v1484
      %v1505 = vsel %vm1485, %v1477, %v1497
      %v1506 = vsel %vm1486, %v1478, %v1498
      %v1507 = vsel %vm1487, %v1479, %v1499
      %v1508 = vsel %vm1488, %v1480, %v1500
      %v1509 = vsel %vm1489, %v1481, %v1501
      %v1510 = vsel %vm1490, %v1482, %v1502
      %v1511 = vsel %vm1491, %v1483, %v1503
      %v1512 = vsel %vm1492, %v1484, %v1504
      %1513 = vst [vmem:[#allocation2] sm:$0x1] 0.0
      %1514 = vst [vmem:[#allocation2 + $0x18] sm:$0x1] 0.0
      %1515 = vst [vmem:[#allocation2 + $0x30] sm:$0x1] 0.0
      %1516 = vst [vmem:[#allocation2 + $0x48] sm:$0x1] 0.0
      %1517 = vst [vmem:[#allocation2 + $0x11] sm:$0x1] 0.0
      %1518 = vst [vmem:[#allocation2 + $0x29] sm:$0x1] 0.0
      %1519 = vst [vmem:[#allocation2 + $0x41] sm:$0x1] 0.0
      %1520 = vst [vmem:[#allocation2 + $0x59] sm:$0x1] 0.0
      %1521 = vst [vmem:[#allocation2 + $0x1] sm:$0xff] %v1505
      %1522 = vst [vmem:[#allocation2 + $0x9] sm:$0xff] %v1506
      %1523 = vst [vmem:[#allocation2 + $0x19] sm:$0xff] %v1507
      %1524 = vst [vmem:[#allocation2 + $0x21] sm:$0xff] %v1508
      %1525 = vst [vmem:[#allocation2 + $0x31] sm:$0xff] %v1509
      %1526 = vst [vmem:[#allocation2 + $0x39] sm:$0xff] %v1510
      %1527 = vst [vmem:[#allocation2 + $0x49] sm:$0xff] %v1511
      %1528 = vst [vmem:[#allocation2 + $0x51] sm:$0xff] %v1512
      %v1529 = vld [vmem:[#allocation2] ss:$2 sm:$0xff]
      %s1530 = scalar_lea.vmem [#allocation2], 24
      %v1531 = vld [vmem:[%s1530] ss:$2 sm:$0xff]
      %s1532 = scalar_lea.vmem [#allocation2], 48
      %v1533 = vld [vmem:[%s1532] ss:$2 sm:$0xff]
      %s1534 = scalar_lea.vmem [#allocation2], 72
      %v1535 = vld [vmem:[%s1534] ss:$2 sm:$0xff]
      %v1536 = vpack.c.bf16 %v1531, %v1529
      %v1537 = vpack.c.bf16 %v1535, %v1533
      %v1538 = vld [vmem:[%s2] sm:$0xf]
      %v1539 = vld [vmem:[%s2 + $0x4] sm:$0xf]
      %v1540 = vld [vmem:[%s2 + $0x8] sm:$0xf]
      %v1541 = vld [vmem:[%s2 + $0xc] sm:$0xf]
      %v1542 = vld [vmem:[%s2 + $0x10] sm:$0xf]
      %v1543 = vld [vmem:[%s2 + $0x14] sm:$0xf]
      %v1544 = vld [vmem:[%s2 + $0x18] sm:$0xf]
      %v1545 = vld [vmem:[%s2 + $0x1c] sm:$0xf]
      %v1546 = vld [vmem:[%s2 + $0x20] sm:$0xf]
      %v1547 = vld [vmem:[%s2 + $0x24] sm:$0xf]
      %v1548 = vld [vmem:[%s2 + $0x28] sm:$0xf]
      %v1549 = vld [vmem:[%s2 + $0x2c] sm:$0xf]
      %v1550 = vld [vmem:[%s2 + $0x30] sm:$0xf]
      %v1551 = vld [vmem:[%s2 + $0x34] sm:$0xf]
      %v1552 = vld [vmem:[%s2 + $0x38] sm:$0xf]
      %v1553 = vld [vmem:[%s2 + $0x3c] sm:$0xf]
      %s1554 = scalar_lea.vmem [#allocation2], 1
      %v1555 = vld [vmem:[%s1554] ss:$2 sm:$0xff]
      %s1556 = scalar_lea.vmem [#allocation2], 25
      %v1557 = vld [vmem:[%s1556] ss:$2 sm:$0xff]
      %s1558 = scalar_lea.vmem [#allocation2], 49
      %v1559 = vld [vmem:[%s1558] ss:$2 sm:$0xff]
      %s1560 = scalar_lea.vmem [#allocation2], 73
      %v1561 = vld [vmem:[%s1560] ss:$2 sm:$0xff]
      %v1562 = vpack.c.bf16 %v1557, %v1555
      %v1563 = vpack.c.bf16 %v1561, %v1559
      %s1564 = scalar_lea.vmem %s2, 64
      %v1565 = vld [vmem:[%s1564] sm:$0xf]
      %v1566 = vld [vmem:[%s1564 + $0x4] sm:$0xf]
      %v1567 = vld [vmem:[%s1564 + $0x8] sm:$0xf]
      %v1568 = vld [vmem:[%s1564 + $0xc] sm:$0xf]
      %v1569 = vld [vmem:[%s1564 + $0x10] sm:$0xf]
      %v1570 = vld [vmem:[%s1564 + $0x14] sm:$0xf]
      %v1571 = vld [vmem:[%s1564 + $0x18] sm:$0xf]
      %v1572 = vld [vmem:[%s1564 + $0x1c] sm:$0xf]
      %v1573 = vld [vmem:[%s1564 + $0x20] sm:$0xf]
      %v1574 = vld [vmem:[%s1564 + $0x24] sm:$0xf]
      %v1575 = vld [vmem:[%s1564 + $0x28] sm:$0xf]
      %v1576 = vld [vmem:[%s1564 + $0x2c] sm:$0xf]
      %v1577 = vld [vmem:[%s1564 + $0x30] sm:$0xf]
      %v1578 = vld [vmem:[%s1564 + $0x34] sm:$0xf]
      %v1579 = vld [vmem:[%s1564 + $0x38] sm:$0xf]
      %v1580 = vld [vmem:[%s1564 + $0x3c] sm:$0xf]
      %v1597 = vunpack.c.l.b16 %v1565
      %v1598 = vunpack.c.l.b16 %v1566
      %v1599 = vunpack.c.l.b16 %v1567
      %v1600 = vunpack.c.l.b16 %v1568
      %v1601 = vunpack.c.l.b16 %v1569
      %v1602 = vunpack.c.l.b16 %v1570
      %v1603 = vunpack.c.l.b16 %v1571
      %v1604 = vunpack.c.l.b16 %v1572
      %v1605 = vunpack.c.l.b16 %v1573
      %v1606 = vunpack.c.l.b16 %v1574
      %v1607 = vunpack.c.l.b16 %v1575
      %v1608 = vunpack.c.l.b16 %v1576
      %v1609 = vunpack.c.l.b16 %v1577
      %v1610 = vunpack.c.l.b16 %v1578
      %v1611 = vunpack.c.l.b16 %v1579
      %v1612 = vunpack.c.l.b16 %v1580
      %v1613 = vpack.c.b16 %v1598, %v1597
      %v1614 = vpack.c.b16 %v1600, %v1599
      %v1615 = vpack.c.b16 %v1602, %v1601
      %v1616 = vpack.c.b16 %v1604, %v1603
      %v1617 = vpack.c.b16 %v1606, %v1605
      %v1618 = vpack.c.b16 %v1608, %v1607
      %v1619 = vpack.c.b16 %v1610, %v1609
      %v1620 = vpack.c.b16 %v1612, %v1611
      %1629 = vmatprep.subr.bf16.mxu0 0
      %1630 = vmatpush1.bf16.msra.mxu0 %v1613
      %1631 = vmatprep.subr.bf16.mxu0 0
      %1632 = vmatpush1.bf16.msra.mxu0 %v1614
      %1633 = vmatprep.subr.bf16.mxu0 0
      %1634 = vmatpush1.bf16.msra.mxu0 %v1615
      %1635 = vmatprep.subr.bf16.mxu0 0
      %1636 = vmatpush1.bf16.msra.mxu0 %v1616
      %1637 = vmatprep.subr.bf16.mxu0 0
      %1638 = vmatpush1.bf16.msra.mxu0 %v1617
      %1639 = vmatprep.subr.bf16.mxu0 0
      %1640 = vmatpush1.bf16.msra.mxu0 %v1618
      %1641 = vmatprep.subr.bf16.mxu0 0
      %1642 = vmatpush1.bf16.msra.mxu0 %v1619
      %1643 = vmatprep.subr.bf16.mxu0 0
      %1644 = vmatpush1.bf16.msra.mxu0 %v1620
      %1645 = vmatprep.subr.bf16.mxu0 0
      %1646 = vmatpush1.bf16.msra.mxu0 0
      %1647 = vmatprep.subr.bf16.mxu0 0
      %1648 = vmatpush1.bf16.msra.mxu0 0
      %1649 = vmatprep.subr.bf16.mxu0 0
      %1650 = vmatpush1.bf16.msra.mxu0 0
      %1651 = vmatprep.subr.bf16.mxu0 0
      %1652 = vmatpush1.bf16.msra.mxu0 0
      %1653 = vmatprep.subr.bf16.mxu0 0
      %1654 = vmatpush1.bf16.msra.mxu0 0
      %1655 = vmatprep.subr.bf16.mxu0 0
      %1656 = vmatpush1.bf16.msra.mxu0 0
      %1657 = vmatprep.subr.bf16.mxu0 0
      %1658 = vmatpush1.bf16.msra.mxu0 0
      %1659 = vmatprep.subr.bf16.mxu0 0
      %1660 = vmatpush1.bf16.msra.mxu0 0
      %1661 = vmatprep.mubr.bf16.mxu0 0
      %1662 = vmatmul.mubr.bf16.gmra.mrb[0].mxu0 %v1562
      %v1663 = vpop.f32.mrb[0].mxu0
      %v1664 = vadd.f32 0.0, %v1663
      %v1665 = vpop.f32.mrb[0].mxu0
      %v1666 = vpop.f32.mrb[0].mxu0
      %v1667 = vadd.f32 0.0, %v1666
      %v1668 = vpop.f32.mrb[0].mxu0
      %1669 = vmatprep.mubr.bf16.mxu0 0
      %1670 = vmatmul.mubr.bf16.gmra.mrb[0].mxu0 %v1563
      %v1671 = vpop.f32.mrb[0].mxu0
      %v1672 = vadd.f32 0.0, %v1671
      %v1673 = vpop.f32.mrb[0].mxu0
      %v1674 = vpop.f32.mrb[0].mxu0
      %v1675 = vadd.f32 0.0, %v1674
      %v1676 = vpop.f32.mrb[0].mxu0
      %1677 = vdwg.mxu0
      %v1694 = vunpack.c.l.b16 %v1538
      %v1695 = vunpack.c.l.b16 %v1539
      %v1696 = vunpack.c.l.b16 %v1540
      %v1697 = vunpack.c.l.b16 %v1541
      %v1698 = vunpack.c.l.b16 %v1542
      %v1699 = vunpack.c.l.b16 %v1543
      %v1700 = vunpack.c.l.b16 %v1544
      %v1701 = vunpack.c.l.b16 %v1545
      %v1702 = vunpack.c.l.b16 %v1546
      %v1703 = vunpack.c.l.b16 %v1547
      %v1704 = vunpack.c.l.b16 %v1548
      %v1705 = vunpack.c.l.b16 %v1549
      %v1706 = vunpack.c.l.b16 %v1550
      %v1707 = vunpack.c.l.b16 %v1551
      %v1708 = vunpack.c.l.b16 %v1552
      %v1709 = vunpack.c.l.b16 %v1553
      %v1710 = vpack.c.b16 %v1695, %v1694
      %v1711 = vpack.c.b16 %v1697, %v1696
      %v1712 = vpack.c.b16 %v1699, %v1698
      %v1713 = vpack.c.b16 %v1701, %v1700
      %v1714 = vpack.c.b16 %v1703, %v1702
      %v1715 = vpack.c.b16 %v1705, %v1704
      %v1716 = vpack.c.b16 %v1707, %v1706
      %v1717 = vpack.c.b16 %v1709, %v1708
      %1726 = vmatprep.subr.bf16.mxu0 0
      %1727 = vmatpush1.bf16.msra.mxu0 %v1710
      %1728 = vmatprep.subr.bf16.mxu0 0
      %1729 = vmatpush1.bf16.msra.mxu0 %v1711
      %1730 = vmatprep.subr.bf16.mxu0 0
      %1731 = vmatpush1.bf16.msra.mxu0 %v1712
      %1732 = vmatprep.subr.bf16.mxu0 0
      %1733 = vmatpush1.bf16.msra.mxu0 %v1713
      %1734 = vmatprep.subr.bf16.mxu0 0
      %1735 = vmatpush1.bf16.msra.mxu0 %v1714
      %1736 = vmatprep.subr.bf16.mxu0 0
      %1737 = vmatpush1.bf16.msra.mxu0 %v1715
      %1738 = vmatprep.subr.bf16.mxu0 0
      %1739 = vmatpush1.bf16.msra.mxu0 %v1716
      %1740 = vmatprep.subr.bf16.mxu0 0
      %1741 = vmatpush1.bf16.msra.mxu0 %v1717
      %1742 = vmatprep.subr.bf16.mxu0 0
      %1743 = vmatpush1.bf16.msra.mxu0 0
      %1744 = vmatprep.subr.bf16.mxu0 0
      %1745 = vmatpush1.bf16.msra.mxu0 0
      %1746 = vmatprep.subr.bf16.mxu0 0
      %1747 = vmatpush1.bf16.msra.mxu0 0
      %1748 = vmatprep.subr.bf16.mxu0 0
      %1749 = vmatpush1.bf16.msra.mxu0 0
      %1750 = vmatprep.subr.bf16.mxu0 0
      %1751 = vmatpush1.bf16.msra.mxu0 0
      %1752 = vmatprep.subr.bf16.mxu0 0
      %1753 = vmatpush1.bf16.msra.mxu0 0
      %1754 = vmatprep.subr.bf16.mxu0 0
      %1755 = vmatpush1.bf16.msra.mxu0 0
      %1756 = vmatprep.subr.bf16.mxu0 0
      %1757 = vmatpush1.bf16.msra.mxu0 0
      %1758 = vmatprep.mubr.bf16.mxu0 0
      %1759 = vmatmul.mubr.bf16.gmra.mrb[0].mxu0 %v1536
      %v1760 = vpop.f32.mrb[0].mxu0
      %v1761 = vadd.f32 %v1664, %v1760
      %v1762 = vpop.f32.mrb[0].mxu0
      %v1763 = vpop.f32.mrb[0].mxu0
      %v1764 = vadd.f32 %v1667, %v1763
      %v1765 = vpop.f32.mrb[0].mxu0
      %1766 = vmatprep.mubr.bf16.mxu0 0
      %1767 = vmatmul.mubr.bf16.gmra.mrb[0].mxu0 %v1537
      %v1768 = vpop.f32.mrb[0].mxu0
      %v1769 = vadd.f32 %v1672, %v1768
      %v1770 = vpop.f32.mrb[0].mxu0
      %v1771 = vpop.f32.mrb[0].mxu0
      %v1772 = vadd.f32 %v1675, %v1771
      %v1773 = vpop.f32.mrb[0].mxu0
      %1774 = vdwg.mxu0
      %s1775 = scalar_lea.vmem [#allocation2], 2
      %v1776 = vld [vmem:[%s1775] ss:$2 sm:$0xff]
      %s1777 = scalar_lea.vmem [#allocation2], 26
      %v1778 = vld [vmem:[%s1777] ss:$2 sm:$0xff]
      %s1779 = scalar_lea.vmem [#allocation2], 50
      %v1780 = vld [vmem:[%s1779] ss:$2 sm:$0xff]
      %s1781 = scalar_lea.vmem [#allocation2], 74
      %v1782 = vld [vmem:[%s1781] ss:$2 sm:$0xff]
      %v1783 = vpack.c.bf16 %v1778, %v1776
      %v1784 = vpack.c.bf16 %v1782, %v1780
      %s1785 = scalar_lea.vmem %s2, 128
      %v1786 = vld [vmem:[%s1785] sm:$0xf]
      %v1787 = vld [vmem:[%s1785 + $0x4] sm:$0xf]
      %v1788 = vld [vmem:[%s1785 + $0x8] sm:$0xf]
      %v1789 = vld [vmem:[%s1785 + $0xc] sm:$0xf]
      %v1790 = vld [vmem:[%s1785 + $0x10] sm:$0xf]
      %v1791 = vld [vmem:[%s1785 + $0x14] sm:$0xf]
      %v1792 = vld [vmem:[%s1785 + $0x18] sm:$0xf]
      %v1793 = vld [vmem:[%s1785 + $0x1c] sm:$0xf]
      %v1794 = vld [vmem:[%s1785 + $0x20] sm:$0xf]
      %v1795 = vld [vmem:[%s1785 + $0x24] sm:$0xf]
      %v1796 = vld [vmem:[%s1785 + $0x28] sm:$0xf]
      %v1797 = vld [vmem:[%s1785 + $0x2c] sm:$0xf]
      %v1798 = vld [vmem:[%s1785 + $0x30] sm:$0xf]
      %v1799 = vld [vmem:[%s1785 + $0x34] sm:$0xf]
      %v1800 = vld [vmem:[%s1785 + $0x38] sm:$0xf]
      %v1801 = vld [vmem:[%s1785 + $0x3c] sm:$0xf]
      %v1818 = vunpack.c.l.b16 %v1786
      %v1819 = vunpack.c.l.b16 %v1787
      %v1820 = vunpack.c.l.b16 %v1788
      %v1821 = vunpack.c.l.b16 %v1789
      %v1822 = vunpack.c.l.b16 %v1790
      %v1823 = vunpack.c.l.b16 %v1791
      %v1824 = vunpack.c.l.b16 %v1792
      %v1825 = vunpack.c.l.b16 %v1793
      %v1826 = vunpack.c.l.b16 %v1794
      %v1827 = vunpack.c.l.b16 %v1795
      %v1828 = vunpack.c.l.b16 %v1796
      %v1829 = vunpack.c.l.b16 %v1797
      %v1830 = vunpack.c.l.b16 %v1798
      %v1831 = vunpack.c.l.b16 %v1799
      %v1832 = vunpack.c.l.b16 %v1800
      %v1833 = vunpack.c.l.b16 %v1801
      %v1834 = vpack.c.b16 %v1819, %v1818
      %v1835 = vpack.c.b16 %v1821, %v1820
      %v1836 = vpack.c.b16 %v1823, %v1822
      %v1837 = vpack.c.b16 %v1825, %v1824
      %v1838 = vpack.c.b16 %v1827, %v1826
      %v1839 = vpack.c.b16 %v1829, %v1828
      %v1840 = vpack.c.b16 %v1831, %v1830
      %v1841 = vpack.c.b16 %v1833, %v1832
      %1850 = vmatprep.subr.bf16.mxu0 0
      %1851 = vmatpush1.bf16.msra.mxu0 %v1834
      %1852 = vmatprep.subr.bf16.mxu0 0
      %1853 = vmatpush1.bf16.msra.mxu0 %v1835
      %1854 = vmatprep.subr.bf16.mxu0 0
      %1855 = vmatpush1.bf16.msra.mxu0 %v1836
      %1856 = vmatprep.subr.bf16.mxu0 0
      %1857 = vmatpush1.bf16.msra.mxu0 %v1837
      %1858 = vmatprep.subr.bf16.mxu0 0
      %1859 = vmatpush1.bf16.msra.mxu0 %v1838
      %1860 = vmatprep.subr.bf16.mxu0 0
      %1861 = vmatpush1.bf16.msra.mxu0 %v1839
      %1862 = vmatprep.subr.bf16.mxu0 0
      %1863 = vmatpush1.bf16.msra.mxu0 %v1840
      %1864 = vmatprep.subr.bf16.mxu0 0
      %1865 = vmatpush1.bf16.msra.mxu0 %v1841
      %1866 = vmatprep.subr.bf16.mxu0 0
      %1867 = vmatpush1.bf16.msra.mxu0 0
      %1868 = vmatprep.subr.bf16.mxu0 0
      %1869 = vmatpush1.bf16.msra.mxu0 0
      %1870 = vmatprep.subr.bf16.mxu0 0
      %1871 = vmatpush1.bf16.msra.mxu0 0
      %1872 = vmatprep.subr.bf16.mxu0 0
      %1873 = vmatpush1.bf16.msra.mxu0 0
      %1874 = vmatprep.subr.bf16.mxu0 0
      %1875 = vmatpush1.bf16.msra.mxu0 0
      %1876 = vmatprep.subr.bf16.mxu0 0
      %1877 = vmatpush1.bf16.msra.mxu0 0
      %1878 = vmatprep.subr.bf16.mxu0 0
      %1879 = vmatpush1.bf16.msra.mxu0 0
      %1880 = vmatprep.subr.bf16.mxu0 0
      %1881 = vmatpush1.bf16.msra.mxu0 0
      %1882 = vmatprep.mubr.bf16.mxu0 0
      %1883 = vmatmul.mubr.bf16.gmra.mrb[0].mxu0 %v1783
      %v1884 = vpop.f32.mrb[0].mxu0
      %v1885 = vadd.f32 0.0, %v1884
      %v1886 = vpop.f32.mrb[0].mxu0
      %v1887 = vpop.f32.mrb[0].mxu0
      %v1888 = vadd.f32 0.0, %v1887
      %v1889 = vpop.f32.mrb[0].mxu0
      %1890 = vmatprep.mubr.bf16.mxu0 0
      %1891 = vmatmul.mubr.bf16.gmra.mrb[0].mxu0 %v1784
      %v1892 = vpop.f32.mrb[0].mxu0
      %v1893 = vadd.f32 0.0, %v1892
      %v1894 = vpop.f32.mrb[0].mxu0
      %v1895 = vpop.f32.mrb[0].mxu0
      %v1896 = vadd.f32 0.0, %v1895
      %v1897 = vpop.f32.mrb[0].mxu0
      %1898 = vdwg.mxu0
      %v1899 = vadd.f32 %v1761, %v1885
      %v1900 = vadd.f32 %v1764, %v1888
      %v1901 = vadd.f32 %v1769, %v1893
      %v1902 = vadd.f32 %v1772, %v1896
      %s1903 = scalar_lea.vmem [#allocation2], 3
      %v1904 = vld [vmem:[%s1903] ss:$2 sm:$0xff]
      %s1905 = scalar_lea.vmem [#allocation2], 27
      %v1906 = vld [vmem:[%s1905] ss:$2 sm:$0xff]
      %s1907 = scalar_lea.vmem [#allocation2], 51
      %v1908 = vld [vmem:[%s1907] ss:$2 sm:$0xff]
      %s1909 = scalar_lea.vmem [#allocation2], 75
      %v1910 = vld [vmem:[%s1909] ss:$2 sm:$0xff]
      %v1911 = vpack.c.bf16 %v1906, %v1904
      %v1912 = vpack.c.bf16 %v1910, %v1908
      %s1913 = scalar_lea.vmem %s2, 192
      %v1914 = vld [vmem:[%s1913] sm:$0xf]
      %v1915 = vld [vmem:[%s1913 + $0x4] sm:$0xf]
      %v1916 = vld [vmem:[%s1913 + $0x8] sm:$0xf]
      %v1917 = vld [vmem:[%s1913 + $0xc] sm:$0xf]
      %v1918 = vld [vmem:[%s1913 + $0x10] sm:$0xf]
      %v1919 = vld [vmem:[%s1913 + $0x14] sm:$0xf]
      %v1920 = vld [vmem:[%s1913 + $0x18] sm:$0xf]
      %v1921 = vld [vmem:[%s1913 + $0x1c] sm:$0xf]
      %v1922 = vld [vmem:[%s1913 + $0x20] sm:$0xf]
      %v1923 = vld [vmem:[%s1913 + $0x24] sm:$0xf]
      %v1924 = vld [vmem:[%s1913 + $0x28] sm:$0xf]
      %v1925 = vld [vmem:[%s1913 + $0x2c] sm:$0xf]
      %v1926 = vld [vmem:[%s1913 + $0x30] sm:$0xf]
      %v1927 = vld [vmem:[%s1913 + $0x34] sm:$0xf]
      %v1928 = vld [vmem:[%s1913 + $0x38] sm:$0xf]
      %v1929 = vld [vmem:[%s1913 + $0x3c] sm:$0xf]
      %v1946 = vunpack.c.l.b16 %v1914
      %v1947 = vunpack.c.l.b16 %v1915
      %v1948 = vunpack.c.l.b16 %v1916
      %v1949 = vunpack.c.l.b16 %v1917
      %v1950 = vunpack.c.l.b16 %v1918
      %v1951 = vunpack.c.l.b16 %v1919
      %v1952 = vunpack.c.l.b16 %v1920
      %v1953 = vunpack.c.l.b16 %v1921
      %v1954 = vunpack.c.l.b16 %v1922
      %v1955 = vunpack.c.l.b16 %v1923
      %v1956 = vunpack.c.l.b16 %v1924
      %v1957 = vunpack.c.l.b16 %v1925
      %v1958 = vunpack.c.l.b16 %v1926
      %v1959 = vunpack.c.l.b16 %v1927
      %v1960 = vunpack.c.l.b16 %v1928
      %v1961 = vunpack.c.l.b16 %v1929
      %v1962 = vpack.c.b16 %v1947, %v1946
      %v1963 = vpack.c.b16 %v1949, %v1948
      %v1964 = vpack.c.b16 %v1951, %v1950
      %v1965 = vpack.c.b16 %v1953, %v1952
      %v1966 = vpack.c.b16 %v1955, %v1954
      %v1967 = vpack.c.b16 %v1957, %v1956
      %v1968 = vpack.c.b16 %v1959, %v1958
      %v1969 = vpack.c.b16 %v1961, %v1960
      %1978 = vmatprep.subr.bf16.mxu0 0
      %1979 = vmatpush1.bf16.msra.mxu0 %v1962
      %1980 = vmatprep.subr.bf16.mxu0 0
      %1981 = vmatpush1.bf16.msra.mxu0 %v1963
      %1982 = vmatprep.subr.bf16.mxu0 0
      %1983 = vmatpush1.bf16.msra.mxu0 %v1964
      %1984 = vmatprep.subr.bf16.mxu0 0
      %1985 = vmatpush1.bf16.msra.mxu0 %v1965
      %1986 = vmatprep.subr.bf16.mxu0 0
      %1987 = vmatpush1.bf16.msra.mxu0 %v1966
      %1988 = vmatprep.subr.bf16.mxu0 0
      %1989 = vmatpush1.bf16.msra.mxu0 %v1967
      %1990 = vmatprep.subr.bf16.mxu0 0
      %1991 = vmatpush1.bf16.msra.mxu0 %v1968
      %1992 = vmatprep.subr.bf16.mxu0 0
      %1993 = vmatpush1.bf16.msra.mxu0 %v1969
      %1994 = vmatprep.subr.bf16.mxu0 0
      %1995 = vmatpush1.bf16.msra.mxu0 0
      %1996 = vmatprep.subr.bf16.mxu0 0
      %1997 = vmatpush1.bf16.msra.mxu0 0
      %1998 = vmatprep.subr.bf16.mxu0 0
      %1999 = vmatpush1.bf16.msra.mxu0 0
      %2000 = vmatprep.subr.bf16.mxu0 0
      %2001 = vmatpush1.bf16.msra.mxu0 0
      %2002 = vmatprep.subr.bf16.mxu0 0
      %2003 = vmatpush1.bf16.msra.mxu0 0
      %2004 = vmatprep.subr.bf16.mxu0 0
      %2005 = vmatpush1.bf16.msra.mxu0 0
      %2006 = vmatprep.subr.bf16.mxu0 0
      %2007 = vmatpush1.bf16.msra.mxu0 0
      %2008 = vmatprep.subr.bf16.mxu0 0
      %2009 = vmatpush1.bf16.msra.mxu0 0
      %2010 = vmatprep.mubr.bf16.mxu0 0
      %2011 = vmatmul.mubr.bf16.gmra.mrb[0].mxu0 %v1911
      %v2012 = vpop.f32.mrb[0].mxu0
      %v2013 = vadd.f32 0.0, %v2012
      %v2014 = vpop.f32.mrb[0].mxu0
      %v2015 = vpop.f32.mrb[0].mxu0
      %v2016 = vadd.f32 0.0, %v2015
      %v2017 = vpop.f32.mrb[0].mxu0
      %2018 = vmatprep.mubr.bf16.mxu0 0
      %2019 = vmatmul.mubr.bf16.gmra.mrb[0].mxu0 %v1912
      %v2020 = vpop.f32.mrb[0].mxu0
      %v2021 = vadd.f32 0.0, %v2020
      %v2022 = vpop.f32.mrb[0].mxu0
      %v2023 = vpop.f32.mrb[0].mxu0
      %v2024 = vadd.f32 0.0, %v2023
      %v2025 = vpop.f32.mrb[0].mxu0
      %2026 = vdwg.mxu0
      %v2027 = vadd.f32 %v1899, %v2013
      %v2028 = vadd.f32 %v1900, %v2016
      %v2029 = vadd.f32 %v1901, %v2021
      %v2030 = vadd.f32 %v1902, %v2024
      %v2031 = vrot.slane %v2027, 4
      %v2032 = vadd.f32 %v2027, %v2031
      %v2033 = vrot.slane %v2032, 2
      %v2034 = vadd.f32 %v2032, %v2033
      %v2035 = vrot.slane %v2034, 1
      %v2036 = vadd.f32 %v2034, %v2035
      %v2037 = vrot.slane %v2028, 4
      %v2038 = vadd.f32 %v2028, %v2037
      %v2039 = vrot.slane %v2038, 2
      %v2040 = vadd.f32 %v2038, %v2039
      %v2041 = vrot.slane %v2040, 1
      %v2042 = vadd.f32 %v2040, %v2041
      %v2043 = vrot.slane %v2029, 4
      %v2044 = vadd.f32 %v2029, %v2043
      %v2045 = vrot.slane %v2044, 2
      %v2046 = vadd.f32 %v2044, %v2045
      %v2047 = vrot.slane %v2046, 1
      %v2048 = vadd.f32 %v2046, %v2047
      %v2049 = vrot.slane %v2030, 4
      %v2050 = vadd.f32 %v2030, %v2049
      %v2051 = vrot.slane %v2050, 2
      %v2052 = vadd.f32 %v2050, %v2051
      %v2053 = vrot.slane %v2052, 1
      %v2054 = vadd.f32 %v2052, %v2053
      %v2055 = vmul.f32 %v2027, %v2027
      %v2056 = vmul.f32 %v2028, %v2028
      %v2057 = vmul.f32 %v2029, %v2029
      %v2058 = vmul.f32 %v2030, %v2030
      %v2059 = vrot.slane %v2055, 4
      %v2060 = vadd.f32 %v2055, %v2059
      %v2061 = vrot.slane %v2060, 2
      %v2062 = vadd.f32 %v2060, %v2061
      %v2063 = vrot.slane %v2062, 1
      %v2064 = vadd.f32 %v2062, %v2063
      %v2065 = vrot.slane %v2056, 4
      %v2066 = vadd.f32 %v2056, %v2065
      %v2067 = vrot.slane %v2066, 2
      %v2068 = vadd.f32 %v2066, %v2067
      %v2069 = vrot.slane %v2068, 1
      %v2070 = vadd.f32 %v2068, %v2069
      %v2071 = vrot.slane %v2057, 4
      %v2072 = vadd.f32 %v2057, %v2071
      %v2073 = vrot.slane %v2072, 2
      %v2074 = vadd.f32 %v2072, %v2073
      %v2075 = vrot.slane %v2074, 1
      %v2076 = vadd.f32 %v2074, %v2075
      %v2077 = vrot.slane %v2058, 4
      %v2078 = vadd.f32 %v2058, %v2077
      %v2079 = vrot.slane %v2078, 2
      %v2080 = vadd.f32 %v2078, %v2079
      %v2081 = vrot.slane %v2080, 1
      %v2082 = vadd.f32 %v2080, %v2081
      %2087 = vrot.lane.b32.xlu0 %v2036, 96
      %v2088 = vpop.permute.xlu0 %2087
      %2089 = vrot.lane.b32.xlu0 %v2042, 96
      %v2090 = vpop.permute.xlu0 %2089
      %2091 = vrot.lane.b32.xlu0 %v2048, 96
      %v2092 = vpop.permute.xlu0 %2091
      %2093 = vrot.lane.b32.xlu0 %v2054, 96
      %v2094 = vpop.permute.xlu0 %2093
      %v2099 = vadd.f32 %v2036, %v2088
      %v2100 = vadd.f32 %v2042, %v2090
      %v2101 = vadd.f32 %v2048, %v2092
      %v2102 = vadd.f32 %v2054, %v2094
      %2107 = vrot.lane.b32.xlu0 %v2064, 96
      %v2108 = vpop.permute.xlu0 %2107
      %2109 = vrot.lane.b32.xlu0 %v2070, 96
      %v2110 = vpop.permute.xlu0 %2109
      %2111 = vrot.lane.b32.xlu0 %v2076, 96
      %v2112 = vpop.permute.xlu0 %2111
      %2113 = vrot.lane.b32.xlu0 %v2082, 96
      %v2114 = vpop.permute.xlu0 %2113
      %v2119 = vadd.f32 %v2064, %v2108
      %v2120 = vadd.f32 %v2070, %v2110
      %v2121 = vadd.f32 %v2076, %v2112
      %v2122 = vadd.f32 %v2082, %v2114
      %2123 = vrot.lane.b32.xlu0 %v2036, 64
      %v2124 = vpop.permute.xlu0 %2123
      %2125 = vrot.lane.b32.xlu0 %v2042, 64
      %v2126 = vpop.permute.xlu0 %2125
      %2127 = vrot.lane.b32.xlu0 %v2048, 64
      %v2128 = vpop.permute.xlu0 %2127
      %2129 = vrot.lane.b32.xlu0 %v2054, 64
      %v2130 = vpop.permute.xlu0 %2129
      %v2135 = vadd.f32 %v2099, %v2124
      %v2136 = vadd.f32 %v2100, %v2126
      %v2137 = vadd.f32 %v2101, %v2128
      %v2138 = vadd.f32 %v2102, %v2130
      %2139 = vrot.lane.b32.xlu0 %v2064, 64
      %v2140 = vpop.permute.xlu0 %2139
      %2141 = vrot.lane.b32.xlu0 %v2070, 64
      %v2142 = vpop.permute.xlu0 %2141
      %2143 = vrot.lane.b32.xlu0 %v2076, 64
      %v2144 = vpop.permute.xlu0 %2143
      %2145 = vrot.lane.b32.xlu0 %v2082, 64
      %v2146 = vpop.permute.xlu0 %2145
      %v2151 = vadd.f32 %v2119, %v2140
      %v2152 = vadd.f32 %v2120, %v2142
      %v2153 = vadd.f32 %v2121, %v2144
      %v2154 = vadd.f32 %v2122, %v2146
      %2155 = vrot.lane.b32.xlu0 %v2036, 32
      %v2156 = vpop.permute.xlu0 %2155
      %2157 = vrot.lane.b32.xlu0 %v2042, 32
      %v2158 = vpop.permute.xlu0 %2157
      %2159 = vrot.lane.b32.xlu0 %v2048, 32
      %v2160 = vpop.permute.xlu0 %2159
      %2161 = vrot.lane.b32.xlu0 %v2054, 32
      %v2162 = vpop.permute.xlu0 %2161
      %v2167 = vadd.f32 %v2135, %v2156
      %v2168 = vadd.f32 %v2136, %v2158
      %v2169 = vadd.f32 %v2137, %v2160
      %v2170 = vadd.f32 %v2138, %v2162
      %2171 = vrot.lane.b32.xlu0 %v2064, 32
      %v2172 = vpop.permute.xlu0 %2171
      %2173 = vrot.lane.b32.xlu0 %v2070, 32
      %v2174 = vpop.permute.xlu0 %2173
      %2175 = vrot.lane.b32.xlu0 %v2076, 32
      %v2176 = vpop.permute.xlu0 %2175
      %2177 = vrot.lane.b32.xlu0 %v2082, 32
      %v2178 = vpop.permute.xlu0 %2177
      %v2183 = vadd.f32 %v2151, %v2172
      %v2184 = vadd.f32 %v2152, %v2174
      %v2185 = vadd.f32 %v2153, %v2176
      %v2186 = vadd.f32 %v2154, %v2178
      %v2187 = vmul.f32 %v2167, 0.03125
      %v2188 = vmul.f32 %v2168, 0.03125
      %v2189 = vmul.f32 %v2169, 0.03125
      %v2190 = vmul.f32 %v2170, 0.03125
      %v2191 = vmul.f32 %v2183, 0.03125
      %v2192 = vmul.f32 %v2184, 0.03125
      %v2193 = vmul.f32 %v2185, 0.03125
      %v2194 = vmul.f32 %v2186, 0.03125
      %v2195 = vmul.f32 %v2187, %v2187
      %v2196 = vmul.f32 %v2188, %v2188
      %v2197 = vmul.f32 %v2189, %v2189
      %v2198 = vmul.f32 %v2190, %v2190
      %v2199 = vsub.f32 %v2191, %v2195
      %v2200 = vsub.f32 %v2192, %v2196
      %v2201 = vsub.f32 %v2193, %v2197
      %v2202 = vsub.f32 %v2194, %v2198
      %v2203 = vmax.f32 %v2199, 0.0
      %v2204 = vmax.f32 %v2200, 0.0
      %v2205 = vmax.f32 %v2201, 0.0
      %v2206 = vmax.f32 %v2202, 0.0
      %v2207 = vadd.f32 %v2203, 1e-05
      %v2208 = vadd.f32 %v2204, 1e-05
      %v2209 = vadd.f32 %v2205, 1e-05
      %v2210 = vadd.f32 %v2206, 1e-05
      %v2211 = vrsqrt.pop %v2207
      %v2212 = vrsqrt.pop %v2208
      %v2213 = vrsqrt.pop %v2209
      %v2214 = vrsqrt.pop %v2210
      %v2215 = vld [vmem:[%s6] sm:$0x7]
      %v2220 = vrot.slane %v2212, 7
      %v2221 = vsel %vm1248, %v2220, %v2211
      %v2222 = vrot.slane %v2213, 6
      %v2223 = vsel %vm1251, %v2222, %v2221
      %v2224 = vrot.slane %v2214, 5
      %v2225 = vsel %vm1254, %v2224, %v2223
      %2227 = vrot.lane.b32.xlu0 %v2225, 32
      %v2228 = vpop.permute.xlu0 %2227
      %2230 = vrot.lane.b32.xlu0 %v2225, 64
      %v2231 = vpop.permute.xlu0 %2230
      %2233 = vrot.lane.b32.xlu0 %v2225, 96
      %v2234 = vpop.permute.xlu0 %2233
      %v2236 = vsel %vm1280, %v2225, %v2228
      %v2237 = vsel %vm1284, %v2236, %v2231
      %v2238 = vsel %vm1288, %v2237, %v2234
      %v2241 = vunpack.c.l.s4 1966171168
      %v2242 = vunpack.c.0.s8 %v2241
      %v2243 = vlaneseq
      %v2244 = vshrl.u32 %v2243, 7
      %v2245 = vsub.s32 %v2242, %v2244
      %v2246 = vrot.slane %v2238, %v2245
      %v2247 = vcombine.high %v2246, %v2246
      %v2249 = vunpack.c.l.s4 1966171168
      %v2250 = vunpack.c.0.s8 %v2249
      %v2251 = vlaneseq
      %v2252 = vshrl.u32 %v2251, 7
      %v2253 = vsub.s32 %v2250, %v2252
      %v2254 = vrot.slane %v2246, %v2253
      %v2256 = vunpack.c.l.s4 1966171168
      %v2257 = vunpack.c.0.s8 %v2256
      %v2258 = vlaneseq
      %v2259 = vshrl.u32 %v2258, 7
      %v2260 = vsub.s32 %v2257, %v2259
      %v2261 = vrot.slane %v2247, %v2260
      %v2262 = vcombine.high %v2254, %v2254
      %v2263 = vcombine.high %v2261, %v2261
      %v2268 = vmul.f32 %v2254, %v2215
      %v2269 = vmul.f32 %v2261, %v2215
      %v2270 = vmul.f32 %v2262, %v2215
      %v2271 = vmul.f32 %v2263, %v2215
      %v2272 = vmul.f32 %v2187, %v2211
      %v2273 = vmul.f32 %v2188, %v2212
      %v2274 = vmul.f32 %v2189, %v2213
      %v2275 = vmul.f32 %v2190, %v2214
      %v2280 = vrot.slane %v2273, 7
      %v2281 = vsel %vm1248, %v2280, %v2272
      %v2282 = vrot.slane %v2274, 6
      %v2283 = vsel %vm1251, %v2282, %v2281
      %v2284 = vrot.slane %v2275, 5
      %v2285 = vsel %vm1254, %v2284, %v2283
      %2287 = vrot.lane.b32.xlu0 %v2285, 32
      %v2288 = vpop.permute.xlu0 %2287
      %2290 = vrot.lane.b32.xlu0 %v2285, 64
      %v2291 = vpop.permute.xlu0 %2290
      %2293 = vrot.lane.b32.xlu0 %v2285, 96
      %v2294 = vpop.permute.xlu0 %2293
      %v2296 = vsel %vm1280, %v2285, %v2288
      %v2297 = vsel %vm1284, %v2296, %v2291
      %v2298 = vsel %vm1288, %v2297, %v2294
      %v2301 = vunpack.c.l.s4 1966171168
      %v2302 = vunpack.c.0.s8 %v2301
      %v2303 = vlaneseq
      %v2304 = vshrl.u32 %v2303, 7
      %v2305 = vsub.s32 %v2302, %v2304
      %v2306 = vrot.slane %v2298, %v2305
      %v2307 = vcombine.high %v2306, %v2306
      %v2309 = vunpack.c.l.s4 1966171168
      %v2310 = vunpack.c.0.s8 %v2309
      %v2311 = vlaneseq
      %v2312 = vshrl.u32 %v2311, 7
      %v2313 = vsub.s32 %v2310, %v2312
      %v2314 = vrot.slane %v2306, %v2313
      %v2316 = vunpack.c.l.s4 1966171168
      %v2317 = vunpack.c.0.s8 %v2316
      %v2318 = vlaneseq
      %v2319 = vshrl.u32 %v2318, 7
      %v2320 = vsub.s32 %v2317, %v2319
      %v2321 = vrot.slane %v2307, %v2320
      %v2322 = vcombine.high %v2314, %v2314
      %v2323 = vcombine.high %v2321, %v2321
      %v2328 = vmul.f32 %v2314, %v2215
      %v2329 = vmul.f32 %v2321, %v2215
      %v2330 = vmul.f32 %v2322, %v2215
      %v2331 = vmul.f32 %v2323, %v2215
      %v2336 = vlaneseq
      %v2337 = vshrl.u32 %v2336, 7
      %v2338 = vsub.s32 0, %v2337
      %v2339 = vrot.slane %v2328, %v2338
      %v2340 = vlaneseq
      %v2341 = vshrl.u32 %v2340, 7
      %v2342 = vsub.s32 0, %v2341
      %v2343 = vrot.slane %v2329, %v2342
      %v2344 = vlaneseq
      %v2345 = vshrl.u32 %v2344, 7
      %v2346 = vsub.s32 0, %v2345
      %v2347 = vrot.slane %v2330, %v2346
      %v2348 = vlaneseq
      %v2349 = vshrl.u32 %v2348, 7
      %v2350 = vsub.s32 0, %v2349
      %v2351 = vrot.slane %v2331, %v2350
      %v2356 = vsub.f32 %v2215, %v2339
      %v2357 = vsub.f32 %v2215, %v2343
      %v2358 = vsub.f32 %v2215, %v2347
      %v2359 = vsub.f32 %v2215, %v2351
      %v2364 = vlaneseq
      %v2365 = vshrl.u32 %v2364, 7
      %v2366 = vsub.s32 0, %v2365
      %v2367 = vrot.slane %v2268, %v2366
      %v2368 = vlaneseq
      %v2369 = vshrl.u32 %v2368, 7
      %v2370 = vsub.s32 0, %v2369
      %v2371 = vrot.slane %v2269, %v2370
      %v2372 = vlaneseq
      %v2373 = vshrl.u32 %v2372, 7
      %v2374 = vsub.s32 0, %v2373
      %v2375 = vrot.slane %v2270, %v2374
      %v2376 = vlaneseq
      %v2377 = vshrl.u32 %v2376, 7
      %v2378 = vsub.s32 0, %v2377
      %v2379 = vrot.slane %v2271, %v2378
      %v2384 = vmul.f32 %v2027, %v2367
      %v2385 = vmul.f32 %v2028, %v2371
      %v2386 = vmul.f32 %v2029, %v2375
      %v2387 = vmul.f32 %v2030, %v2379
      %v2388 = vlaneseq
      %v2389 = vshrl.u32 %v2388, 7
      %v2390 = vsub.s32 1, %v2389
      %v2391 = vrot.slane %v2356, %v2390
      %v2392 = vlaneseq
      %v2393 = vshrl.u32 %v2392, 7
      %v2394 = vsub.s32 1, %v2393
      %v2395 = vrot.slane %v2357, %v2394
      %v2396 = vlaneseq
      %v2397 = vshrl.u32 %v2396, 7
      %v2398 = vsub.s32 1, %v2397
      %v2399 = vrot.slane %v2358, %v2398
      %v2400 = vlaneseq
      %v2401 = vshrl.u32 %v2400, 7
      %v2402 = vsub.s32 1, %v2401
      %v2403 = vrot.slane %v2359, %v2402
      %v2404 = vadd.f32 %v2384, %v2391
      %v2405 = vadd.f32 %v2385, %v2395
      %v2406 = vadd.f32 %v2386, %v2399
      %v2407 = vadd.f32 %v2387, %v2403
      %vm2408 = vcmp.ge.f32.partialorder %v2404, 0.0
      %vm2409 = vcmp.ge.f32.partialorder %v2405, 0.0
      %vm2410 = vcmp.ge.f32.partialorder %v2406, 0.0
      %vm2411 = vcmp.ge.f32.partialorder %v2407, 0.0
      %v2412 = vlaneseq
      %v2413 = vshrl.u32 %v2412, 7
      %v2414 = vsub.s32 2, %v2413
      %v2415 = vrot.slane %v2215, %v2414
      %v2416 = vmul.f32 %v2415, %v2404
      %v2417 = vmul.f32 %v2415, %v2405
      %v2418 = vmul.f32 %v2415, %v2406
      %v2419 = vmul.f32 %v2415, %v2407
      %v2420 = vsel %vm2408, %v2404, %v2416
      %v2421 = vsel %vm2409, %v2405, %v2417
      %v2422 = vsel %vm2410, %v2406, %v2418
      %v2423 = vsel %vm2411, %v2407, %v2419
      %2424 = vst [vmem:[#allocation3] sm:$0x1] 0.0
      %2425 = vst [vmem:[#allocation3 + $0x10] sm:$0x1] 0.0
      %2426 = vst [vmem:[#allocation3 + $0x20] sm:$0x1] 0.0
      %2427 = vst [vmem:[#allocation3 + $0x30] sm:$0x1] 0.0
      %2428 = vst [vmem:[#allocation3 + $0x9] sm:$0x1] 0.0
      %2429 = vst [vmem:[#allocation3 + $0x19] sm:$0x1] 0.0
      %2430 = vst [vmem:[#allocation3 + $0x29] sm:$0x1] 0.0
      %2431 = vst [vmem:[#allocation3 + $0x39] sm:$0x1] 0.0
      %2432 = vst [vmem:[#allocation3 + $0x1] sm:$0xff] %v2420
      %2433 = vst [vmem:[#allocation3 + $0x11] sm:$0xff] %v2421
      %2434 = vst [vmem:[#allocation3 + $0x21] sm:$0xff] %v2422
      %2435 = vst [vmem:[#allocation3 + $0x31] sm:$0xff] %v2423
      %v2436 = vld [vmem:[#allocation3] ss:$2 sm:$0xf]
      %s2437 = scalar_lea.vmem [#allocation3], 16
      %v2438 = vld [vmem:[%s2437] ss:$2 sm:$0xf]
      %s2439 = scalar_lea.vmem [#allocation3], 32
      %v2440 = vld [vmem:[%s2439] ss:$2 sm:$0xf]
      %s2441 = scalar_lea.vmem [#allocation3], 48
      %v2442 = vld [vmem:[%s2441] ss:$2 sm:$0xf]
      %v2447 = vcombine.low %v2436, %v2438
      %v2448 = vcombine.low %v2440, %v2442
      %v2451 = vpack.c.bf16 %v2448, %v2447
      %v2452 = vld [vmem:[%s3] sm:$0xf]
      %v2453 = vld [vmem:[%s3 + $0x4] sm:$0xf]
      %v2454 = vld [vmem:[%s3 + $0x8] sm:$0xf]
      %v2455 = vld [vmem:[%s3 + $0xc] sm:$0xf]
      %v2456 = vld [vmem:[%s3 + $0x10] sm:$0xf]
      %v2457 = vld [vmem:[%s3 + $0x14] sm:$0xf]
      %v2458 = vld [vmem:[%s3 + $0x18] sm:$0xf]
      %v2459 = vld [vmem:[%s3 + $0x1c] sm:$0xf]
      %v2460 = vld [vmem:[%s3 + $0x20] sm:$0xf]
      %v2461 = vld [vmem:[%s3 + $0x24] sm:$0xf]
      %v2462 = vld [vmem:[%s3 + $0x28] sm:$0xf]
      %v2463 = vld [vmem:[%s3 + $0x2c] sm:$0xf]
      %v2464 = vld [vmem:[%s3 + $0x30] sm:$0xf]
      %v2465 = vld [vmem:[%s3 + $0x34] sm:$0xf]
      %v2466 = vld [vmem:[%s3 + $0x38] sm:$0xf]
      %v2467 = vld [vmem:[%s3 + $0x3c] sm:$0xf]
      %s2468 = scalar_lea.vmem [#allocation3], 1
      %v2469 = vld [vmem:[%s2468] ss:$2 sm:$0xf]
      %s2470 = scalar_lea.vmem [#allocation3], 17
      %v2471 = vld [vmem:[%s2470] ss:$2 sm:$0xf]
      %s2472 = scalar_lea.vmem [#allocation3], 33
      %v2473 = vld [vmem:[%s2472] ss:$2 sm:$0xf]
      %s2474 = scalar_lea.vmem [#allocation3], 49
      %v2475 = vld [vmem:[%s2474] ss:$2 sm:$0xf]
      %v2480 = vcombine.low %v2469, %v2471
      %v2481 = vcombine.low %v2473, %v2475
      %v2484 = vpack.c.bf16 %v2481, %v2480
      %s2485 = scalar_lea.vmem %s3, 64
      %v2486 = vld [vmem:[%s2485] sm:$0xf]
      %v2487 = vld [vmem:[%s2485 + $0x4] sm:$0xf]
      %v2488 = vld [vmem:[%s2485 + $0x8] sm:$0xf]
      %v2489 = vld [vmem:[%s2485 + $0xc] sm:$0xf]
      %v2490 = vld [vmem:[%s2485 + $0x10] sm:$0xf]
      %v2491 = vld [vmem:[%s2485 + $0x14] sm:$0xf]
      %v2492 = vld [vmem:[%s2485 + $0x18] sm:$0xf]
      %v2493 = vld [vmem:[%s2485 + $0x1c] sm:$0xf]
      %v2494 = vld [vmem:[%s2485 + $0x20] sm:$0xf]
      %v2495 = vld [vmem:[%s2485 + $0x24] sm:$0xf]
      %v2496 = vld [vmem:[%s2485 + $0x28] sm:$0xf]
      %v2497 = vld [vmem:[%s2485 + $0x2c] sm:$0xf]
      %v2498 = vld [vmem:[%s2485 + $0x30] sm:$0xf]
      %v2499 = vld [vmem:[%s2485 + $0x34] sm:$0xf]
      %v2500 = vld [vmem:[%s2485 + $0x38] sm:$0xf]
      %v2501 = vld [vmem:[%s2485 + $0x3c] sm:$0xf]
      %v2518 = vunpack.c.l.b16 %v2486
      %v2519 = vunpack.c.l.b16 %v2487
      %v2520 = vunpack.c.l.b16 %v2488
      %v2521 = vunpack.c.l.b16 %v2489
      %v2522 = vunpack.c.l.b16 %v2490
      %v2523 = vunpack.c.l.b16 %v2491
      %v2524 = vunpack.c.l.b16 %v2492
      %v2525 = vunpack.c.l.b16 %v2493
      %v2526 = vunpack.c.l.b16 %v2494
      %v2527 = vunpack.c.l.b16 %v2495
      %v2528 = vunpack.c.l.b16 %v2496
      %v2529 = vunpack.c.l.b16 %v2497
      %v2530 = vunpack.c.l.b16 %v2498
      %v2531 = vunpack.c.l.b16 %v2499
      %v2532 = vunpack.c.l.b16 %v2500
      %v2533 = vunpack.c.l.b16 %v2501
      %v2534 = vpack.c.b16 %v2519, %v2518
      %v2535 = vpack.c.b16 %v2521, %v2520
      %v2536 = vpack.c.b16 %v2523, %v2522
      %v2537 = vpack.c.b16 %v2525, %v2524
      %v2538 = vpack.c.b16 %v2527, %v2526
      %v2539 = vpack.c.b16 %v2529, %v2528
      %v2540 = vpack.c.b16 %v2531, %v2530
      %v2541 = vpack.c.b16 %v2533, %v2532
      %2550 = vmatprep.subr.bf16.mxu0 0
      %2551 = vmatpush1.bf16.msra.mxu0 %v2534
      %2552 = vmatprep.subr.bf16.mxu0 0
      %2553 = vmatpush1.bf16.msra.mxu0 %v2535
      %2554 = vmatprep.subr.bf16.mxu0 0
      %2555 = vmatpush1.bf16.msra.mxu0 %v2536
      %2556 = vmatprep.subr.bf16.mxu0 0
      %2557 = vmatpush1.bf16.msra.mxu0 %v2537
      %2558 = vmatprep.subr.bf16.mxu0 0
      %2559 = vmatpush1.bf16.msra.mxu0 %v2538
      %2560 = vmatprep.subr.bf16.mxu0 0
      %2561 = vmatpush1.bf16.msra.mxu0 %v2539
      %2562 = vmatprep.subr.bf16.mxu0 0
      %2563 = vmatpush1.bf16.msra.mxu0 %v2540
      %2564 = vmatprep.subr.bf16.mxu0 0
      %2565 = vmatpush1.bf16.msra.mxu0 %v2541
      %2566 = vmatprep.subr.bf16.mxu0 0
      %2567 = vmatpush1.bf16.msra.mxu0 0
      %2568 = vmatprep.subr.bf16.mxu0 0
      %2569 = vmatpush1.bf16.msra.mxu0 0
      %2570 = vmatprep.subr.bf16.mxu0 0
      %2571 = vmatpush1.bf16.msra.mxu0 0
      %2572 = vmatprep.subr.bf16.mxu0 0
      %2573 = vmatpush1.bf16.msra.mxu0 0
      %2574 = vmatprep.subr.bf16.mxu0 0
      %2575 = vmatpush1.bf16.msra.mxu0 0
      %2576 = vmatprep.subr.bf16.mxu0 0
      %2577 = vmatpush1.bf16.msra.mxu0 0
      %2578 = vmatprep.subr.bf16.mxu0 0
      %2579 = vmatpush1.bf16.msra.mxu0 0
      %2580 = vmatprep.subr.bf16.mxu0 0
      %2581 = vmatpush1.bf16.msra.mxu0 0
      %2582 = vmatprep.mubr.bf16.mxu0 0
      %2583 = vmatmul.mubr.bf16.gmra.mrb[0].mxu0 %v2484
      %v2584 = vpop.f32.mrb[0].mxu0
      %v2585 = vadd.f32 0.0, %v2584
      %v2586 = vpop.f32.mrb[0].mxu0
      %v2587 = vpop.f32.mrb[0].mxu0
      %v2588 = vadd.f32 0.0, %v2587
      %v2589 = vpop.f32.mrb[0].mxu0
      %2590 = vdwg.mxu0
      %v2607 = vunpack.c.l.b16 %v2452
      %v2608 = vunpack.c.l.b16 %v2453
      %v2609 = vunpack.c.l.b16 %v2454
      %v2610 = vunpack.c.l.b16 %v2455
      %v2611 = vunpack.c.l.b16 %v2456
      %v2612 = vunpack.c.l.b16 %v2457
      %v2613 = vunpack.c.l.b16 %v2458
      %v2614 = vunpack.c.l.b16 %v2459
      %v2615 = vunpack.c.l.b16 %v2460
      %v2616 = vunpack.c.l.b16 %v2461
      %v2617 = vunpack.c.l.b16 %v2462
      %v2618 = vunpack.c.l.b16 %v2463
      %v2619 = vunpack.c.l.b16 %v2464
      %v2620 = vunpack.c.l.b16 %v2465
      %v2621 = vunpack.c.l.b16 %v2466
      %v2622 = vunpack.c.l.b16 %v2467
      %v2623 = vpack.c.b16 %v2608, %v2607
      %v2624 = vpack.c.b16 %v2610, %v2609
      %v2625 = vpack.c.b16 %v2612, %v2611
      %v2626 = vpack.c.b16 %v2614, %v2613
      %v2627 = vpack.c.b16 %v2616, %v2615
      %v2628 = vpack.c.b16 %v2618, %v2617
      %v2629 = vpack.c.b16 %v2620, %v2619
      %v2630 = vpack.c.b16 %v2622, %v2621
      %2639 = vmatprep.subr.bf16.mxu0 0
      %2640 = vmatpush1.bf16.msra.mxu0 %v2623
      %2641 = vmatprep.subr.bf16.mxu0 0
      %2642 = vmatpush1.bf16.msra.mxu0 %v2624
      %2643 = vmatprep.subr.bf16.mxu0 0
      %2644 = vmatpush1.bf16.msra.mxu0 %v2625
      %2645 = vmatprep.subr.bf16.mxu0 0
      %2646 = vmatpush1.bf16.msra.mxu0 %v2626
      %2647 = vmatprep.subr.bf16.mxu0 0
      %2648 = vmatpush1.bf16.msra.mxu0 %v2627
      %2649 = vmatprep.subr.bf16.mxu0 0
      %2650 = vmatpush1.bf16.msra.mxu0 %v2628
      %2651 = vmatprep.subr.bf16.mxu0 0
      %2652 = vmatpush1.bf16.msra.mxu0 %v2629
      %2653 = vmatprep.subr.bf16.mxu0 0
      %2654 = vmatpush1.bf16.msra.mxu0 %v2630
      %2655 = vmatprep.subr.bf16.mxu0 0
      %2656 = vmatpush1.bf16.msra.mxu0 0
      %2657 = vmatprep.subr.bf16.mxu0 0
      %2658 = vmatpush1.bf16.msra.mxu0 0
      %2659 = vmatprep.subr.bf16.mxu0 0
      %2660 = vmatpush1.bf16.msra.mxu0 0
      %2661 = vmatprep.subr.bf16.mxu0 0
      %2662 = vmatpush1.bf16.msra.mxu0 0
      %2663 = vmatprep.subr.bf16.mxu0 0
      %2664 = vmatpush1.bf16.msra.mxu0 0
      %2665 = vmatprep.subr.bf16.mxu0 0
      %2666 = vmatpush1.bf16.msra.mxu0 0
      %2667 = vmatprep.subr.bf16.mxu0 0
      %2668 = vmatpush1.bf16.msra.mxu0 0
      %2669 = vmatprep.subr.bf16.mxu0 0
      %2670 = vmatpush1.bf16.msra.mxu0 0
      %2671 = vmatprep.mubr.bf16.mxu0 0
      %2672 = vmatmul.mubr.bf16.gmra.mrb[0].mxu0 %v2451
      %v2673 = vpop.f32.mrb[0].mxu0
      %v2674 = vadd.f32 %v2585, %v2673
      %v2675 = vpop.f32.mrb[0].mxu0
      %v2676 = vpop.f32.mrb[0].mxu0
      %v2677 = vadd.f32 %v2588, %v2676
      %v2678 = vpop.f32.mrb[0].mxu0
      %2679 = vdwg.mxu0
      %s2680 = scalar_lea.vmem [#allocation3], 2
      %v2681 = vld [vmem:[%s2680] ss:$2 sm:$0xf]
      %s2682 = scalar_lea.vmem [#allocation3], 18
      %v2683 = vld [vmem:[%s2682] ss:$2 sm:$0xf]
      %s2684 = scalar_lea.vmem [#allocation3], 34
      %v2685 = vld [vmem:[%s2684] ss:$2 sm:$0xf]
      %s2686 = scalar_lea.vmem [#allocation3], 50
      %v2687 = vld [vmem:[%s2686] ss:$2 sm:$0xf]
      %v2692 = vcombine.low %v2681, %v2683
      %v2693 = vcombine.low %v2685, %v2687
      %v2696 = vpack.c.bf16 %v2693, %v2692
      %s2697 = scalar_lea.vmem %s3, 128
      %v2698 = vld [vmem:[%s2697] sm:$0xf]
      %v2699 = vld [vmem:[%s2697 + $0x4] sm:$0xf]
      %v2700 = vld [vmem:[%s2697 + $0x8] sm:$0xf]
      %v2701 = vld [vmem:[%s2697 + $0xc] sm:$0xf]
      %v2702 = vld [vmem:[%s2697 + $0x10] sm:$0xf]
      %v2703 = vld [vmem:[%s2697 + $0x14] sm:$0xf]
      %v2704 = vld [vmem:[%s2697 + $0x18] sm:$0xf]
      %v2705 = vld [vmem:[%s2697 + $0x1c] sm:$0xf]
      %v2706 = vld [vmem:[%s2697 + $0x20] sm:$0xf]
      %v2707 = vld [vmem:[%s2697 + $0x24] sm:$0xf]
      %v2708 = vld [vmem:[%s2697 + $0x28] sm:$0xf]
      %v2709 = vld [vmem:[%s2697 + $0x2c] sm:$0xf]
      %v2710 = vld [vmem:[%s2697 + $0x30] sm:$0xf]
      %v2711 = vld [vmem:[%s2697 + $0x34] sm:$0xf]
      %v2712 = vld [vmem:[%s2697 + $0x38] sm:$0xf]
      %v2713 = vld [vmem:[%s2697 + $0x3c] sm:$0xf]
      %v2730 = vunpack.c.l.b16 %v2698
      %v2731 = vunpack.c.l.b16 %v2699
      %v2732 = vunpack.c.l.b16 %v2700
      %v2733 = vunpack.c.l.b16 %v2701
      %v2734 = vunpack.c.l.b16 %v2702
      %v2735 = vunpack.c.l.b16 %v2703
      %v2736 = vunpack.c.l.b16 %v2704
      %v2737 = vunpack.c.l.b16 %v2705
      %v2738 = vunpack.c.l.b16 %v2706
      %v2739 = vunpack.c.l.b16 %v2707
      %v2740 = vunpack.c.l.b16 %v2708
      %v2741 = vunpack.c.l.b16 %v2709
      %v2742 = vunpack.c.l.b16 %v2710
      %v2743 = vunpack.c.l.b16 %v2711
      %v2744 = vunpack.c.l.b16 %v2712
      %v2745 = vunpack.c.l.b16 %v2713
      %v2746 = vpack.c.b16 %v2731, %v2730
      %v2747 = vpack.c.b16 %v2733, %v2732
      %v2748 = vpack.c.b16 %v2735, %v2734
      %v2749 = vpack.c.b16 %v2737, %v2736
      %v2750 = vpack.c.b16 %v2739, %v2738
      %v2751 = vpack.c.b16 %v2741, %v2740
      %v2752 = vpack.c.b16 %v2743, %v2742
      %v2753 = vpack.c.b16 %v2745, %v2744
      %2762 = vmatprep.subr.bf16.mxu0 0
      %2763 = vmatpush1.bf16.msra.mxu0 %v2746
      %2764 = vmatprep.subr.bf16.mxu0 0
      %2765 = vmatpush1.bf16.msra.mxu0 %v2747
      %2766 = vmatprep.subr.bf16.mxu0 0
      %2767 = vmatpush1.bf16.msra.mxu0 %v2748
      %2768 = vmatprep.subr.bf16.mxu0 0
      %2769 = vmatpush1.bf16.msra.mxu0 %v2749
      %2770 = vmatprep.subr.bf16.mxu0 0
      %2771 = vmatpush1.bf16.msra.mxu0 %v2750
      %2772 = vmatprep.subr.bf16.mxu0 0
      %2773 = vmatpush1.bf16.msra.mxu0 %v2751
      %2774 = vmatprep.subr.bf16.mxu0 0
      %2775 = vmatpush1.bf16.msra.mxu0 %v2752
      %2776 = vmatprep.subr.bf16.mxu0 0
      %2777 = vmatpush1.bf16.msra.mxu0 %v2753
      %2778 = vmatprep.subr.bf16.mxu0 0
      %2779 = vmatpush1.bf16.msra.mxu0 0
      %2780 = vmatprep.subr.bf16.mxu0 0
      %2781 = vmatpush1.bf16.msra.mxu0 0
      %2782 = vmatprep.subr.bf16.mxu0 0
      %2783 = vmatpush1.bf16.msra.mxu0 0
      %2784 = vmatprep.subr.bf16.mxu0 0
      %2785 = vmatpush1.bf16.msra.mxu0 0
      %2786 = vmatprep.subr.bf16.mxu0 0
      %2787 = vmatpush1.bf16.msra.mxu0 0
      %2788 = vmatprep.subr.bf16.mxu0 0
      %2789 = vmatpush1.bf16.msra.mxu0 0
      %2790 = vmatprep.subr.bf16.mxu0 0
      %2791 = vmatpush1.bf16.msra.mxu0 0
      %2792 = vmatprep.subr.bf16.mxu0 0
      %2793 = vmatpush1.bf16.msra.mxu0 0
      %2794 = vmatprep.mubr.bf16.mxu0 0
      %2795 = vmatmul.mubr.bf16.gmra.mrb[0].mxu0 %v2696
      %v2796 = vpop.f32.mrb[0].mxu0
      %v2797 = vadd.f32 0.0, %v2796
      %v2798 = vpop.f32.mrb[0].mxu0
      %v2799 = vpop.f32.mrb[0].mxu0
      %v2800 = vadd.f32 0.0, %v2799
      %v2801 = vpop.f32.mrb[0].mxu0
      %2802 = vdwg.mxu0
      %v2803 = vadd.f32 %v2674, %v2797
      %v2804 = vadd.f32 %v2677, %v2800
      %s2805 = scalar_lea.vmem [#allocation3], 3
      %v2806 = vld [vmem:[%s2805] ss:$2 sm:$0xf]
      %s2807 = scalar_lea.vmem [#allocation3], 19
      %v2808 = vld [vmem:[%s2807] ss:$2 sm:$0xf]
      %s2809 = scalar_lea.vmem [#allocation3], 35
      %v2810 = vld [vmem:[%s2809] ss:$2 sm:$0xf]
      %s2811 = scalar_lea.vmem [#allocation3], 51
      %v2812 = vld [vmem:[%s2811] ss:$2 sm:$0xf]
      %v2817 = vcombine.low %v2806, %v2808
      %v2818 = vcombine.low %v2810, %v2812
      %v2821 = vpack.c.bf16 %v2818, %v2817
      %s2822 = scalar_lea.vmem %s3, 192
      %v2823 = vld [vmem:[%s2822] sm:$0xf]
      %v2824 = vld [vmem:[%s2822 + $0x4] sm:$0xf]
      %v2825 = vld [vmem:[%s2822 + $0x8] sm:$0xf]
      %v2826 = vld [vmem:[%s2822 + $0xc] sm:$0xf]
      %v2827 = vld [vmem:[%s2822 + $0x10] sm:$0xf]
      %v2828 = vld [vmem:[%s2822 + $0x14] sm:$0xf]
      %v2829 = vld [vmem:[%s2822 + $0x18] sm:$0xf]
      %v2830 = vld [vmem:[%s2822 + $0x1c] sm:$0xf]
      %v2831 = vld [vmem:[%s2822 + $0x20] sm:$0xf]
      %v2832 = vld [vmem:[%s2822 + $0x24] sm:$0xf]
      %v2833 = vld [vmem:[%s2822 + $0x28] sm:$0xf]
      %v2834 = vld [vmem:[%s2822 + $0x2c] sm:$0xf]
      %v2835 = vld [vmem:[%s2822 + $0x30] sm:$0xf]
      %v2836 = vld [vmem:[%s2822 + $0x34] sm:$0xf]
      %v2837 = vld [vmem:[%s2822 + $0x38] sm:$0xf]
      %v2838 = vld [vmem:[%s2822 + $0x3c] sm:$0xf]
      %v2855 = vunpack.c.l.b16 %v2823
      %v2856 = vunpack.c.l.b16 %v2824
      %v2857 = vunpack.c.l.b16 %v2825
      %v2858 = vunpack.c.l.b16 %v2826
      %v2859 = vunpack.c.l.b16 %v2827
      %v2860 = vunpack.c.l.b16 %v2828
      %v2861 = vunpack.c.l.b16 %v2829
      %v2862 = vunpack.c.l.b16 %v2830
      %v2863 = vunpack.c.l.b16 %v2831
      %v2864 = vunpack.c.l.b16 %v2832
      %v2865 = vunpack.c.l.b16 %v2833
      %v2866 = vunpack.c.l.b16 %v2834
      %v2867 = vunpack.c.l.b16 %v2835
      %v2868 = vunpack.c.l.b16 %v2836
      %v2869 = vunpack.c.l.b16 %v2837
      %v2870 = vunpack.c.l.b16 %v2838
      %v2871 = vpack.c.b16 %v2856, %v2855
      %v2872 = vpack.c.b16 %v2858, %v2857
      %v2873 = vpack.c.b16 %v2860, %v2859
      %v2874 = vpack.c.b16 %v2862, %v2861
      %v2875 = vpack.c.b16 %v2864, %v2863
      %v2876 = vpack.c.b16 %v2866, %v2865
      %v2877 = vpack.c.b16 %v2868, %v2867
      %v2878 = vpack.c.b16 %v2870, %v2869
      %2887 = vmatprep.subr.bf16.mxu0 0
      %2888 = vmatpush1.bf16.msra.mxu0 %v2871
      %2889 = vmatprep.subr.bf16.mxu0 0
      %2890 = vmatpush1.bf16.msra.mxu0 %v2872
      %2891 = vmatprep.subr.bf16.mxu0 0
      %2892 = vmatpush1.bf16.msra.mxu0 %v2873
      %2893 = vmatprep.subr.bf16.mxu0 0
      %2894 = vmatpush1.bf16.msra.mxu0 %v2874
      %2895 = vmatprep.subr.bf16.mxu0 0
      %2896 = vmatpush1.bf16.msra.mxu0 %v2875
      %2897 = vmatprep.subr.bf16.mxu0 0
      %2898 = vmatpush1.bf16.msra.mxu0 %v2876
      %2899 = vmatprep.subr.bf16.mxu0 0
      %2900 = vmatpush1.bf16.msra.mxu0 %v2877
      %2901 = vmatprep.subr.bf16.mxu0 0
      %2902 = vmatpush1.bf16.msra.mxu0 %v2878
      %2903 = vmatprep.subr.bf16.mxu0 0
      %2904 = vmatpush1.bf16.msra.mxu0 0
      %2905 = vmatprep.subr.bf16.mxu0 0
      %2906 = vmatpush1.bf16.msra.mxu0 0
      %2907 = vmatprep.subr.bf16.mxu0 0
      %2908 = vmatpush1.bf16.msra.mxu0 0
      %2909 = vmatprep.subr.bf16.mxu0 0
      %2910 = vmatpush1.bf16.msra.mxu0 0
      %2911 = vmatprep.subr.bf16.mxu0 0
      %2912 = vmatpush1.bf16.msra.mxu0 0
      %2913 = vmatprep.subr.bf16.mxu0 0
      %2914 = vmatpush1.bf16.msra.mxu0 0
      %2915 = vmatprep.subr.bf16.mxu0 0
      %2916 = vmatpush1.bf16.msra.mxu0 0
      %2917 = vmatprep.subr.bf16.mxu0 0
      %2918 = vmatpush1.bf16.msra.mxu0 0
      %2919 = vmatprep.mubr.bf16.mxu0 0
      %2920 = vmatmul.mubr.bf16.gmra.mrb[0].mxu0 %v2821
      %v2921 = vpop.f32.mrb[0].mxu0
      %v2922 = vadd.f32 0.0, %v2921
      %v2923 = vpop.f32.mrb[0].mxu0
      %v2924 = vpop.f32.mrb[0].mxu0
      %v2925 = vadd.f32 0.0, %v2924
      %v2926 = vpop.f32.mrb[0].mxu0
      %2927 = vdwg.mxu0
      %v2928 = vadd.f32 %v2803, %v2922
      %v2929 = vadd.f32 %v2804, %v2925
      %v2932 = vcombine.high %v2928, %v2928
      %v2933 = vcombine.high %v2929, %v2929
      %vm2936 = vcmask 1043456
      %v2937 = vsel %vm2936, %v2928, 0.0
      %v2938 = vrot.slane %v2937, 4
      %v2939 = vadd.f32 %v2937, %v2938
      %v2940 = vrot.slane %v2939, 2
      %v2941 = vadd.f32 %v2939, %v2940
      %v2942 = vrot.slane %v2941, 1
      %v2943 = vadd.f32 %v2941, %v2942
      %v2944 = vsel %vm2936, %v2932, 0.0
      %v2945 = vrot.slane %v2944, 4
      %v2946 = vadd.f32 %v2944, %v2945
      %v2947 = vrot.slane %v2946, 2
      %v2948 = vadd.f32 %v2946, %v2947
      %v2949 = vrot.slane %v2948, 1
      %v2950 = vadd.f32 %v2948, %v2949
      %v2951 = vsel %vm2936, %v2929, 0.0
      %v2952 = vrot.slane %v2951, 4
      %v2953 = vadd.f32 %v2951, %v2952
      %v2954 = vrot.slane %v2953, 2
      %v2955 = vadd.f32 %v2953, %v2954
      %v2956 = vrot.slane %v2955, 1
      %v2957 = vadd.f32 %v2955, %v2956
      %v2958 = vsel %vm2936, %v2933, 0.0
      %v2959 = vrot.slane %v2958, 4
      %v2960 = vadd.f32 %v2958, %v2959
      %v2961 = vrot.slane %v2960, 2
      %v2962 = vadd.f32 %v2960, %v2961
      %v2963 = vrot.slane %v2962, 1
      %v2964 = vadd.f32 %v2962, %v2963
      %v2965 = vmul.f32 %v2928, %v2928
      %v2966 = vmul.f32 %v2932, %v2932
      %v2967 = vmul.f32 %v2929, %v2929
      %v2968 = vmul.f32 %v2933, %v2933
      %v2969 = vsel %vm2936, %v2965, 0.0
      %v2970 = vrot.slane %v2969, 4
      %v2971 = vadd.f32 %v2969, %v2970
      %v2972 = vrot.slane %v2971, 2
      %v2973 = vadd.f32 %v2971, %v2972
      %v2974 = vrot.slane %v2973, 1
      %v2975 = vadd.f32 %v2973, %v2974
      %v2976 = vsel %vm2936, %v2966, 0.0
      %v2977 = vrot.slane %v2976, 4
      %v2978 = vadd.f32 %v2976, %v2977
      %v2979 = vrot.slane %v2978, 2
      %v2980 = vadd.f32 %v2978, %v2979
      %v2981 = vrot.slane %v2980, 1
      %v2982 = vadd.f32 %v2980, %v2981
      %v2983 = vsel %vm2936, %v2967, 0.0
      %v2984 = vrot.slane %v2983, 4
      %v2985 = vadd.f32 %v2983, %v2984
      %v2986 = vrot.slane %v2985, 2
      %v2987 = vadd.f32 %v2985, %v2986
      %v2988 = vrot.slane %v2987, 1
      %v2989 = vadd.f32 %v2987, %v2988
      %v2990 = vsel %vm2936, %v2968, 0.0
      %v2991 = vrot.slane %v2990, 4
      %v2992 = vadd.f32 %v2990, %v2991
      %v2993 = vrot.slane %v2992, 2
      %v2994 = vadd.f32 %v2992, %v2993
      %v2995 = vrot.slane %v2994, 1
      %v2996 = vadd.f32 %v2994, %v2995
      %3001 = vrot.lane.b32.xlu0 %v2943, 64
      %v3002 = vpop.permute.xlu0 %3001
      %3003 = vrot.lane.b32.xlu0 %v2950, 64
      %v3004 = vpop.permute.xlu0 %3003
      %3005 = vrot.lane.b32.xlu0 %v2957, 64
      %v3006 = vpop.permute.xlu0 %3005
      %3007 = vrot.lane.b32.xlu0 %v2964, 64
      %v3008 = vpop.permute.xlu0 %3007
      %v3013 = vadd.f32 %v2943, %v3002
      %v3014 = vadd.f32 %v2950, %v3004
      %v3015 = vadd.f32 %v2957, %v3006
      %v3016 = vadd.f32 %v2964, %v3008
      %3021 = vrot.lane.b32.xlu0 %v2975, 64
      %v3022 = vpop.permute.xlu0 %3021
      %3023 = vrot.lane.b32.xlu0 %v2982, 64
      %v3024 = vpop.permute.xlu0 %3023
      %3025 = vrot.lane.b32.xlu0 %v2989, 64
      %v3026 = vpop.permute.xlu0 %3025
      %3027 = vrot.lane.b32.xlu0 %v2996, 64
      %v3028 = vpop.permute.xlu0 %3027
      %v3033 = vadd.f32 %v2975, %v3022
      %v3034 = vadd.f32 %v2982, %v3024
      %v3035 = vadd.f32 %v2989, %v3026
      %v3036 = vadd.f32 %v2996, %v3028
      %v3037 = vmul.f32 %v3013, 0.125
      %v3038 = vmul.f32 %v3014, 0.125
      %v3039 = vmul.f32 %v3015, 0.125
      %v3040 = vmul.f32 %v3016, 0.125
      %v3041 = vmul.f32 %v3033, 0.125
      %v3042 = vmul.f32 %v3034, 0.125
      %v3043 = vmul.f32 %v3035, 0.125
      %v3044 = vmul.f32 %v3036, 0.125
      %v3045 = vmul.f32 %v3037, %v3037
      %v3046 = vmul.f32 %v3038, %v3038
      %v3047 = vmul.f32 %v3039, %v3039
      %v3048 = vmul.f32 %v3040, %v3040
      %v3049 = vsub.f32 %v3041, %v3045
      %v3050 = vsub.f32 %v3042, %v3046
      %v3051 = vsub.f32 %v3043, %v3047
      %v3052 = vsub.f32 %v3044, %v3048
      %v3053 = vmax.f32 %v3049, 0.0
      %v3054 = vmax.f32 %v3050, 0.0
      %v3055 = vmax.f32 %v3051, 0.0
      %v3056 = vmax.f32 %v3052, 0.0
      %v3057 = vadd.f32 %v3053, 1e-05
      %v3058 = vadd.f32 %v3054, 1e-05
      %v3059 = vadd.f32 %v3055, 1e-05
      %v3060 = vadd.f32 %v3056, 1e-05
      %v3061 = vrsqrt.pop %v3057
      %v3062 = vrsqrt.pop %v3058
      %v3063 = vrsqrt.pop %v3059
      %v3064 = vrsqrt.pop %v3060
      %v3065 = vld [vmem:[%s7] sm:$0x7]
      %v3070 = vrot.slane %v3062, 7
      %v3071 = vsel %vm1248, %v3070, %v3061
      %v3072 = vrot.slane %v3063, 6
      %v3073 = vsel %vm1251, %v3072, %v3071
      %v3074 = vrot.slane %v3064, 5
      %v3075 = vsel %vm1254, %v3074, %v3073
      %3077 = vrot.lane.b32.xlu0 %v3075, 64
      %v3078 = vpop.permute.xlu0 %3077
      %v3080 = vsel %vm1284, %v3075, %v3078
      %v3083 = vunpack.c.l.s4 1966171168
      %v3084 = vunpack.c.0.s8 %v3083
      %v3085 = vlaneseq
      %v3086 = vshrl.u32 %v3085, 7
      %v3087 = vsub.s32 %v3084, %v3086
      %v3088 = vrot.slane %v3080, %v3087
      %v3089 = vcombine.high %v3088, %v3088
      %v3091 = vunpack.c.l.s4 1966171168
      %v3092 = vunpack.c.0.s8 %v3091
      %v3093 = vlaneseq
      %v3094 = vshrl.u32 %v3093, 7
      %v3095 = vsub.s32 %v3092, %v3094
      %v3096 = vrot.slane %v3088, %v3095
      %v3098 = vunpack.c.l.s4 1966171168
      %v3099 = vunpack.c.0.s8 %v3098
      %v3100 = vlaneseq
      %v3101 = vshrl.u32 %v3100, 7
      %v3102 = vsub.s32 %v3099, %v3101
      %v3103 = vrot.slane %v3089, %v3102
      %v3104 = vcombine.high %v3096, %v3096
      %v3105 = vcombine.high %v3103, %v3103
      %v3110 = vmul.f32 %v3096, %v3065
      %v3111 = vmul.f32 %v3103, %v3065
      %v3112 = vmul.f32 %v3104, %v3065
      %v3113 = vmul.f32 %v3105, %v3065
      %v3114 = vmul.f32 %v3037, %v3061
      %v3115 = vmul.f32 %v3038, %v3062
      %v3116 = vmul.f32 %v3039, %v3063
      %v3117 = vmul.f32 %v3040, %v3064
      %v3122 = vrot.slane %v3115, 7
      %v3123 = vsel %vm1248, %v3122, %v3114
      %v3124 = vrot.slane %v3116, 6
      %v3125 = vsel %vm1251, %v3124, %v3123
      %v3126 = vrot.slane %v3117, 5
      %v3127 = vsel %vm1254, %v3126, %v3125
      %3129 = vrot.lane.b32.xlu0 %v3127, 64
      %v3130 = vpop.permute.xlu0 %3129
      %v3132 = vsel %vm1284, %v3127, %v3130
      %v3135 = vunpack.c.l.s4 1966171168
      %v3136 = vunpack.c.0.s8 %v3135
      %v3137 = vlaneseq
      %v3138 = vshrl.u32 %v3137, 7
      %v3139 = vsub.s32 %v3136, %v3138
      %v3140 = vrot.slane %v3132, %v3139
      %v3141 = vcombine.high %v3140, %v3140
      %v3143 = vunpack.c.l.s4 1966171168
      %v3144 = vunpack.c.0.s8 %v3143
      %v3145 = vlaneseq
      %v3146 = vshrl.u32 %v3145, 7
      %v3147 = vsub.s32 %v3144, %v3146
      %v3148 = vrot.slane %v3140, %v3147
      %v3150 = vunpack.c.l.s4 1966171168
      %v3151 = vunpack.c.0.s8 %v3150
      %v3152 = vlaneseq
      %v3153 = vshrl.u32 %v3152, 7
      %v3154 = vsub.s32 %v3151, %v3153
      %v3155 = vrot.slane %v3141, %v3154
      %v3156 = vcombine.high %v3148, %v3148
      %v3157 = vcombine.high %v3155, %v3155
      %v3162 = vmul.f32 %v3148, %v3065
      %v3163 = vmul.f32 %v3155, %v3065
      %v3164 = vmul.f32 %v3156, %v3065
      %v3165 = vmul.f32 %v3157, %v3065
      %v3170 = vlaneseq
      %v3171 = vshrl.u32 %v3170, 7
      %v3172 = vsub.s32 0, %v3171
      %v3173 = vrot.slane %v3162, %v3172
      %v3174 = vlaneseq
      %v3175 = vshrl.u32 %v3174, 7
      %v3176 = vsub.s32 0, %v3175
      %v3177 = vrot.slane %v3163, %v3176
      %v3178 = vlaneseq
      %v3179 = vshrl.u32 %v3178, 7
      %v3180 = vsub.s32 0, %v3179
      %v3181 = vrot.slane %v3164, %v3180
      %v3182 = vlaneseq
      %v3183 = vshrl.u32 %v3182, 7
      %v3184 = vsub.s32 0, %v3183
      %v3185 = vrot.slane %v3165, %v3184
      %v3190 = vsub.f32 %v3065, %v3173
      %v3191 = vsub.f32 %v3065, %v3177
      %v3192 = vsub.f32 %v3065, %v3181
      %v3193 = vsub.f32 %v3065, %v3185
      %v3198 = vlaneseq
      %v3199 = vshrl.u32 %v3198, 7
      %v3200 = vsub.s32 0, %v3199
      %v3201 = vrot.slane %v3110, %v3200
      %v3202 = vlaneseq
      %v3203 = vshrl.u32 %v3202, 7
      %v3204 = vsub.s32 0, %v3203
      %v3205 = vrot.slane %v3111, %v3204
      %v3206 = vlaneseq
      %v3207 = vshrl.u32 %v3206, 7
      %v3208 = vsub.s32 0, %v3207
      %v3209 = vrot.slane %v3112, %v3208
      %v3210 = vlaneseq
      %v3211 = vshrl.u32 %v3210, 7
      %v3212 = vsub.s32 0, %v3211
      %v3213 = vrot.slane %v3113, %v3212
      %v3218 = vmul.f32 %v2928, %v3201
      %v3219 = vmul.f32 %v2932, %v3205
      %v3220 = vmul.f32 %v2929, %v3209
      %v3221 = vmul.f32 %v2933, %v3213
      %v3222 = vlaneseq
      %v3223 = vshrl.u32 %v3222, 7
      %v3224 = vsub.s32 1, %v3223
      %v3225 = vrot.slane %v3190, %v3224
      %v3226 = vlaneseq
      %v3227 = vshrl.u32 %v3226, 7
      %v3228 = vsub.s32 1, %v3227
      %v3229 = vrot.slane %v3191, %v3228
      %v3230 = vlaneseq
      %v3231 = vshrl.u32 %v3230, 7
      %v3232 = vsub.s32 1, %v3231
      %v3233 = vrot.slane %v3192, %v3232
      %v3234 = vlaneseq
      %v3235 = vshrl.u32 %v3234, 7
      %v3236 = vsub.s32 1, %v3235
      %v3237 = vrot.slane %v3193, %v3236
      %v3238 = vadd.f32 %v3218, %v3225
      %v3239 = vadd.f32 %v3219, %v3229
      %v3240 = vadd.f32 %v3220, %v3233
      %v3241 = vadd.f32 %v3221, %v3237
      %vm3242 = vcmp.ge.f32.partialorder %v3238, 0.0
      %vm3243 = vcmp.ge.f32.partialorder %v3239, 0.0
      %vm3244 = vcmp.ge.f32.partialorder %v3240, 0.0
      %vm3245 = vcmp.ge.f32.partialorder %v3241, 0.0
      %v3246 = vlaneseq
      %v3247 = vshrl.u32 %v3246, 7
      %v3248 = vsub.s32 2, %v3247
      %v3249 = vrot.slane %v3065, %v3248
      %v3250 = vmul.f32 %v3249, %v3238
      %v3251 = vmul.f32 %v3249, %v3239
      %v3252 = vmul.f32 %v3249, %v3240
      %v3253 = vmul.f32 %v3249, %v3241
      %v3254 = vsel %vm3242, %v3238, %v3250
      %v3255 = vsel %vm3243, %v3239, %v3251
      %v3256 = vsel %vm3244, %v3240, %v3252
      %v3257 = vsel %vm3245, %v3241, %v3253
      %3258 = vst [vmem:[#allocation4] sm:$0x1] 0.0
      %3259 = vst [vmem:[#allocation4 + $0x8] sm:$0x1] 0.0
      %3260 = vst [vmem:[#allocation4 + $0x10] sm:$0x1] 0.0
      %3261 = vst [vmem:[#allocation4 + $0x18] sm:$0x1] 0.0
      %3262 = vst [vmem:[#allocation4 + $0x5] sm:$0x1] 0.0
      %3263 = vst [vmem:[#allocation4 + $0xd] sm:$0x1] 0.0
      %3264 = vst [vmem:[#allocation4 + $0x15] sm:$0x1] 0.0
      %3265 = vst [vmem:[#allocation4 + $0x1d] sm:$0x1] 0.0
      %3266 = vst [vmem:[#allocation4 + $0x1] sm:$0xf] %v3254
      %3267 = vst [vmem:[#allocation4 + $0x9] sm:$0xf] %v3255
      %3268 = vst [vmem:[#allocation4 + $0x11] sm:$0xf] %v3256
      %3269 = vst [vmem:[#allocation4 + $0x19] sm:$0xf] %v3257
      %v3270 = vld [vmem:[#allocation4] ss:$2 sm:$0x3]
      %s3271 = scalar_lea.vmem [#allocation4], 8
      %v3272 = vld [vmem:[%s3271] ss:$2 sm:$0x3]
      %s3273 = scalar_lea.vmem [#allocation4], 16
      %v3274 = vld [vmem:[%s3273] ss:$2 sm:$0x3]
      %s3275 = scalar_lea.vmem [#allocation4], 24
      %v3276 = vld [vmem:[%s3275] ss:$2 sm:$0x3]
      %v3281 = vcombine.low %v3270, %v3272
      %v3282 = vcombine.low %v3274, %v3276
      %v3284 = vunpack.c.l.s4 1983009808
      %v3285 = vunpack.c.0.s8 %v3284
      %v3286 = vlaneseq
      %v3287 = vshrl.u32 %v3286, 7
      %v3288 = vsub.s32 %v3285, %v3287
      %v3289 = vrot.slane %v3281, %v3288
      %v3291 = vunpack.c.l.s4 1983009808
      %v3292 = vunpack.c.0.s8 %v3291
      %v3293 = vlaneseq
      %v3294 = vshrl.u32 %v3293, 7
      %v3295 = vsub.s32 %v3292, %v3294
      %v3296 = vrot.slane %v3282, %v3295
      %v3297 = vcombine.low %v3289, %v3296
      %v3299 = vpack.c.bf16 %v3297, %v3297
      %v3300 = vld [vmem:[%s4] sm:$0xf]
      %v3301 = vld [vmem:[%s4 + $0x4] sm:$0xf]
      %v3302 = vld [vmem:[%s4 + $0x8] sm:$0xf]
      %v3303 = vld [vmem:[%s4 + $0xc] sm:$0xf]
      %v3304 = vld [vmem:[%s4 + $0x10] sm:$0xf]
      %v3305 = vld [vmem:[%s4 + $0x14] sm:$0xf]
      %v3306 = vld [vmem:[%s4 + $0x18] sm:$0xf]
      %v3307 = vld [vmem:[%s4 + $0x1c] sm:$0xf]
      %v3308 = vld [vmem:[%s4 + $0x20] sm:$0xf]
      %v3309 = vld [vmem:[%s4 + $0x24] sm:$0xf]
      %v3310 = vld [vmem:[%s4 + $0x28] sm:$0xf]
      %v3311 = vld [vmem:[%s4 + $0x2c] sm:$0xf]
      %v3312 = vld [vmem:[%s4 + $0x30] sm:$0xf]
      %v3313 = vld [vmem:[%s4 + $0x34] sm:$0xf]
      %v3314 = vld [vmem:[%s4 + $0x38] sm:$0xf]
      %v3315 = vld [vmem:[%s4 + $0x3c] sm:$0xf]
      %s3316 = scalar_lea.vmem [#allocation4], 1
      %v3317 = vld [vmem:[%s3316] ss:$2 sm:$0x3]
      %s3318 = scalar_lea.vmem [#allocation4], 9
      %v3319 = vld [vmem:[%s3318] ss:$2 sm:$0x3]
      %s3320 = scalar_lea.vmem [#allocation4], 17
      %v3321 = vld [vmem:[%s3320] ss:$2 sm:$0x3]
      %s3322 = scalar_lea.vmem [#allocation4], 25
      %v3323 = vld [vmem:[%s3322] ss:$2 sm:$0x3]
      %v3328 = vcombine.low %v3317, %v3319
      %v3329 = vcombine.low %v3321, %v3323
      %v3331 = vunpack.c.l.s4 1983009808
      %v3332 = vunpack.c.0.s8 %v3331
      %v3333 = vlaneseq
      %v3334 = vshrl.u32 %v3333, 7
      %v3335 = vsub.s32 %v3332, %v3334
      %v3336 = vrot.slane %v3328, %v3335
      %v3338 = vunpack.c.l.s4 1983009808
      %v3339 = vunpack.c.0.s8 %v3338
      %v3340 = vlaneseq
      %v3341 = vshrl.u32 %v3340, 7
      %v3342 = vsub.s32 %v3339, %v3341
      %v3343 = vrot.slane %v3329, %v3342
      %v3344 = vcombine.low %v3336, %v3343
      %v3346 = vpack.c.bf16 %v3344, %v3344
      %s3347 = scalar_lea.vmem %s4, 64
      %v3348 = vld [vmem:[%s3347] sm:$0xf]
      %v3349 = vld [vmem:[%s3347 + $0x4] sm:$0xf]
      %v3350 = vld [vmem:[%s3347 + $0x8] sm:$0xf]
      %v3351 = vld [vmem:[%s3347 + $0xc] sm:$0xf]
      %v3352 = vld [vmem:[%s3347 + $0x10] sm:$0xf]
      %v3353 = vld [vmem:[%s3347 + $0x14] sm:$0xf]
      %v3354 = vld [vmem:[%s3347 + $0x18] sm:$0xf]
      %v3355 = vld [vmem:[%s3347 + $0x1c] sm:$0xf]
      %v3356 = vld [vmem:[%s3347 + $0x20] sm:$0xf]
      %v3357 = vld [vmem:[%s3347 + $0x24] sm:$0xf]
      %v3358 = vld [vmem:[%s3347 + $0x28] sm:$0xf]
      %v3359 = vld [vmem:[%s3347 + $0x2c] sm:$0xf]
      %v3360 = vld [vmem:[%s3347 + $0x30] sm:$0xf]
      %v3361 = vld [vmem:[%s3347 + $0x34] sm:$0xf]
      %v3362 = vld [vmem:[%s3347 + $0x38] sm:$0xf]
      %v3363 = vld [vmem:[%s3347 + $0x3c] sm:$0xf]
      %v3380 = vunpack.c.l.b16 %v3348
      %v3381 = vunpack.c.l.b16 %v3349
      %v3382 = vunpack.c.l.b16 %v3350
      %v3383 = vunpack.c.l.b16 %v3351
      %v3384 = vunpack.c.l.b16 %v3352
      %v3385 = vunpack.c.l.b16 %v3353
      %v3386 = vunpack.c.l.b16 %v3354
      %v3387 = vunpack.c.l.b16 %v3355
      %v3388 = vunpack.c.l.b16 %v3356
      %v3389 = vunpack.c.l.b16 %v3357
      %v3390 = vunpack.c.l.b16 %v3358
      %v3391 = vunpack.c.l.b16 %v3359
      %v3392 = vunpack.c.l.b16 %v3360
      %v3393 = vunpack.c.l.b16 %v3361
      %v3394 = vunpack.c.l.b16 %v3362
      %v3395 = vunpack.c.l.b16 %v3363
      %v3396 = vpack.c.b16 %v3381, %v3380
      %v3397 = vpack.c.b16 %v3383, %v3382
      %v3398 = vpack.c.b16 %v3385, %v3384
      %v3399 = vpack.c.b16 %v3387, %v3386
      %v3400 = vpack.c.b16 %v3389, %v3388
      %v3401 = vpack.c.b16 %v3391, %v3390
      %v3402 = vpack.c.b16 %v3393, %v3392
      %v3403 = vpack.c.b16 %v3395, %v3394
      %3412 = vmatprep.subr.bf16.mxu0 0
      %3413 = vmatpush1.bf16.msra.mxu0 %v3396
      %3414 = vmatprep.subr.bf16.mxu0 0
      %3415 = vmatpush1.bf16.msra.mxu0 %v3397
      %3416 = vmatprep.subr.bf16.mxu0 0
      %3417 = vmatpush1.bf16.msra.mxu0 %v3398
      %3418 = vmatprep.subr.bf16.mxu0 0
      %3419 = vmatpush1.bf16.msra.mxu0 %v3399
      %3420 = vmatprep.subr.bf16.mxu0 0
      %3421 = vmatpush1.bf16.msra.mxu0 %v3400
      %3422 = vmatprep.subr.bf16.mxu0 0
      %3423 = vmatpush1.bf16.msra.mxu0 %v3401
      %3424 = vmatprep.subr.bf16.mxu0 0
      %3425 = vmatpush1.bf16.msra.mxu0 %v3402
      %3426 = vmatprep.subr.bf16.mxu0 0
      %3427 = vmatpush1.bf16.msra.mxu0 %v3403
      %3428 = vmatprep.subr.bf16.mxu0 0
      %3429 = vmatpush1.bf16.msra.mxu0 0
      %3430 = vmatprep.subr.bf16.mxu0 0
      %3431 = vmatpush1.bf16.msra.mxu0 0
      %3432 = vmatprep.subr.bf16.mxu0 0
      %3433 = vmatpush1.bf16.msra.mxu0 0
      %3434 = vmatprep.subr.bf16.mxu0 0
      %3435 = vmatpush1.bf16.msra.mxu0 0
      %3436 = vmatprep.subr.bf16.mxu0 0
      %3437 = vmatpush1.bf16.msra.mxu0 0
      %3438 = vmatprep.subr.bf16.mxu0 0
      %3439 = vmatpush1.bf16.msra.mxu0 0
      %3440 = vmatprep.subr.bf16.mxu0 0
      %3441 = vmatpush1.bf16.msra.mxu0 0
      %3442 = vmatprep.subr.bf16.mxu0 0
      %3443 = vmatpush1.bf16.msra.mxu0 0
      %3444 = vmatprep.mubr.bf16.mxu0 0
      %3445 = vmatmul.mubr.bf16.gmra.mrb[0].mxu0 %v3346
      %v3446 = vpop.f32.mrb[0].mxu0
      %v3447 = vadd.f32 0.0, %v3446
      %v3448 = vpop.f32.mrb[0].mxu0
      %v3449 = vpop.f32.mrb[0].mxu0
      %v3450 = vpop.f32.mrb[0].mxu0
      %3451 = vdwg.mxu0
      %v3468 = vunpack.c.l.b16 %v3300
      %v3469 = vunpack.c.l.b16 %v3301
      %v3470 = vunpack.c.l.b16 %v3302
      %v3471 = vunpack.c.l.b16 %v3303
      %v3472 = vunpack.c.l.b16 %v3304
      %v3473 = vunpack.c.l.b16 %v3305
      %v3474 = vunpack.c.l.b16 %v3306
      %v3475 = vunpack.c.l.b16 %v3307
      %v3476 = vunpack.c.l.b16 %v3308
      %v3477 = vunpack.c.l.b16 %v3309
      %v3478 = vunpack.c.l.b16 %v3310
      %v3479 = vunpack.c.l.b16 %v3311
      %v3480 = vunpack.c.l.b16 %v3312
      %v3481 = vunpack.c.l.b16 %v3313
      %v3482 = vunpack.c.l.b16 %v3314
      %v3483 = vunpack.c.l.b16 %v3315
      %v3484 = vpack.c.b16 %v3469, %v3468
      %v3485 = vpack.c.b16 %v3471, %v3470
      %v3486 = vpack.c.b16 %v3473, %v3472
      %v3487 = vpack.c.b16 %v3475, %v3474
      %v3488 = vpack.c.b16 %v3477, %v3476
      %v3489 = vpack.c.b16 %v3479, %v3478
      %v3490 = vpack.c.b16 %v3481, %v3480
      %v3491 = vpack.c.b16 %v3483, %v3482
      %3500 = vmatprep.subr.bf16.mxu0 0
      %3501 = vmatpush1.bf16.msra.mxu0 %v3484
      %3502 = vmatprep.subr.bf16.mxu0 0
      %3503 = vmatpush1.bf16.msra.mxu0 %v3485
      %3504 = vmatprep.subr.bf16.mxu0 0
      %3505 = vmatpush1.bf16.msra.mxu0 %v3486
      %3506 = vmatprep.subr.bf16.mxu0 0
      %3507 = vmatpush1.bf16.msra.mxu0 %v3487
      %3508 = vmatprep.subr.bf16.mxu0 0
      %3509 = vmatpush1.bf16.msra.mxu0 %v3488
      %3510 = vmatprep.subr.bf16.mxu0 0
      %3511 = vmatpush1.bf16.msra.mxu0 %v3489
      %3512 = vmatprep.subr.bf16.mxu0 0
      %3513 = vmatpush1.bf16.msra.mxu0 %v3490
      %3514 = vmatprep.subr.bf16.mxu0 0
      %3515 = vmatpush1.bf16.msra.mxu0 %v3491
      %3516 = vmatprep.subr.bf16.mxu0 0
      %3517 = vmatpush1.bf16.msra.mxu0 0
      %3518 = vmatprep.subr.bf16.mxu0 0
      %3519 = vmatpush1.bf16.msra.mxu0 0
      %3520 = vmatprep.subr.bf16.mxu0 0
      %3521 = vmatpush1.bf16.msra.mxu0 0
      %3522 = vmatprep.subr.bf16.mxu0 0
      %3523 = vmatpush1.bf16.msra.mxu0 0
      %3524 = vmatprep.subr.bf16.mxu0 0
      %3525 = vmatpush1.bf16.msra.mxu0 0
      %3526 = vmatprep.subr.bf16.mxu0 0
      %3527 = vmatpush1.bf16.msra.mxu0 0
      %3528 = vmatprep.subr.bf16.mxu0 0
      %3529 = vmatpush1.bf16.msra.mxu0 0
      %3530 = vmatprep.subr.bf16.mxu0 0
      %3531 = vmatpush1.bf16.msra.mxu0 0
      %3532 = vmatprep.mubr.bf16.mxu0 0
      %3533 = vmatmul.mubr.bf16.gmra.mrb[0].mxu0 %v3299
      %v3534 = vpop.f32.mrb[0].mxu0
      %v3535 = vadd.f32 %v3447, %v3534
      %v3536 = vpop.f32.mrb[0].mxu0
      %v3537 = vpop.f32.mrb[0].mxu0
      %v3538 = vpop.f32.mrb[0].mxu0
      %3539 = vdwg.mxu0
      %s3540 = scalar_lea.vmem [#allocation4], 2
      %v3541 = vld [vmem:[%s3540] ss:$2 sm:$0x3]
      %s3542 = scalar_lea.vmem [#allocation4], 10
      %v3543 = vld [vmem:[%s3542] ss:$2 sm:$0x3]
      %s3544 = scalar_lea.vmem [#allocation4], 18
      %v3545 = vld [vmem:[%s3544] ss:$2 sm:$0x3]
      %s3546 = scalar_lea.vmem [#allocation4], 26
      %v3547 = vld [vmem:[%s3546] ss:$2 sm:$0x3]
      %v3552 = vcombine.low %v3541, %v3543
      %v3553 = vcombine.low %v3545, %v3547
      %v3555 = vunpack.c.l.s4 1983009808
      %v3556 = vunpack.c.0.s8 %v3555
      %v3557 = vlaneseq
      %v3558 = vshrl.u32 %v3557, 7
      %v3559 = vsub.s32 %v3556, %v3558
      %v3560 = vrot.slane %v3552, %v3559
      %v3562 = vunpack.c.l.s4 1983009808
      %v3563 = vunpack.c.0.s8 %v3562
      %v3564 = vlaneseq
      %v3565 = vshrl.u32 %v3564, 7
      %v3566 = vsub.s32 %v3563, %v3565
      %v3567 = vrot.slane %v3553, %v3566
      %v3568 = vcombine.low %v3560, %v3567
      %v3570 = vpack.c.bf16 %v3568, %v3568
      %s3571 = scalar_lea.vmem %s4, 128
      %v3572 = vld [vmem:[%s3571] sm:$0xf]
      %v3573 = vld [vmem:[%s3571 + $0x4] sm:$0xf]
      %v3574 = vld [vmem:[%s3571 + $0x8] sm:$0xf]
      %v3575 = vld [vmem:[%s3571 + $0xc] sm:$0xf]
      %v3576 = vld [vmem:[%s3571 + $0x10] sm:$0xf]
      %v3577 = vld [vmem:[%s3571 + $0x14] sm:$0xf]
      %v3578 = vld [vmem:[%s3571 + $0x18] sm:$0xf]
      %v3579 = vld [vmem:[%s3571 + $0x1c] sm:$0xf]
      %v3580 = vld [vmem:[%s3571 + $0x20] sm:$0xf]
      %v3581 = vld [vmem:[%s3571 + $0x24] sm:$0xf]
      %v3582 = vld [vmem:[%s3571 + $0x28] sm:$0xf]
      %v3583 = vld [vmem:[%s3571 + $0x2c] sm:$0xf]
      %v3584 = vld [vmem:[%s3571 + $0x30] sm:$0xf]
      %v3585 = vld [vmem:[%s3571 + $0x34] sm:$0xf]
      %v3586 = vld [vmem:[%s3571 + $0x38] sm:$0xf]
      %v3587 = vld [vmem:[%s3571 + $0x3c] sm:$0xf]
      %v3604 = vunpack.c.l.b16 %v3572
      %v3605 = vunpack.c.l.b16 %v3573
      %v3606 = vunpack.c.l.b16 %v3574
      %v3607 = vunpack.c.l.b16 %v3575
      %v3608 = vunpack.c.l.b16 %v3576
      %v3609 = vunpack.c.l.b16 %v3577
      %v3610 = vunpack.c.l.b16 %v3578
      %v3611 = vunpack.c.l.b16 %v3579
      %v3612 = vunpack.c.l.b16 %v3580
      %v3613 = vunpack.c.l.b16 %v3581
      %v3614 = vunpack.c.l.b16 %v3582
      %v3615 = vunpack.c.l.b16 %v3583
      %v3616 = vunpack.c.l.b16 %v3584
      %v3617 = vunpack.c.l.b16 %v3585
      %v3618 = vunpack.c.l.b16 %v3586
      %v3619 = vunpack.c.l.b16 %v3587
      %v3620 = vpack.c.b16 %v3605, %v3604
      %v3621 = vpack.c.b16 %v3607, %v3606
      %v3622 = vpack.c.b16 %v3609, %v3608
      %v3623 = vpack.c.b16 %v3611, %v3610
      %v3624 = vpack.c.b16 %v3613, %v3612
      %v3625 = vpack.c.b16 %v3615, %v3614
      %v3626 = vpack.c.b16 %v3617, %v3616
      %v3627 = vpack.c.b16 %v3619, %v3618
      %3636 = vmatprep.subr.bf16.mxu0 0
      %3637 = vmatpush1.bf16.msra.mxu0 %v3620
      %3638 = vmatprep.subr.bf16.mxu0 0
      %3639 = vmatpush1.bf16.msra.mxu0 %v3621
      %3640 = vmatprep.subr.bf16.mxu0 0
      %3641 = vmatpush1.bf16.msra.mxu0 %v3622
      %3642 = vmatprep.subr.bf16.mxu0 0
      %3643 = vmatpush1.bf16.msra.mxu0 %v3623
      %3644 = vmatprep.subr.bf16.mxu0 0
      %3645 = vmatpush1.bf16.msra.mxu0 %v3624
      %3646 = vmatprep.subr.bf16.mxu0 0
      %3647 = vmatpush1.bf16.msra.mxu0 %v3625
      %3648 = vmatprep.subr.bf16.mxu0 0
      %3649 = vmatpush1.bf16.msra.mxu0 %v3626
      %3650 = vmatprep.subr.bf16.mxu0 0
      %3651 = vmatpush1.bf16.msra.mxu0 %v3627
      %3652 = vmatprep.subr.bf16.mxu0 0
      %3653 = vmatpush1.bf16.msra.mxu0 0
      %3654 = vmatprep.subr.bf16.mxu0 0
      %3655 = vmatpush1.bf16.msra.mxu0 0
      %3656 = vmatprep.subr.bf16.mxu0 0
      %3657 = vmatpush1.bf16.msra.mxu0 0
      %3658 = vmatprep.subr.bf16.mxu0 0
      %3659 = vmatpush1.bf16.msra.mxu0 0
      %3660 = vmatprep.subr.bf16.mxu0 0
      %3661 = vmatpush1.bf16.msra.mxu0 0
      %3662 = vmatprep.subr.bf16.mxu0 0
      %3663 = vmatpush1.bf16.msra.mxu0 0
      %3664 = vmatprep.subr.bf16.mxu0 0
      %3665 = vmatpush1.bf16.msra.mxu0 0
      %3666 = vmatprep.subr.bf16.mxu0 0
      %3667 = vmatpush1.bf16.msra.mxu0 0
      %3668 = vmatprep.mubr.bf16.mxu0 0
      %3669 = vmatmul.mubr.bf16.gmra.mrb[0].mxu0 %v3570
      %v3670 = vpop.f32.mrb[0].mxu0
      %v3671 = vadd.f32 0.0, %v3670
      %v3672 = vpop.f32.mrb[0].mxu0
      %v3673 = vpop.f32.mrb[0].mxu0
      %v3674 = vpop.f32.mrb[0].mxu0
      %3675 = vdwg.mxu0
      %v3676 = vadd.f32 %v3535, %v3671
      %s3677 = scalar_lea.vmem [#allocation4], 3
      %v3678 = vld [vmem:[%s3677] ss:$2 sm:$0x3]
      %s3679 = scalar_lea.vmem [#allocation4], 11
      %v3680 = vld [vmem:[%s3679] ss:$2 sm:$0x3]
      %s3681 = scalar_lea.vmem [#allocation4], 19
      %v3682 = vld [vmem:[%s3681] ss:$2 sm:$0x3]
      %s3683 = scalar_lea.vmem [#allocation4], 27
      %v3684 = vld [vmem:[%s3683] ss:$2 sm:$0x3]
      %v3689 = vcombine.low %v3678, %v3680
      %v3690 = vcombine.low %v3682, %v3684
      %v3692 = vunpack.c.l.s4 1983009808
      %v3693 = vunpack.c.0.s8 %v3692
      %v3694 = vlaneseq
      %v3695 = vshrl.u32 %v3694, 7
      %v3696 = vsub.s32 %v3693, %v3695
      %v3697 = vrot.slane %v3689, %v3696
      %v3699 = vunpack.c.l.s4 1983009808
      %v3700 = vunpack.c.0.s8 %v3699
      %v3701 = vlaneseq
      %v3702 = vshrl.u32 %v3701, 7
      %v3703 = vsub.s32 %v3700, %v3702
      %v3704 = vrot.slane %v3690, %v3703
      %v3705 = vcombine.low %v3697, %v3704
      %v3707 = vpack.c.bf16 %v3705, %v3705
      %s3708 = scalar_lea.vmem %s4, 192
      %v3709 = vld [vmem:[%s3708] sm:$0xf]
      %v3710 = vld [vmem:[%s3708 + $0x4] sm:$0xf]
      %v3711 = vld [vmem:[%s3708 + $0x8] sm:$0xf]
      %v3712 = vld [vmem:[%s3708 + $0xc] sm:$0xf]
      %v3713 = vld [vmem:[%s3708 + $0x10] sm:$0xf]
      %v3714 = vld [vmem:[%s3708 + $0x14] sm:$0xf]
      %v3715 = vld [vmem:[%s3708 + $0x18] sm:$0xf]
      %v3716 = vld [vmem:[%s3708 + $0x1c] sm:$0xf]
      %v3717 = vld [vmem:[%s3708 + $0x20] sm:$0xf]
      %v3718 = vld [vmem:[%s3708 + $0x24] sm:$0xf]
      %v3719 = vld [vmem:[%s3708 + $0x28] sm:$0xf]
      %v3720 = vld [vmem:[%s3708 + $0x2c] sm:$0xf]
      %v3721 = vld [vmem:[%s3708 + $0x30] sm:$0xf]
      %v3722 = vld [vmem:[%s3708 + $0x34] sm:$0xf]
      %v3723 = vld [vmem:[%s3708 + $0x38] sm:$0xf]
      %v3724 = vld [vmem:[%s3708 + $0x3c] sm:$0xf]
      %v3741 = vunpack.c.l.b16 %v3709
      %v3742 = vunpack.c.l.b16 %v3710
      %v3743 = vunpack.c.l.b16 %v3711
      %v3744 = vunpack.c.l.b16 %v3712
      %v3745 = vunpack.c.l.b16 %v3713
      %v3746 = vunpack.c.l.b16 %v3714
      %v3747 = vunpack.c.l.b16 %v3715
      %v3748 = vunpack.c.l.b16 %v3716
      %v3749 = vunpack.c.l.b16 %v3717
      %v3750 = vunpack.c.l.b16 %v3718
      %v3751 = vunpack.c.l.b16 %v3719
      %v3752 = vunpack.c.l.b16 %v3720
      %v3753 = vunpack.c.l.b16 %v3721
      %v3754 = vunpack.c.l.b16 %v3722
      %v3755 = vunpack.c.l.b16 %v3723
      %v3756 = vunpack.c.l.b16 %v3724
      %v3757 = vpack.c.b16 %v3742, %v3741
      %v3758 = vpack.c.b16 %v3744, %v3743
      %v3759 = vpack.c.b16 %v3746, %v3745
      %v3760 = vpack.c.b16 %v3748, %v3747
      %v3761 = vpack.c.b16 %v3750, %v3749
      %v3762 = vpack.c.b16 %v3752, %v3751
      %v3763 = vpack.c.b16 %v3754, %v3753
      %v3764 = vpack.c.b16 %v3756, %v3755
      %3773 = vmatprep.subr.bf16.mxu0 0
      %3774 = vmatpush1.bf16.msra.mxu0 %v3757
      %3775 = vmatprep.subr.bf16.mxu0 0
      %3776 = vmatpush1.bf16.msra.mxu0 %v3758
      %3777 = vmatprep.subr.bf16.mxu0 0
      %3778 = vmatpush1.bf16.msra.mxu0 %v3759
      %3779 = vmatprep.subr.bf16.mxu0 0
      %3780 = vmatpush1.bf16.msra.mxu0 %v3760
      %3781 = vmatprep.subr.bf16.mxu0 0
      %3782 = vmatpush1.bf16.msra.mxu0 %v3761
      %3783 = vmatprep.subr.bf16.mxu0 0
      %3784 = vmatpush1.bf16.msra.mxu0 %v3762
      %3785 = vmatprep.subr.bf16.mxu0 0
      %3786 = vmatpush1.bf16.msra.mxu0 %v3763
      %3787 = vmatprep.subr.bf16.mxu0 0
      %3788 = vmatpush1.bf16.msra.mxu0 %v3764
      %3789 = vmatprep.subr.bf16.mxu0 0
      %3790 = vmatpush1.bf16.msra.mxu0 0
      %3791 = vmatprep.subr.bf16.mxu0 0
      %3792 = vmatpush1.bf16.msra.mxu0 0
      %3793 = vmatprep.subr.bf16.mxu0 0
      %3794 = vmatpush1.bf16.msra.mxu0 0
      %3795 = vmatprep.subr.bf16.mxu0 0
      %3796 = vmatpush1.bf16.msra.mxu0 0
      %3797 = vmatprep.subr.bf16.mxu0 0
      %3798 = vmatpush1.bf16.msra.mxu0 0
      %3799 = vmatprep.subr.bf16.mxu0 0
      %3800 = vmatpush1.bf16.msra.mxu0 0
      %3801 = vmatprep.subr.bf16.mxu0 0
      %3802 = vmatpush1.bf16.msra.mxu0 0
      %3803 = vmatprep.subr.bf16.mxu0 0
      %3804 = vmatpush1.bf16.msra.mxu0 0
      %3805 = vmatprep.mubr.bf16.mxu0 0
      %3806 = vmatmul.mubr.bf16.gmra.mrb[0].mxu0 %v3707
      %v3807 = vpop.f32.mrb[0].mxu0
      %v3808 = vadd.f32 0.0, %v3807
      %v3809 = vpop.f32.mrb[0].mxu0
      %v3810 = vpop.f32.mrb[0].mxu0
      %v3811 = vpop.f32.mrb[0].mxu0
      %3812 = vdwg.mxu0
      %v3813 = vadd.f32 %v3676, %v3808
      %v3815 = vcombine.high %v3813, %v3813
      %v3817 = vunpack.c.l.s4 1983009808
      %v3818 = vunpack.c.0.s8 %v3817
      %v3819 = vlaneseq
      %v3820 = vshrl.u32 %v3819, 7
      %v3821 = vsub.s32 %v3818, %v3820
      %v3822 = vrot.slane %v3813, %v3821
      %v3824 = vunpack.c.l.s4 1983009808
      %v3825 = vunpack.c.0.s8 %v3824
      %v3826 = vlaneseq
      %v3827 = vshrl.u32 %v3826, 7
      %v3828 = vsub.s32 %v3825, %v3827
      %v3829 = vrot.slane %v3815, %v3828
      %v3830 = vcombine.high %v3822, %v3822
      %v3831 = vcombine.high %v3829, %v3829
      %vm3836 = vcmask 1041408
      %v3837 = vsel %vm3836, %v3822, 0.0
      %v3838 = vrot.slane %v3837, 4
      %v3839 = vadd.f32 %v3837, %v3838
      %v3840 = vrot.slane %v3839, 2
      %v3841 = vadd.f32 %v3839, %v3840
      %v3842 = vrot.slane %v3841, 1
      %v3843 = vadd.f32 %v3841, %v3842
      %v3844 = vsel %vm3836, %v3830, 0.0
      %v3845 = vrot.slane %v3844, 4
      %v3846 = vadd.f32 %v3844, %v3845
      %v3847 = vrot.slane %v3846, 2
      %v3848 = vadd.f32 %v3846, %v3847
      %v3849 = vrot.slane %v3848, 1
      %v3850 = vadd.f32 %v3848, %v3849
      %v3851 = vsel %vm3836, %v3829, 0.0
      %v3852 = vrot.slane %v3851, 4
      %v3853 = vadd.f32 %v3851, %v3852
      %v3854 = vrot.slane %v3853, 2
      %v3855 = vadd.f32 %v3853, %v3854
      %v3856 = vrot.slane %v3855, 1
      %v3857 = vadd.f32 %v3855, %v3856
      %v3858 = vsel %vm3836, %v3831, 0.0
      %v3859 = vrot.slane %v3858, 4
      %v3860 = vadd.f32 %v3858, %v3859
      %v3861 = vrot.slane %v3860, 2
      %v3862 = vadd.f32 %v3860, %v3861
      %v3863 = vrot.slane %v3862, 1
      %v3864 = vadd.f32 %v3862, %v3863
      %v3865 = vmul.f32 %v3822, %v3822
      %v3866 = vmul.f32 %v3830, %v3830
      %v3867 = vmul.f32 %v3829, %v3829
      %v3868 = vmul.f32 %v3831, %v3831
      %v3869 = vsel %vm3836, %v3865, 0.0
      %v3870 = vrot.slane %v3869, 4
      %v3871 = vadd.f32 %v3869, %v3870
      %v3872 = vrot.slane %v3871, 2
      %v3873 = vadd.f32 %v3871, %v3872
      %v3874 = vrot.slane %v3873, 1
      %v3875 = vadd.f32 %v3873, %v3874
      %v3876 = vsel %vm3836, %v3866, 0.0
      %v3877 = vrot.slane %v3876, 4
      %v3878 = vadd.f32 %v3876, %v3877
      %v3879 = vrot.slane %v3878, 2
      %v3880 = vadd.f32 %v3878, %v3879
      %v3881 = vrot.slane %v3880, 1
      %v3882 = vadd.f32 %v3880, %v3881
      %v3883 = vsel %vm3836, %v3867, 0.0
      %v3884 = vrot.slane %v3883, 4
      %v3885 = vadd.f32 %v3883, %v3884
      %v3886 = vrot.slane %v3885, 2
      %v3887 = vadd.f32 %v3885, %v3886
      %v3888 = vrot.slane %v3887, 1
      %v3889 = vadd.f32 %v3887, %v3888
      %v3890 = vsel %vm3836, %v3868, 0.0
      %v3891 = vrot.slane %v3890, 4
      %v3892 = vadd.f32 %v3890, %v3891
      %v3893 = vrot.slane %v3892, 2
      %v3894 = vadd.f32 %v3892, %v3893
      %v3895 = vrot.slane %v3894, 1
      %v3896 = vadd.f32 %v3894, %v3895
      %v3897 = vmul.f32 %v3843, 0.5
      %v3898 = vmul.f32 %v3850, 0.5
      %v3899 = vmul.f32 %v3857, 0.5
      %v3900 = vmul.f32 %v3864, 0.5
      %v3901 = vmul.f32 %v3875, 0.5
      %v3902 = vmul.f32 %v3882, 0.5
      %v3903 = vmul.f32 %v3889, 0.5
      %v3904 = vmul.f32 %v3896, 0.5
      %v3905 = vmul.f32 %v3897, %v3897
      %v3906 = vmul.f32 %v3898, %v3898
      %v3907 = vmul.f32 %v3899, %v3899
      %v3908 = vmul.f32 %v3900, %v3900
      %v3909 = vsub.f32 %v3901, %v3905
      %v3910 = vsub.f32 %v3902, %v3906
      %v3911 = vsub.f32 %v3903, %v3907
      %v3912 = vsub.f32 %v3904, %v3908
      %v3913 = vmax.f32 %v3909, 0.0
      %v3914 = vmax.f32 %v3910, 0.0
      %v3915 = vmax.f32 %v3911, 0.0
      %v3916 = vmax.f32 %v3912, 0.0
      %v3917 = vadd.f32 %v3913, 1e-05
      %v3918 = vadd.f32 %v3914, 1e-05
      %v3919 = vadd.f32 %v3915, 1e-05
      %v3920 = vadd.f32 %v3916, 1e-05
      %v3921 = vrsqrt.pop %v3917
      %v3922 = vrsqrt.pop %v3918
      %v3923 = vrsqrt.pop %v3919
      %v3924 = vrsqrt.pop %v3920
      %v3925 = vld [vmem:[%s8] sm:$0x7]
      %v3926 = vmul.f32 %v3921, %v3925
      %v3927 = vmul.f32 %v3922, %v3925
      %v3928 = vmul.f32 %v3923, %v3925
      %v3929 = vmul.f32 %v3924, %v3925
      %v3930 = vmul.f32 %v3897, %v3921
      %v3931 = vmul.f32 %v3898, %v3922
      %v3932 = vmul.f32 %v3899, %v3923
      %v3933 = vmul.f32 %v3900, %v3924
      %v3934 = vmul.f32 %v3930, %v3925
      %v3935 = vmul.f32 %v3931, %v3925
      %v3936 = vmul.f32 %v3932, %v3925
      %v3937 = vmul.f32 %v3933, %v3925
      %v3942 = vrot.slane %v3934, 7
      %v3943 = vrot.slane %v3935, 7
      %v3944 = vrot.slane %v3936, 7
      %v3945 = vrot.slane %v3937, 7
      %v3950 = vsub.f32 %v3925, %v3942
      %v3951 = vsub.f32 %v3925, %v3943
      %v3952 = vsub.f32 %v3925, %v3944
      %v3953 = vsub.f32 %v3925, %v3945
      %v3954 = vlaneseq
      %v3955 = vshrl.u32 %v3954, 7
      %v3956 = vsub.s32 0, %v3955
      %v3957 = vrot.slane %v3926, %v3956
      %v3958 = vlaneseq
      %v3959 = vshrl.u32 %v3958, 7
      %v3960 = vsub.s32 0, %v3959
      %v3961 = vrot.slane %v3927, %v3960
      %v3962 = vlaneseq
      %v3963 = vshrl.u32 %v3962, 7
      %v3964 = vsub.s32 0, %v3963
      %v3965 = vrot.slane %v3928, %v3964
      %v3966 = vlaneseq
      %v3967 = vshrl.u32 %v3966, 7
      %v3968 = vsub.s32 0, %v3967
      %v3969 = vrot.slane %v3929, %v3968
      %v3970 = vmul.f32 %v3822, %v3957
      %v3971 = vmul.f32 %v3830, %v3961
      %v3972 = vmul.f32 %v3829, %v3965
      %v3973 = vmul.f32 %v3831, %v3969
      %v3974 = vlaneseq
      %v3975 = vshrl.u32 %v3974, 7
      %v3976 = vsub.s32 1, %v3975
      %v3977 = vrot.slane %v3950, %v3976
      %v3978 = vlaneseq
      %v3979 = vshrl.u32 %v3978, 7
      %v3980 = vsub.s32 1, %v3979
      %v3981 = vrot.slane %v3951, %v3980
      %v3982 = vlaneseq
      %v3983 = vshrl.u32 %v3982, 7
      %v3984 = vsub.s32 1, %v3983
      %v3985 = vrot.slane %v3952, %v3984
      %v3986 = vlaneseq
      %v3987 = vshrl.u32 %v3986, 7
      %v3988 = vsub.s32 1, %v3987
      %v3989 = vrot.slane %v3953, %v3988
      %v3990 = vadd.f32 %v3970, %v3977
      %v3991 = vadd.f32 %v3971, %v3981
      %v3992 = vadd.f32 %v3972, %v3985
      %v3993 = vadd.f32 %v3973, %v3989
      %vm3994 = vcmp.ge.f32.partialorder %v3990, 0.0
      %vm3995 = vcmp.ge.f32.partialorder %v3991, 0.0
      %vm3996 = vcmp.ge.f32.partialorder %v3992, 0.0
      %vm3997 = vcmp.ge.f32.partialorder %v3993, 0.0
      %v3998 = vlaneseq
      %v3999 = vshrl.u32 %v3998, 7
      %v4000 = vsub.s32 2, %v3999
      %v4001 = vrot.slane %v3925, %v4000
      %v4002 = vmul.f32 %v4001, %v3990
      %v4003 = vmul.f32 %v4001, %v3991
      %v4004 = vmul.f32 %v4001, %v3992
      %v4005 = vmul.f32 %v4001, %v3993
      %v4006 = vsel %vm3994, %v3990, %v4002
      %v4007 = vsel %vm3995, %v3991, %v4003
      %v4008 = vsel %vm3996, %v3992, %v4004
      %v4009 = vsel %vm3997, %v3993, %v4005
      %v4010 = vsel %vm3836, %v4006, -inf
      %v4011 = vrot.slane %v4010, 4
      %v4012 = vmax.f32 %v4010, %v4011
      %v4013 = vrot.slane %v4012, 2
      %v4014 = vmax.f32 %v4012, %v4013
      %v4015 = vrot.slane %v4014, 1
      %v4016 = vmax.f32 %v4014, %v4015
      %v4017 = vsel %vm3836, %v4007, -inf
      %v4018 = vrot.slane %v4017, 4
      %v4019 = vmax.f32 %v4017, %v4018
      %v4020 = vrot.slane %v4019, 2
      %v4021 = vmax.f32 %v4019, %v4020
      %v4022 = vrot.slane %v4021, 1
      %v4023 = vmax.f32 %v4021, %v4022
      %v4024 = vsel %vm3836, %v4008, -inf
      %v4025 = vrot.slane %v4024, 4
      %v4026 = vmax.f32 %v4024, %v4025
      %v4027 = vrot.slane %v4026, 2
      %v4028 = vmax.f32 %v4026, %v4027
      %v4029 = vrot.slane %v4028, 1
      %v4030 = vmax.f32 %v4028, %v4029
      %v4031 = vsel %vm3836, %v4009, -inf
      %v4032 = vrot.slane %v4031, 4
      %v4033 = vmax.f32 %v4031, %v4032
      %v4034 = vrot.slane %v4033, 2
      %v4035 = vmax.f32 %v4033, %v4034
      %v4036 = vrot.slane %v4035, 1
      %v4037 = vmax.f32 %v4035, %v4036
      %v4038 = vld [vmem:[%s10] sm:$0x7]
      %v4039 = vpack.c.bf16 %v4016, %v4016
      %v4040 = vpack.c.bf16 %v4023, %v4023
      %v4041 = vpack.c.bf16 %v4030, %v4030
      %v4042 = vpack.c.bf16 %v4037, %v4037
      %v4043 = vld [vmem:[%s9] sm:$0xf]
      %v4044 = vld [vmem:[%s9 + $0x4] sm:$0xf]
      %v4045 = vld [vmem:[%s9 + $0x8] sm:$0xf]
      %v4046 = vld [vmem:[%s9 + $0xc] sm:$0xf]
      %v4047 = vld [vmem:[%s9 + $0x10] sm:$0xf]
      %v4048 = vld [vmem:[%s9 + $0x14] sm:$0xf]
      %v4049 = vld [vmem:[%s9 + $0x18] sm:$0xf]
      %v4050 = vld [vmem:[%s9 + $0x1c] sm:$0xf]
      %v4051 = vld [vmem:[%s9 + $0x20] sm:$0xf]
      %v4052 = vld [vmem:[%s9 + $0x24] sm:$0xf]
      %v4053 = vld [vmem:[%s9 + $0x28] sm:$0xf]
      %v4054 = vld [vmem:[%s9 + $0x2c] sm:$0xf]
      %v4055 = vld [vmem:[%s9 + $0x30] sm:$0xf]
      %v4056 = vld [vmem:[%s9 + $0x34] sm:$0xf]
      %v4057 = vld [vmem:[%s9 + $0x38] sm:$0xf]
      %v4058 = vld [vmem:[%s9 + $0x3c] sm:$0xf]
      %v4059 = vlaneseq
      %v4060 = vshrl.u32 %v4059, 7
      %v4061 = vsub.s32 0, %v4060
      %v4062 = vrot.slane %v4038, %v4061
      %v4067 = vunpack.c.l.b16 %v4039
      %v4068 = vunpack.c.l.b16 %v4040
      %v4069 = vunpack.c.l.b16 %v4041
      %v4070 = vunpack.c.l.b16 %v4042
      %v4071 = vsel %vm1248, %v4068, %v4067
      %v4072 = vsel %vm1251, %v4069, %v4071
      %v4073 = vsel %vm1254, %v4070, %v4072
      %v4074 = vpack.c.b16 %v4073, %v4073
      %v4092 = vunpack.c.l.b16 %v4043
      %v4093 = vunpack.c.l.b16 %v4044
      %v4094 = vunpack.c.l.b16 %v4045
      %v4095 = vunpack.c.l.b16 %v4046
      %v4096 = vunpack.c.l.b16 %v4047
      %v4097 = vunpack.c.l.b16 %v4048
      %v4098 = vunpack.c.l.b16 %v4049
      %v4099 = vunpack.c.l.b16 %v4050
      %v4100 = vunpack.c.l.b16 %v4051
      %v4101 = vunpack.c.l.b16 %v4052
      %v4102 = vunpack.c.l.b16 %v4053
      %v4103 = vunpack.c.l.b16 %v4054
      %v4104 = vunpack.c.l.b16 %v4055
      %v4105 = vunpack.c.l.b16 %v4056
      %v4106 = vunpack.c.l.b16 %v4057
      %v4107 = vunpack.c.l.b16 %v4058
      %v4108 = vpack.c.b16 %v4093, %v4092
      %v4109 = vpack.c.b16 %v4095, %v4094
      %v4110 = vpack.c.b16 %v4097, %v4096
      %v4111 = vpack.c.b16 %v4099, %v4098
      %v4112 = vpack.c.b16 %v4101, %v4100
      %v4113 = vpack.c.b16 %v4103, %v4102
      %v4114 = vpack.c.b16 %v4105, %v4104
      %v4115 = vpack.c.b16 %v4107, %v4106
      %4124 = vmatprep.subr.bf16.mxu0 0
      %4125 = vmatpush1.bf16.msra.mxu0 %v4108
      %4126 = vmatprep.subr.bf16.mxu0 0
      %4127 = vmatpush1.bf16.msra.mxu0 %v4109
      %4128 = vmatprep.subr.bf16.mxu0 0
      %4129 = vmatpush1.bf16.msra.mxu0 %v4110
      %4130 = vmatprep.subr.bf16.mxu0 0
      %4131 = vmatpush1.bf16.msra.mxu0 %v4111
      %4132 = vmatprep.subr.bf16.mxu0 0
      %4133 = vmatpush1.bf16.msra.mxu0 %v4112
      %4134 = vmatprep.subr.bf16.mxu0 0
      %4135 = vmatpush1.bf16.msra.mxu0 %v4113
      %4136 = vmatprep.subr.bf16.mxu0 0
      %4137 = vmatpush1.bf16.msra.mxu0 %v4114
      %4138 = vmatprep.subr.bf16.mxu0 0
      %4139 = vmatpush1.bf16.msra.mxu0 %v4115
      %4140 = vmatprep.subr.bf16.mxu0 0
      %4141 = vmatpush1.bf16.msra.mxu0 0
      %4142 = vmatprep.subr.bf16.mxu0 0
      %4143 = vmatpush1.bf16.msra.mxu0 0
      %4144 = vmatprep.subr.bf16.mxu0 0
      %4145 = vmatpush1.bf16.msra.mxu0 0
      %4146 = vmatprep.subr.bf16.mxu0 0
      %4147 = vmatpush1.bf16.msra.mxu0 0
      %4148 = vmatprep.subr.bf16.mxu0 0
      %4149 = vmatpush1.bf16.msra.mxu0 0
      %4150 = vmatprep.subr.bf16.mxu0 0
      %4151 = vmatpush1.bf16.msra.mxu0 0
      %4152 = vmatprep.subr.bf16.mxu0 0
      %4153 = vmatpush1.bf16.msra.mxu0 0
      %4154 = vmatprep.subr.bf16.mxu0 0
      %4155 = vmatpush1.bf16.msra.mxu0 0
      %4156 = vmatprep.mubr.bf16.mxu0 0
      %4157 = vmatmul.mubr.bf16.gmra.mrb[0].mxu0 %v4074
      %v4158 = vpop.f32.mrb[0].mxu0
      %v4159 = vadd.f32 %v4062, %v4158
      %v4160 = vpop.f32.mrb[0].mxu0
      %v4161 = vpop.f32.mrb[0].mxu0
      %v4162 = vpop.f32.mrb[0].mxu0
      %4163 = vdwg.mxu0
      %vm4164 = vcmp.ge.f32.partialorder %v4159, 0.0
      %v4165 = vlaneseq
      %v4166 = vshrl.u32 %v4165, 7
      %v4167 = vsub.s32 1, %v4166
      %v4168 = vrot.slane %v4038, %v4167
      %v4169 = vmul.f32 %v4168, %v4159
      %v4170 = vsel %vm4164, %v4159, %v4169
      %v4171 = vld [vmem:[%s11] sm:$0x1]
      %v4172 = vlaneseq
      %v4173 = vshrl.u32 %v4172, 7
      %v4174 = vsub.s32 2, %v4173
      %v4175 = vrot.slane %v4038, %v4174
      %v4176 = vmul.f32 %v4170, %v4175
      %vm4177 = vcmask 519168
      %v4178 = vsel %vm4177, %v4176, 0.0
      %4179 = vadd.xlane.f32.xlu0 %v4178
      %v4180 = vpop.xlane.xlu0 %4179
      %v4182 = vlaneseq
      %v4183 = vshrl.u32 %v4182, 7
      %v4184 = vsub.s32 0, %v4183
      %v4185 = vrot.slane %v4171, %v4184
      %v4187 = vadd.f32 %v4180, %v4185
      %4189 = vrot.lane.b32.xlu0 %v4187, 1
      %v4190 = vpop.permute.xlu0 %4189
      %v4192 = vmul.f32 %v4185, %v4190
      %v4193 = vxor.u32 %v4192, 2147483648
      %v4194 = vmul.f32 %v4193, 1.442695
      %v4195 = vpow.pop %v4194
      %v4196 = vadd.f32 %v4195, 1.0
      %v4197 = vrcp.pop %v4196
      %v4198 = vmul.f32 1.0, %v4197
      %4200 = vrot.lane.b32.xlu0 %v4198, 127
      %v4201 = vpop.permute.xlu0 %4200
      %vm4203 = vcmask 3072
      %4204 = vst.msk [vmem:[%s416] sm:$0xf] %vm4203, %v4201
      %p4205 = scmp.lt.s32.totalorder %s23, 1
      %s4206 = scalar_select %p4205, %s23, 1
      %s4207 = smul.addr %s4206, 4
      %s4208 = scalar_lea.vmem %s12, %s4207
      // Predicated region
      $region69: #{discriminator_forward.1} parent=67 // pred_check
        %p4209 = pneg %p298
      $region70: #{discriminator_forward.1} parent=67 // pred_check_branch
        %4211 = sbr.rel (%p4209) target = $region72
      $region71: #{discriminator_forward.1} parent=67 // pred_region
        _
      $region72: #{discriminator_forward.1} parent=67 // pred_fallthru
        _
    $region68: #{discriminator_forward.1} parent=5 // pred_fallthru
      _
    %p4212 = scmp.le.s32.totalorder 2, %s18
    // Predicated region
    $region73: #{discriminator_forward.1} parent=5 // pred_check
      %p4213 = pneg %p4212
    $region74: #{discriminator_forward.1} parent=5 // pred_check_branch
      %4215 = sbr.rel (%p4213) target = $region76
    $region75: #{discriminator_forward.1} parent=5 // pred_region
      %s4216 = ssub.s32 %s18, 2
      // Predicated region
      $region77: #{discriminator_forward.1} parent=75 // pred_check
        %p4217 = pneg %p304
      $region78: #{discriminator_forward.1} parent=75 // pred_check_branch
        %4219 = sbr.rel (%p4217) target = $region80
      $region79: #{discriminator_forward.1} parent=75 // pred_region
        %p4220 = scmp.lt.s32.totalorder %s24, 1
        %s4221 = scalar_select %p4220, %s24, 1
        %s4222 = smul.addr %s4221, 4
        %s4223 = scalar_lea.vmem %s12, %s4222
      $region80: #{discriminator_forward.1} parent=75 // pred_fallthru
        _
    $region76: #{discriminator_forward.1} parent=5 // pred_fallthru
      _
  $region6: #{discriminator_forward.1} parent=0 // loop_footer
    %s22 = sadd.s32 1, %s18
  $region7: #{discriminator_forward.1} parent=0 // loop_footer_branch
    %17 = sbr.rel target = $region3
  $region8: #{discriminator_forward.1} parent=0 // loop_exit
    _

</llo_original>
